<compile_context>
chip_gen: v7x
topology: tpu7x:2x2x1
jax: 0.10.0
libtpu: 0.0.40
codegen_flags: <defaults>
</compile_context>

<pallas_src>
import functools

import jax
import jax.numpy as jnp
from jax import lax
from jax.experimental import pallas as pl
from jax.experimental.pallas import tpu as pltpu


# --------------------------- generation-aware knobs ---------------------------

@functools.lru_cache(maxsize=None)
def _vmem_limit_bytes():
    """Scoped-VMEM budget: ~96 MiB on 128-MiB chips (v5e/v6e), 48 MiB otherwise."""
    limit = 48 * 1024 * 1024
    try:
        info = pltpu.get_tpu_info()
        cap = int(getattr(info, "vmem_capacity_bytes", 0) or 0)
        if cap >= 96 * 1024 * 1024:
            limit = 96 * 1024 * 1024
    except Exception:
        pass
    return limit


def _pick_strip(H, W, cin, cmid, cout):
    """Largest divisor of H whose per-step working set fits comfortably in VMEM."""
    budget = _vmem_limit_bytes() // 2          # leave headroom for pipelining
    best = 1
    for s in range(1, H + 1):
        if H % s or s > 64:
            continue
        o1 = (s + 2) * W * cmid * 2                     # bf16 conv1 scratch (+halos)
        packed = s * W * 3 * cmid * 2                   # bf16 K-packed conv2 operand
        acc = s * W * max(cmid, cout) * 4 * 3           # f32 value temps (spill bound)
        out = 2 * s * W * cout * 2                      # double-buffered output block
        xin = 2 * H * W * cin * 2                       # double-buffered input image
        if o1 + packed + acc + out + xin <= budget:
            best = s
    return best


# --------------------------- fused Bottleneck kernel ---------------------------

def bottleneck_kernel(x_ref, w1_ref, b1_ref, w2p_ref, b2_ref, w3_ref, b3_ref,
                      o_ref, o1_ref, pk_ref):
    """One (batch image, row-strip) step of a fused Bottleneck block.

    x_ref  : (1, H, W, Cin)     bf16  full image (resident across strips of the same n)
    w*_ref : bf16 conv weights with the BN scale folded in
             (w2p is the K-packed 3x3 weight: (3, 3*Cmid, Cmid), kx-major)
    b*_ref : (1, C) f32 folded BN biases
    o_ref  : (1, TH, W, Cout)   bf16  output strip
    o1_ref : ((TH+2)*W, Cmid)   bf16  conv1 output incl. 1-row halos (VMEM only)
    pk_ref : (TH*W, 3*Cmid)     bf16  K-packed conv2 lhs (VMEM only)
    """
    H, W, Cin = x_ref.shape[1], x_ref.shape[2], x_ref.shape[3]
    TH = o_ref.shape[1]
    Cmid = w1_ref.shape[1]
    Cout = w3_ref.shape[1]
    THW = TH * W

    s = pl.program_id(1)
    n_strips = pl.num_programs(1)
    h0 = pl.multiple_of(s * TH, TH)               # first image row of this strip

    w1 = w1_ref[...]
    b1 = b1_ref[...]

    def conv1(rows_flat):                         # (R, Cin) bf16 -> (R, Cmid) f32
        y = jnp.dot(rows_flat, w1, preferred_element_type=jnp.float32)
        return jnp.maximum(y + b1, 0.0)

    # ---- conv1 (1x1) + BN + ReLU: strip rows (read once, reused for the residual) ----
    x_strip = x_ref[0, pl.ds(h0, TH), :, :].reshape(THW, Cin)
    o1_ref[pl.ds(W, THW), :] = conv1(x_strip).astype(o1_ref.dtype)

    # Halo rows: conv1 of the neighbouring image row, or zeros at the image border.
    @pl.when(s > 0)
    def _():
        top = x_ref[0, pl.ds(h0 - 1, 1), :, :].reshape(W, Cin)
        o1_ref[pl.ds(0, W), :] = conv1(top).astype(o1_ref.dtype)

    @pl.when(s == 0)
    def _():
        o1_ref[pl.ds(0, W), :] = jnp.zeros((W, Cmid), o1_ref.dtype)

    @pl.when(s < n_strips - 1)
    def _():
        bot = x_ref[0, pl.ds(h0 + TH, 1), :, :].reshape(W, Cin)
        o1_ref[pl.ds((TH + 1) * W, W), :] = conv1(bot).astype(o1_ref.dtype)

    @pl.when(s == n_strips - 1)
    def _():
        o1_ref[pl.ds((TH + 1) * W, W), :] = jnp.zeros((W, Cmid), o1_ref.dtype)

    # ---- conv2 (3x3, stride 1, pad 1): K-packed over ky, output-shifted over kx ----
    # pk[:, ky*Cmid:(ky+1)*Cmid] = o1[ky*W : ky*W + THW]  (the three vertical taps),
    # so each per-kx matmul has a 3x deeper contraction (fills the 256-deep MXU).
    pk_ref[:, 0 * Cmid:1 * Cmid] = o1_ref[pl.ds(0 * W, THW), :]
    pk_ref[:, 1 * Cmid:2 * Cmid] = o1_ref[pl.ds(1 * W, THW), :]
    pk_ref[:, 2 * Cmid:3 * Cmid] = o1_ref[pl.ds(2 * W, THW), :]
    packed = pk_ref[...]

    # C_kx[t, w] = sum_ky o1[(t+ky)*W + w] @ w2[ky, kx]; the conv output takes it at
    # column w - dx (dx = kx - 1).  The flat +-1 roll's row-wrap garbage lands exactly
    # in the columns the border mask zeroes, and the sum stays in values (no VMEM RMW).
    colw = lax.broadcasted_iota(jnp.int32, (THW, 1), 0) % W
    c_l = jnp.dot(packed, w2p_ref[0], preferred_element_type=jnp.float32)   # kx=0
    c_c = jnp.dot(packed, w2p_ref[1], preferred_element_type=jnp.float32)   # kx=1
    c_r = jnp.dot(packed, w2p_ref[2], preferred_element_type=jnp.float32)   # kx=2
    acc = c_c
    acc = acc + jnp.where(colw >= 1,
                          pltpu.roll(c_l, shift=1, axis=0), jnp.zeros_like(c_l))
    acc = acc + jnp.where(colw <= W - 2,
                          pltpu.roll(c_r, shift=THW - 1, axis=0), jnp.zeros_like(c_r))
    o2 = jnp.maximum(acc + b2_ref[...], 0.0).astype(jnp.bfloat16)

    # ---- conv3 (1x1) + BN + identity residual + ReLU ----
    y = jnp.dot(o2, w3_ref[...], preferred_element_type=jnp.float32)
    y = jnp.maximum(y + b3_ref[...] + x_strip.astype(jnp.float32), 0.0)
    o_ref[...] = y.reshape(1, TH, W, Cout).astype(o_ref.dtype)


def bottleneck_block(x_nhwc, p, *, strip=None):
    """Fused Bottleneck (stride=1, downsample=None) on an NHWC bf16 activation."""
    N, H, W, Cin = x_nhwc.shape
    Cmid = p["w1"].shape[1]
    Cout = p["w3"].shape[1]
    assert Cout == Cin, "identity residual requires inplanes == planes * 4"
    if strip is None:
        strip = _pick_strip(H, W, Cin, Cmid, Cout)
    assert H % strip == 0, "strip must divide H (auto-pick guarantees this)"
    n_strips = H // strip

    flops = 2 * N * H * W * (Cin * Cmid + 9 * Cmid * Cmid + Cmid * Cout)
    bytes_accessed = int(
        x_nhwc.size * x_nhwc.dtype.itemsize
        + N * H * W * Cout * 2
        + sum(p[k].size * p[k].dtype.itemsize
              for k in ("w1", "w2p", "w3", "b1", "b2", "b3")))

    const2 = lambda n, s: (0, 0)
    return pl.pallas_call(
        bottleneck_kernel,
        out_shape=jax.ShapeDtypeStruct((N, H, W, Cout), jnp.bfloat16),
        grid=(N, n_strips),
        in_specs=[
            pl.BlockSpec((1, H, W, Cin), lambda n, s: (n, 0, 0, 0)),
            pl.BlockSpec((Cin, Cmid), const2),
            pl.BlockSpec((1, Cmid), const2),
            pl.BlockSpec((3, 3 * Cmid, Cmid), lambda n, s: (0, 0, 0)),
            pl.BlockSpec((1, Cmid), const2),
            pl.BlockSpec((Cmid, Cout), const2),
            pl.BlockSpec((1, Cout), const2),
        ],
        out_specs=pl.BlockSpec((1, strip, W, Cout), lambda n, s: (n, s, 0, 0)),
        scratch_shapes=[
            pltpu.VMEM(((strip + 2) * W, Cmid), jnp.bfloat16),   # conv1 out (+halos)
            pltpu.VMEM((strip * W, 3 * Cmid), jnp.bfloat16),     # K-packed conv2 lhs
        ],
        compiler_params=pltpu.CompilerParams(
            # strip axis "arbitrary": x's block is constant in s, so sharding s across
            # TensorCores (v7x megacore) would duplicate the whole-image DMA.
            dimension_semantics=("parallel", "arbitrary"),
            vmem_limit_bytes=_vmem_limit_bytes()),
        cost_estimate=pl.CostEstimate(flops=flops, transcendentals=0,
                                      bytes_accessed=bytes_accessed),
    )(x_nhwc, p["w1"], p["b1"], p["w2p"], p["b2"], p["w3"], p["b3"])


# --------------------------- avgpool + linear head ---------------------------

def head_kernel(x_ref, wl_ref, bl_ref, enc_ref, pred_ref):
    # AvgPool2d(H) -> flatten -> Linear(C, 1); outputs (encoding, prediction).
    N, H, W, C = x_ref.shape
    inv = 1.0 / float(H * W)
    wl = wl_ref[...]
    bl = bl_ref[...]
    for n in range(N):                                   # N static & small: unrolled
        feats = x_ref[n].reshape(H * W, C).astype(jnp.float32)
        enc = jnp.sum(feats, axis=0, keepdims=True) * inv            # (1, C)
        enc_ref[pl.ds(n, 1), :] = enc
        pred_ref[pl.ds(n, 1), :] = jnp.sum(enc * wl, axis=-1, keepdims=True) + bl


def resnet_head(feat_nhwc, hp):
    N, H, W, C = feat_nhwc.shape
    enc, pred = pl.pallas_call(
        head_kernel,
        out_shape=(jax.ShapeDtypeStruct((N, C), jnp.float32),
                   jax.ShapeDtypeStruct((N, 1), jnp.float32)),
        grid=(1,),
        in_specs=[pl.BlockSpec((N, H, W, C), lambda i: (0, 0, 0, 0)),
                  pl.BlockSpec((1, C), lambda i: (0, 0)),
                  pl.BlockSpec((1, 1), lambda i: (0, 0))],
        out_specs=(pl.BlockSpec((N, C), lambda i: (0, 0)),
                   pl.BlockSpec((N, 1), lambda i: (0, 0))),
        compiler_params=pltpu.CompilerParams(vmem_limit_bytes=_vmem_limit_bytes()),
    )(feat_nhwc, hp["wl"], hp["bl"])
    return pred, enc


# --------------------------- forward wrappers ---------------------------

def resnet_layer(x_nhwc, block_params, *, strip=None):
    for p in block_params:
        x_nhwc = bottleneck_block(x_nhwc, p, strip=strip)
    return x_nhwc


def resnet_tail_forward(x_nchw, block_params, head_params):
    """NCHW in (PyTorch layout), converted once; all Pallas kernels run NHWC/bf16."""
    x = jnp.transpose(x_nchw, (0, 2, 3, 1)).astype(jnp.bfloat16)
    feat = resnet_layer(x, block_params)
    pred, enc = resnet_head(feat, head_params)
    return pred, enc        # mirrors ResNet.forward's (x, encoding) at inference


# --------------------------- deterministic parameters ---------------------------

def make_bottleneck_params(key, inplanes, planes, dtype=jnp.bfloat16):
    """Conv weights with inference-mode BN folded in (w *= scale; bias kept in f32)."""
    eps = 1e-5
    cmid, cout = planes, planes * 4
    ks = jax.random.split(key, 15)

    def bn(kg, kb, km, kv, c):
        gamma = 1.0 + 0.1 * jax.random.normal(kg, (c,), jnp.float32)
        beta = 0.1 * jax.random.normal(kb, (c,), jnp.float32)
        mean = 0.1 * jax.random.normal(km, (c,), jnp.float32)
        var = 1.0 + 0.1 * jnp.abs(jax.random.normal(kv, (c,), jnp.float32))
        scale = gamma * lax.rsqrt(var + eps)
        return scale, beta - mean * scale

    w1 = 0.1 * jax.random.normal(ks[0], (inplanes, cmid), jnp.float32)      # 1x1
    w2 = 0.1 * jax.random.normal(ks[1], (3, 3, cmid, cmid), jnp.float32)    # 3x3 HWIO
    w3 = 0.1 * jax.random.normal(ks[2], (cmid, cout), jnp.float32)          # 1x1
    s1, b1 = bn(ks[3], ks[4], ks[5], ks[6], cmid)
    s2, b2 = bn(ks[7], ks[8], ks[9], ks[10], cmid)
    s3, b3 = bn(ks[11], ks[12], ks[13], ks[14], cout)

    w2s = w2 * s2[None, None, None, :]
    # K-packed conv2 weights: w2p[kx, ky*cmid + cin, cout] = w2s[ky, kx, cin, cout].
    w2p = jnp.transpose(w2s, (1, 0, 2, 3)).reshape(3, 3 * cmid, cmid)
    return dict(
        w1=(w1 * s1[None, :]).astype(dtype),
        w2=w2s.astype(dtype),             # HWIO copy kept only for the JAX reference
        w2p=w2p.astype(dtype),
        w3=(w3 * s3[None, :]).astype(dtype),
        b1=b1.reshape(1, cmid),
        b2=b2.reshape(1, cmid),
        b3=b3.reshape(1, cout),
    )


def make_head_params(key, c):
    kw, kb = jax.random.split(key)
    return dict(wl=0.05 * jax.random.normal(kw, (1, c), jnp.float32),
                bl=0.05 * jax.random.normal(kb, (1, 1), jnp.float32))


# --------------------------- pure-JAX reference ---------------------------

def reference_bottleneck(x, p):
    N, H, W, Cin = x.shape
    Cmid = p["w1"].shape[1]
    Cout = p["w3"].shape[1]
    o = jnp.dot(x.reshape(-1, Cin), p["w1"], preferred_element_type=jnp.float32)
    o = jnp.maximum(o + p["b1"], 0.0).reshape(N, H, W, Cmid).astype(jnp.bfloat16)
    o = lax.conv_general_dilated(o, p["w2"], (1, 1), "SAME",
                                 dimension_numbers=("NHWC", "HWIO", "NHWC"),
                                 preferred_element_type=jnp.float32)
    o = jnp.maximum(o + p["b2"][0], 0.0).astype(jnp.bfloat16)
    o = jnp.dot(o.reshape(-1, Cmid), p["w3"], preferred_element_type=jnp.float32)
    o = jnp.maximum(o + p["b3"] + x.reshape(-1, Cin).astype(jnp.float32), 0.0)
    return o.reshape(N, H, W, Cout).astype(jnp.bfloat16)


def reference_forward(x_nchw, block_params, head_params):
    x = jnp.transpose(x_nchw, (0, 2, 3, 1)).astype(jnp.bfloat16)
    for p in block_params:
        x = reference_bottleneck(x, p)
    xf = x.astype(jnp.float32)
    enc = jnp.mean(xf.reshape(xf.shape[0], -1, xf.shape[-1]), axis=1)
    pred = jnp.sum(enc * head_params["wl"], axis=-1, keepdims=True) + head_params["bl"]
    return pred, enc, x


# --------------------------- test ---------------------------

if __name__ == "__main__":
    key = jax.random.PRNGKey(0)
    k_x, k_blk1, k_blk2, k_head = jax.random.split(key, 4)

    N, H, W = 2, 16, 16
    planes = 32
    inplanes = planes * 4          # 128 -> identity residual (downsample=None)

    x_nchw = jax.random.normal(k_x, (N, inplanes, H, W), jnp.float32)
    blocks = [make_bottleneck_params(k_blk1, inplanes, planes),
              make_bottleneck_params(k_blk2, inplanes, planes)]
    head_p = make_head_params(k_head, inplanes)

    # Pallas forward (NCHW interface like the PyTorch module; NHWC/bf16 inside).
    pred, enc = jax.block_until_ready(
        jax.jit(resnet_tail_forward)(x_nchw, blocks, head_p))

    # Feature maps from the fused bottleneck kernels alone: auto strip (whole image,
    # no halos) and an explicit multi-strip run that exercises the halo/pl.when path.
    x_nhwc = jnp.transpose(x_nchw, (0, 2, 3, 1)).astype(jnp.bfloat16)
    feat = jax.block_until_ready(jax.jit(resnet_layer)(x_nhwc, blocks))
    feat_s4 = jax.block_until_ready(
        jax.jit(functools.partial(resnet_layer, strip=4))(x_nhwc, blocks))

    # Pure-JAX reference (same bf16 operands / f32 accumulation).
    pred_ref, enc_ref, feat_ref = reference_forward(x_nchw, blocks, head_p)

    assert pred.shape == (N, 1) and enc.shape == (N, inplanes)
    feat_err = float(jnp.max(jnp.abs(feat.astype(jnp.float32)
                                     - feat_ref.astype(jnp.float32))))
    feat4_err = float(jnp.max(jnp.abs(feat_s4.astype(jnp.float32)
                                      - feat_ref.astype(jnp.float32))))
    enc_err = float(jnp.max(jnp.abs(enc - enc_ref)))
    pred_err = float(jnp.max(jnp.abs(pred - pred_ref)))
    assert feat_err < 1e-1, feat_err
    assert feat4_err < 1e-1, feat4_err
    assert enc_err < 5e-2, enc_err
    assert pred_err < 5e-2, pred_err
    print("KERNEL_OK")
</pallas_src>

<mosaic_0001>
module attributes {stable_mosaic.version = 11 : i64} {
  func.func @bottleneck_kernel(%arg0: i32, %arg1: i32, %arg2: memref<1x16x16x128xbf16, #tpu.memory_space<vmem>>, %arg3: memref<128x32xbf16, #tpu.memory_space<vmem>>, %arg4: memref<1x32xf32, #tpu.memory_space<vmem>>, %arg5: memref<3x96x32xbf16, #tpu.memory_space<vmem>>, %arg6: memref<1x32xf32, #tpu.memory_space<vmem>>, %arg7: memref<32x128xbf16, #tpu.memory_space<vmem>>, %arg8: memref<1x128xf32, #tpu.memory_space<vmem>>, %arg9: memref<1x16x16x128xbf16, #tpu.memory_space<vmem>>, %arg10: memref<288x32xbf16, #tpu.memory_space<vmem>>, %arg11: memref<256x96xbf16, #tpu.memory_space<vmem>>) attributes {dimension_semantics = [#tpu.dimension_semantics<parallel>, #tpu.dimension_semantics<arbitrary>], iteration_bounds = array<i64: 2, 1>, scalar_prefetch = 0 : i64, scratch_operands = 2 : i64, tpu.core_type = #tpu.core_type<tc>, window_params = [{transform_indices = @transform_0, window_bounds = array<i64: 1, 16, 16, 128>}, {pipeline_mode = #tpu.pipeline_mode<synchronous>, transform_indices = @transform_1, window_bounds = array<i64: 128, 32>}, {pipeline_mode = #tpu.pipeline_mode<synchronous>, transform_indices = @transform_2, window_bounds = array<i64: 1, 32>}, {pipeline_mode = #tpu.pipeline_mode<synchronous>, transform_indices = @transform_3, window_bounds = array<i64: 3, 96, 32>}, {pipeline_mode = #tpu.pipeline_mode<synchronous>, transform_indices = @transform_4, window_bounds = array<i64: 1, 32>}, {pipeline_mode = #tpu.pipeline_mode<synchronous>, transform_indices = @transform_5, window_bounds = array<i64: 32, 128>}, {pipeline_mode = #tpu.pipeline_mode<synchronous>, transform_indices = @transform_6, window_bounds = array<i64: 1, 128>}, {transform_indices = @transform_7, window_bounds = array<i64: 1, 16, 16, 128>}]} {
    %c16_i32 = arith.constant 16 : i32
    %0 = arith.muli %arg1, %c16_i32 : i32
    %1 = tpu.assume_multiple %0, 16 : i32
    %c0 = arith.constant 0 : index
    %c0_0 = arith.constant 0 : index
    %2 = vector.load %arg3[%c0, %c0_0] : memref<128x32xbf16, #tpu.memory_space<vmem>>, vector<128x32xbf16>
    %c0_1 = arith.constant 0 : index
    %c0_2 = arith.constant 0 : index
    %3 = vector.load %arg4[%c0_1, %c0_2] : memref<1x32xf32, #tpu.memory_space<vmem>>, vector<1x32xf32>
    %c0_3 = arith.constant 0 : index
    %4 = arith.index_cast %1 : i32 to index
    %c0_4 = arith.constant 0 : index
    %c0_5 = arith.constant 0 : index
    %5 = vector.load %arg2[%c0_3, %4, %c0_4, %c0_5] : memref<1x16x16x128xbf16, #tpu.memory_space<vmem>>, vector<1x16x16x128xbf16>
    %6 = vector.shape_cast %5 : vector<1x16x16x128xbf16> to vector<16x16x128xbf16>
    %7 = vector.shape_cast %6 : vector<16x16x128xbf16> to vector<256x128xbf16>
    %cst = arith.constant dense<0.000000e+00> : vector<256x32xf32>
    %8 = tpu.matmul %7, %2, %cst {dimension_numbers = #tpu.dot_dimension_numbers<[1], [0], [0], [1], [0, 0, 1, 1], [], []>} : vector<256x128xbf16>, vector<128x32xbf16>, vector<256x32xf32> -> vector<256x32xf32>
    %9 = vector.broadcast %3 : vector<1x32xf32> to vector<256x32xf32>
    %10 = arith.addf %8, %9 : vector<256x32xf32>
    %cst_6 = arith.constant 0.000000e+00 : f32
    %11 = vector.broadcast %cst_6 : f32 to vector<256x32xf32>
    %12 = arith.maximumf %10, %11 : vector<256x32xf32>
    %13 = arith.truncf %12 : vector<256x32xf32> to vector<256x32xbf16>
    %c16 = arith.constant 16 : index
    %c0_7 = arith.constant 0 : index
    %14 = vector.load %arg10[%c16, %c0_7] : memref<288x32xbf16, #tpu.memory_space<vmem>>, vector<256x32xbf16>
    tpu.vector_store %arg10[%c16, %c0_7], %13 {strides = array<i32>} : memref<288x32xbf16, #tpu.memory_space<vmem>>, vector<256x32xbf16>,
    %c0_i32 = arith.constant 0 : i32
    %15 = arith.cmpi sgt, %arg1, %c0_i32 : i32
    %16 = arith.extui %15 : i1 to i32
    %c0_i32_8 = arith.constant 0 : i32
    %17 = arith.cmpi ne, %16, %c0_i32_8 : i32
    scf.if %17 {
      %c1_i32_59 = arith.constant 1 : i32
      %94 = arith.subi %1, %c1_i32_59 : i32
      %c0_60 = arith.constant 0 : index
      %95 = arith.index_cast %94 : i32 to index
      %c0_61 = arith.constant 0 : index
      %c0_62 = arith.constant 0 : index
      %96 = vector.load %arg2[%c0_60, %95, %c0_61, %c0_62] : memref<1x16x16x128xbf16, #tpu.memory_space<vmem>>, vector<1x1x16x128xbf16>
      %97 = vector.shape_cast %96 : vector<1x1x16x128xbf16> to vector<1x16x128xbf16>
      %98 = vector.shape_cast %97 : vector<1x16x128xbf16> to vector<16x128xbf16>
      %cst_63 = arith.constant dense<0.000000e+00> : vector<16x32xf32>
      %99 = tpu.matmul %98, %2, %cst_63 {dimension_numbers = #tpu.dot_dimension_numbers<[1], [0], [0], [1], [0, 0, 1, 1], [], []>} : vector<16x128xbf16>, vector<128x32xbf16>, vector<16x32xf32> -> vector<16x32xf32>
      %100 = vector.broadcast %3 : vector<1x32xf32> to vector<16x32xf32>
      %101 = arith.addf %99, %100 : vector<16x32xf32>
      %cst_64 = arith.constant 0.000000e+00 : f32
      %102 = vector.broadcast %cst_64 : f32 to vector<16x32xf32>
      %103 = arith.maximumf %101, %102 : vector<16x32xf32>
      %104 = arith.truncf %103 : vector<16x32xf32> to vector<16x32xbf16>
      %c0_65 = arith.constant 0 : index
      %c0_66 = arith.constant 0 : index
      %105 = vector.load %arg10[%c0_65, %c0_66] : memref<288x32xbf16, #tpu.memory_space<vmem>>, vector<16x32xbf16>
      tpu.vector_store %arg10[%c0_65, %c0_66], %104 {strides = array<i32>} : memref<288x32xbf16, #tpu.memory_space<vmem>>, vector<16x32xbf16>,
    } else {
    }
    %c0_i32_9 = arith.constant 0 : i32
    %18 = arith.cmpi eq, %arg1, %c0_i32_9 : i32
    %19 = arith.extui %18 : i1 to i32
    %c0_i32_10 = arith.constant 0 : i32
    %20 = arith.cmpi ne, %19, %c0_i32_10 : i32
    scf.if %20 {
      %cst_59 = arith.constant 0.000000e+00 : bf16
      %94 = vector.broadcast %cst_59 : bf16 to vector<16x32xbf16>
      %c0_60 = arith.constant 0 : index
      %c0_61 = arith.constant 0 : index
      %95 = vector.load %arg10[%c0_60, %c0_61] : memref<288x32xbf16, #tpu.memory_space<vmem>>, vector<16x32xbf16>
      tpu.vector_store %arg10[%c0_60, %c0_61], %94 {strides = array<i32>} : memref<288x32xbf16, #tpu.memory_space<vmem>>, vector<16x32xbf16>,
    } else {
    }
    %c0_i32_11 = arith.constant 0 : i32
    %21 = arith.cmpi slt, %arg1, %c0_i32_11 : i32
    %22 = arith.extui %21 : i1 to i32
    %c0_i32_12 = arith.constant 0 : i32
    %23 = arith.cmpi ne, %22, %c0_i32_12 : i32
    scf.if %23 {
      %c16_i32_59 = arith.constant 16 : i32
      %94 = arith.addi %1, %c16_i32_59 : i32
      %c0_60 = arith.constant 0 : index
      %95 = arith.index_cast %94 : i32 to index
      %c0_61 = arith.constant 0 : index
      %c0_62 = arith.constant 0 : index
      %96 = vector.load %arg2[%c0_60, %95, %c0_61, %c0_62] : memref<1x16x16x128xbf16, #tpu.memory_space<vmem>>, vector<1x1x16x128xbf16>
      %97 = vector.shape_cast %96 : vector<1x1x16x128xbf16> to vector<1x16x128xbf16>
      %98 = vector.shape_cast %97 : vector<1x16x128xbf16> to vector<16x128xbf16>
      %cst_63 = arith.constant dense<0.000000e+00> : vector<16x32xf32>
      %99 = tpu.matmul %98, %2, %cst_63 {dimension_numbers = #tpu.dot_dimension_numbers<[1], [0], [0], [1], [0, 0, 1, 1], [], []>} : vector<16x128xbf16>, vector<128x32xbf16>, vector<16x32xf32> -> vector<16x32xf32>
      %100 = vector.broadcast %3 : vector<1x32xf32> to vector<16x32xf32>
      %101 = arith.addf %99, %100 : vector<16x32xf32>
      %cst_64 = arith.constant 0.000000e+00 : f32
      %102 = vector.broadcast %cst_64 : f32 to vector<16x32xf32>
      %103 = arith.maximumf %101, %102 : vector<16x32xf32>
      %104 = arith.truncf %103 : vector<16x32xf32> to vector<16x32xbf16>
      %c272 = arith.constant 272 : index
      %c0_65 = arith.constant 0 : index
      %105 = vector.load %arg10[%c272, %c0_65] : memref<288x32xbf16, #tpu.memory_space<vmem>>, vector<16x32xbf16>
      tpu.vector_store %arg10[%c272, %c0_65], %104 {strides = array<i32>} : memref<288x32xbf16, #tpu.memory_space<vmem>>, vector<16x32xbf16>,
    } else {
    }
    %c0_i32_13 = arith.constant 0 : i32
    %24 = arith.cmpi eq, %arg1, %c0_i32_13 : i32
    %25 = arith.extui %24 : i1 to i32
    %c0_i32_14 = arith.constant 0 : i32
    %26 = arith.cmpi ne, %25, %c0_i32_14 : i32
    scf.if %26 {
      %cst_59 = arith.constant 0.000000e+00 : bf16
      %94 = vector.broadcast %cst_59 : bf16 to vector<16x32xbf16>
      %c272 = arith.constant 272 : index
      %c0_60 = arith.constant 0 : index
      %95 = vector.load %arg10[%c272, %c0_60] : memref<288x32xbf16, #tpu.memory_space<vmem>>, vector<16x32xbf16>
      tpu.vector_store %arg10[%c272, %c0_60], %94 {strides = array<i32>} : memref<288x32xbf16, #tpu.memory_space<vmem>>, vector<16x32xbf16>,
    } else {
    }
    %c0_15 = arith.constant 0 : index
    %c0_16 = arith.constant 0 : index
    %27 = vector.load %arg10[%c0_15, %c0_16] : memref<288x32xbf16, #tpu.memory_space<vmem>>, vector<256x32xbf16>
    %c0_17 = arith.constant 0 : index
    %c0_18 = arith.constant 0 : index
    %28 = vector.load %arg11[%c0_17, %c0_18] : memref<256x96xbf16, #tpu.memory_space<vmem>>, vector<256x32xbf16>
    tpu.vector_store %arg11[%c0_17, %c0_18], %27 {strides = array<i32>} : memref<256x96xbf16, #tpu.memory_space<vmem>>, vector<256x32xbf16>,
    %c16_19 = arith.constant 16 : index
    %c0_20 = arith.constant 0 : index
    %29 = vector.load %arg10[%c16_19, %c0_20] : memref<288x32xbf16, #tpu.memory_space<vmem>>, vector<256x32xbf16>
    %c0_21 = arith.constant 0 : index
    %c32 = arith.constant 32 : index
    %30 = vector.load %arg11[%c0_21, %c32] : memref<256x96xbf16, #tpu.memory_space<vmem>>, vector<256x32xbf16>
    tpu.vector_store %arg11[%c0_21, %c32], %29 {strides = array<i32>} : memref<256x96xbf16, #tpu.memory_space<vmem>>, vector<256x32xbf16>,
    %c32_22 = arith.constant 32 : index
    %c0_23 = arith.constant 0 : index
    %31 = vector.load %arg10[%c32_22, %c0_23] : memref<288x32xbf16, #tpu.memory_space<vmem>>, vector<256x32xbf16>
    %c0_24 = arith.constant 0 : index
    %c64 = arith.constant 64 : index
    %32 = vector.load %arg11[%c0_24, %c64] : memref<256x96xbf16, #tpu.memory_space<vmem>>, vector<256x32xbf16>
    tpu.vector_store %arg11[%c0_24, %c64], %31 {strides = array<i32>} : memref<256x96xbf16, #tpu.memory_space<vmem>>, vector<256x32xbf16>,
    %c0_25 = arith.constant 0 : index
    %c0_26 = arith.constant 0 : index
    %33 = vector.load %arg11[%c0_25, %c0_26] : memref<256x96xbf16, #tpu.memory_space<vmem>>, vector<256x96xbf16>
    %34 = tpu.iota {dimensions = array<i32: 0>} : vector<256x1xi32>
    %c16_i32_27 = arith.constant 16 : i32
    %c0_i32_28 = arith.constant 0 : i32
    %35 = arith.cmpi eq, %c16_i32_27, %c0_i32_28 : i32
    %c1_i32 = arith.constant 1 : i32
    %36 = arith.select %35, %c1_i32, %c16_i32_27 : i32
    %37 = vector.broadcast %36 : i32 to vector<256x1xi32>
    %38 = arith.remsi %34, %37 : vector<256x1xi32>
    %c0_i32_29 = arith.constant 0 : i32
    %39 = vector.broadcast %c0_i32_29 : i32 to vector<256x1xi32>
    %40 = arith.cmpi ne, %38, %39 : vector<256x1xi32>
    %c0_i32_30 = arith.constant 0 : i32
    %41 = vector.broadcast %c0_i32_30 : i32 to vector<256x1xi32>
    %42 = arith.cmpi slt, %38, %41 : vector<256x1xi32>
    %c0_i32_31 = arith.constant 0 : i32
    %43 = arith.cmpi slt, %36, %c0_i32_31 : i32
    %44 = vector.broadcast %43 : i1 to vector<256x1xi1>
    %45 = vector.broadcast %44 : vector<256x1xi1> to vector<256x1xi1>
    %46 = arith.xori %42, %45 : vector<256x1xi1>
    %47 = arith.andi %46, %40 : vector<256x1xi1>
    %48 = vector.broadcast %36 : i32 to vector<256x1xi32>
    %49 = arith.addi %38, %48 : vector<256x1xi32>
    %50 = arith.select %47, %49, %38 : vector<256x1xi1>, vector<256x1xi32>
    %c0_32 = arith.constant 0 : index
    %c0_33 = arith.constant 0 : index
    %c0_34 = arith.constant 0 : index
    %51 = vector.load %arg5[%c0_32, %c0_33, %c0_34] : memref<3x96x32xbf16, #tpu.memory_space<vmem>>, vector<1x96x32xbf16>
    %52 = vector.shape_cast %51 : vector<1x96x32xbf16> to vector<96x32xbf16>
    %cst_35 = arith.constant dense<0.000000e+00> : vector<256x32xf32>
    %53 = tpu.matmul %33, %52, %cst_35 {dimension_numbers = #tpu.dot_dimension_numbers<[1], [0], [0], [1], [0, 0, 1, 1], [], []>} : vector<256x96xbf16>, vector<96x32xbf16>, vector<256x32xf32> -> vector<256x32xf32>
    %c1 = arith.constant 1 : index
    %c0_36 = arith.constant 0 : index
    %c0_37 = arith.constant 0 : index
    %54 = vector.load %arg5[%c1, %c0_36, %c0_37] : memref<3x96x32xbf16, #tpu.memory_space<vmem>>, vector<1x96x32xbf16>
    %55 = vector.shape_cast %54 : vector<1x96x32xbf16> to vector<96x32xbf16>
    %cst_38 = arith.constant dense<0.000000e+00> : vector<256x32xf32>
    %56 = tpu.matmul %33, %55, %cst_38 {dimension_numbers = #tpu.dot_dimension_numbers<[1], [0], [0], [1], [0, 0, 1, 1], [], []>} : vector<256x96xbf16>, vector<96x32xbf16>, vector<256x32xf32> -> vector<256x32xf32>
    %c2 = arith.constant 2 : index
    %c0_39 = arith.constant 0 : index
    %c0_40 = arith.constant 0 : index
    %57 = vector.load %arg5[%c2, %c0_39, %c0_40] : memref<3x96x32xbf16, #tpu.memory_space<vmem>>, vector<1x96x32xbf16>
    %58 = vector.shape_cast %57 : vector<1x96x32xbf16> to vector<96x32xbf16>
    %cst_41 = arith.constant dense<0.000000e+00> : vector<256x32xf32>
    %59 = tpu.matmul %33, %58, %cst_41 {dimension_numbers = #tpu.dot_dimension_numbers<[1], [0], [0], [1], [0, 0, 1, 1], [], []>} : vector<256x96xbf16>, vector<96x32xbf16>, vector<256x32xf32> -> vector<256x32xf32>
    %c1_i32_42 = arith.constant 1 : i32
    %60 = vector.broadcast %c1_i32_42 : i32 to vector<256x1xi32>
    %61 = arith.cmpi sge, %50, %60 : vector<256x1xi32>
    %c1_i32_43 = arith.constant 1 : i32
    %62 = tpu.dynamic_rotate %53 by %c1_i32_43 dim 0 : vector<256x32xf32>, i32 -> vector<256x32xf32>
    %cst_44 = arith.constant 0.000000e+00 : f32
    %63 = vector.broadcast %cst_44 : f32 to vector<256x32xf32>
    %64 = vector.shape_cast %61 : vector<256x1xi1> to vector<256x1xi1>
    %65 = vector.broadcast %64 : vector<256x1xi1> to vector<256x32xi1>
    %66 = arith.select %65, %62, %63 : vector<256x32xi1>, vector<256x32xf32>
    %67 = arith.addf %56, %66 : vector<256x32xf32>
    %c14_i32 = arith.constant 14 : i32
    %68 = vector.broadcast %c14_i32 : i32 to vector<256x1xi32>
    %69 = arith.cmpi sle, %50, %68 : vector<256x1xi32>
    %c255_i32 = arith.constant 255 : i32
    %70 = tpu.dynamic_rotate %59 by %c255_i32 dim 0 : vector<256x32xf32>, i32 -> vector<256x32xf32>
    %cst_45 = arith.constant 0.000000e+00 : f32
    %71 = vector.broadcast %cst_45 : f32 to vector<256x32xf32>
    %72 = vector.shape_cast %69 : vector<256x1xi1> to vector<256x1xi1>
    %73 = vector.broadcast %72 : vector<256x1xi1> to vector<256x32xi1>
    %74 = arith.select %73, %70, %71 : vector<256x32xi1>, vector<256x32xf32>
    %75 = arith.addf %67, %74 : vector<256x32xf32>
    %c0_46 = arith.constant 0 : index
    %c0_47 = arith.constant 0 : index
    %76 = vector.load %arg6[%c0_46, %c0_47] : memref<1x32xf32, #tpu.memory_space<vmem>>, vector<1x32xf32>
    %77 = vector.broadcast %76 : vector<1x32xf32> to vector<256x32xf32>
    %78 = arith.addf %75, %77 : vector<256x32xf32>
    %cst_48 = arith.constant 0.000000e+00 : f32
    %79 = vector.broadcast %cst_48 : f32 to vector<256x32xf32>
    %80 = arith.maximumf %78, %79 : vector<256x32xf32>
    %81 = arith.truncf %80 : vector<256x32xf32> to vector<256x32xbf16>
    %c0_49 = arith.constant 0 : index
    %c0_50 = arith.constant 0 : index
    %82 = vector.load %arg7[%c0_49, %c0_50] : memref<32x128xbf16, #tpu.memory_space<vmem>>, vector<32x128xbf16>
    %cst_51 = arith.constant dense<0.000000e+00> : vector<256x128xf32>
    %83 = tpu.matmul %81, %82, %cst_51 {dimension_numbers = #tpu.dot_dimension_numbers<[1], [0], [0], [1], [0, 0, 1, 1], [], []>} : vector<256x32xbf16>, vector<32x128xbf16>, vector<256x128xf32> -> vector<256x128xf32>
    %c0_52 = arith.constant 0 : index
    %c0_53 = arith.constant 0 : index
    %84 = vector.load %arg8[%c0_52, %c0_53] : memref<1x128xf32, #tpu.memory_space<vmem>>, vector<1x128xf32>
    %85 = vector.broadcast %84 : vector<1x128xf32> to vector<256x128xf32>
    %86 = arith.addf %83, %85 : vector<256x128xf32>
    %87 = arith.extf %7 : vector<256x128xbf16> to vector<256x128xf32>
    %88 = arith.addf %86, %87 : vector<256x128xf32>
    %cst_54 = arith.constant 0.000000e+00 : f32
    %89 = vector.broadcast %cst_54 : f32 to vector<256x128xf32>
    %90 = arith.maximumf %88, %89 : vector<256x128xf32>
    %91 = vector.shape_cast %90 : vector<256x128xf32> to vector<1x16x16x128xf32>
    %92 = arith.truncf %91 : vector<1x16x16x128xf32> to vector<1x16x16x128xbf16>
    %c0_55 = arith.constant 0 : index
    %c0_56 = arith.constant 0 : index
    %c0_57 = arith.constant 0 : index
    %c0_58 = arith.constant 0 : index
    %93 = vector.load %arg9[%c0_55, %c0_56, %c0_57, %c0_58] : memref<1x16x16x128xbf16, #tpu.memory_space<vmem>>, vector<1x16x16x128xbf16>
    tpu.vector_store %arg9[%c0_55, %c0_56, %c0_57, %c0_58], %92 {strides = array<i32>} : memref<1x16x16x128xbf16, #tpu.memory_space<vmem>>, vector<1x16x16x128xbf16>,
    return
  }
  func.func @transform_0(%arg0: i32, %arg1: i32) -> (i32, i32, i32, i32) {
    %c0_i32 = arith.constant 0 : i32
    %c0_i32_0 = arith.constant 0 : i32
    %c0_i32_1 = arith.constant 0 : i32
    %c0_i32_2 = arith.constant 0 : i32
    return %arg0, %c0_i32, %c0_i32_0, %c0_i32_1 : i32, i32, i32, i32
  }
  func.func @transform_1(%arg0: i32, %arg1: i32) -> (i32, i32) {
    %c0_i32 = arith.constant 0 : i32
    %c0_i32_0 = arith.constant 0 : i32
    %c0_i32_1 = arith.constant 0 : i32
    return %c0_i32, %c0_i32_0 : i32, i32
  }
  func.func @transform_2(%arg0: i32, %arg1: i32) -> (i32, i32) {
    %c0_i32 = arith.constant 0 : i32
    %c0_i32_0 = arith.constant 0 : i32
    %c0_i32_1 = arith.constant 0 : i32
    return %c0_i32, %c0_i32_0 : i32, i32
  }
  func.func @transform_3(%arg0: i32, %arg1: i32) -> (i32, i32, i32) {
    %c0_i32 = arith.constant 0 : i32
    %c0_i32_0 = arith.constant 0 : i32
    %c0_i32_1 = arith.constant 0 : i32
    %c0_i32_2 = arith.constant 0 : i32
    return %c0_i32, %c0_i32_0, %c0_i32_1 : i32, i32, i32
  }
  func.func @transform_4(%arg0: i32, %arg1: i32) -> (i32, i32) {
    %c0_i32 = arith.constant 0 : i32
    %c0_i32_0 = arith.constant 0 : i32
    %c0_i32_1 = arith.constant 0 : i32
    return %c0_i32, %c0_i32_0 : i32, i32
  }
  func.func @transform_5(%arg0: i32, %arg1: i32) -> (i32, i32) {
    %c0_i32 = arith.constant 0 : i32
    %c0_i32_0 = arith.constant 0 : i32
    %c0_i32_1 = arith.constant 0 : i32
    return %c0_i32, %c0_i32_0 : i32, i32
  }
  func.func @transform_6(%arg0: i32, %arg1: i32) -> (i32, i32) {
    %c0_i32 = arith.constant 0 : i32
    %c0_i32_0 = arith.constant 0 : i32
    %c0_i32_1 = arith.constant 0 : i32
    return %c0_i32, %c0_i32_0 : i32, i32
  }
  func.func @transform_7(%arg0: i32, %arg1: i32) -> (i32, i32, i32, i32) {
    %c0_i32 = arith.constant 0 : i32
    %c0_i32_0 = arith.constant 0 : i32
    %c0_i32_1 = arith.constant 0 : i32
    return %arg0, %arg1, %c0_i32, %c0_i32_0 : i32, i32, i32, i32
  }
}

module attributes {stable_mosaic.version = 11 : i64} {
  func.func @head_kernel(%arg0: i32, %arg1: memref<2x16x16x128xbf16, #tpu.memory_space<vmem>>, %arg2: memref<1x128xf32, #tpu.memory_space<vmem>>, %arg3: memref<1x1xf32, #tpu.memory_space<vmem>>, %arg4: memref<2x128xf32, #tpu.memory_space<vmem>>, %arg5: memref<2x1xf32, #tpu.memory_space<vmem>>) attributes {dimension_semantics = [#tpu.dimension_semantics<arbitrary>], iteration_bounds = array<i64: 1>, scalar_prefetch = 0 : i64, scratch_operands = 0 : i64, tpu.core_type = #tpu.core_type<tc>, window_params = [{pipeline_mode = #tpu.pipeline_mode<synchronous>, transform_indices = @transform_0, window_bounds = array<i64: 2, 16, 16, 128>}, {pipeline_mode = #tpu.pipeline_mode<synchronous>, transform_indices = @transform_1, window_bounds = array<i64: 1, 128>}, {pipeline_mode = #tpu.pipeline_mode<synchronous>, transform_indices = @transform_2, window_bounds = array<i64: 1, 1>}, {pipeline_mode = #tpu.pipeline_mode<synchronous>, transform_indices = @transform_3, window_bounds = array<i64: 2, 128>}, {pipeline_mode = #tpu.pipeline_mode<synchronous>, transform_indices = @transform_4, window_bounds = array<i64: 2, 1>}]} {
    %c0 = arith.constant 0 : index
    %c0_0 = arith.constant 0 : index
    %0 = vector.load %arg2[%c0, %c0_0] : memref<1x128xf32, #tpu.memory_space<vmem>>, vector<1x128xf32>
    %c0_1 = arith.constant 0 : index
    %c0_2 = arith.constant 0 : index
    %1 = vector.load %arg3[%c0_1, %c0_2] : memref<1x1xf32, #tpu.memory_space<vmem>>, vector<1x1xf32>
    %c0_3 = arith.constant 0 : index
    %c0_4 = arith.constant 0 : index
    %c0_5 = arith.constant 0 : index
    %c0_6 = arith.constant 0 : index
    %2 = vector.load %arg1[%c0_3, %c0_4, %c0_5, %c0_6] : memref<2x16x16x128xbf16, #tpu.memory_space<vmem>>, vector<1x16x16x128xbf16>
    %3 = vector.shape_cast %2 : vector<1x16x16x128xbf16> to vector<16x16x128xbf16>
    %4 = vector.shape_cast %3 : vector<16x16x128xbf16> to vector<256x128xbf16>
    %5 = arith.extf %4 : vector<256x128xbf16> to vector<256x128xf32>
    %cst = arith.constant dense<0.000000e+00> : vector<128xf32>
    %6 = vector.multi_reduction <add>, %5, %cst [0] : vector<256x128xf32> to vector<128xf32>
    %7 = vector.shape_cast %6 : vector<128xf32> to vector<1x128xf32>
    %cst_7 = arith.constant 3.906250e-03 : f32
    %8 = vector.broadcast %cst_7 : f32 to vector<1x128xf32>
    %9 = arith.mulf %7, %8 : vector<1x128xf32>
    %c0_8 = arith.constant 0 : index
    %c0_9 = arith.constant 0 : index
    %10 = vector.load %arg4[%c0_8, %c0_9] : memref<2x128xf32, #tpu.memory_space<vmem>>, vector<1x128xf32>
    tpu.vector_store %arg4[%c0_8, %c0_9], %9 {strides = array<i32>} : memref<2x128xf32, #tpu.memory_space<vmem>>, vector<1x128xf32>,
    %11 = arith.mulf %9, %0 : vector<1x128xf32>
    %cst_10 = arith.constant dense<0.000000e+00> : vector<1xf32>
    %12 = vector.multi_reduction <add>, %11, %cst_10 [1] : vector<1x128xf32> to vector<1xf32>
    %13 = vector.shape_cast %12 : vector<1xf32> to vector<1x1xf32>
    %14 = arith.addf %13, %1 : vector<1x1xf32>
    %c0_11 = arith.constant 0 : index
    %c0_12 = arith.constant 0 : index
    %15 = vector.load %arg5[%c0_11, %c0_12] : memref<2x1xf32, #tpu.memory_space<vmem>>, vector<1x1xf32>
    tpu.vector_store %arg5[%c0_11, %c0_12], %14 {strides = array<i32>} : memref<2x1xf32, #tpu.memory_space<vmem>>, vector<1x1xf32>,
    %c1 = arith.constant 1 : index
    %c0_13 = arith.constant 0 : index
    %c0_14 = arith.constant 0 : index
    %c0_15 = arith.constant 0 : index
    %16 = vector.load %arg1[%c1, %c0_13, %c0_14, %c0_15] : memref<2x16x16x128xbf16, #tpu.memory_space<vmem>>, vector<1x16x16x128xbf16>
    %17 = vector.shape_cast %16 : vector<1x16x16x128xbf16> to vector<16x16x128xbf16>
    %18 = vector.shape_cast %17 : vector<16x16x128xbf16> to vector<256x128xbf16>
    %19 = arith.extf %18 : vector<256x128xbf16> to vector<256x128xf32>
    %cst_16 = arith.constant dense<0.000000e+00> : vector<128xf32>
    %20 = vector.multi_reduction <add>, %19, %cst_16 [0] : vector<256x128xf32> to vector<128xf32>
    %21 = vector.shape_cast %20 : vector<128xf32> to vector<1x128xf32>
    %cst_17 = arith.constant 3.906250e-03 : f32
    %22 = vector.broadcast %cst_17 : f32 to vector<1x128xf32>
    %23 = arith.mulf %21, %22 : vector<1x128xf32>
    %c1_18 = arith.constant 1 : index
    %c0_19 = arith.constant 0 : index
    %24 = vector.load %arg4[%c1_18, %c0_19] : memref<2x128xf32, #tpu.memory_space<vmem>>, vector<1x128xf32>
    tpu.vector_store %arg4[%c1_18, %c0_19], %23 {strides = array<i32>} : memref<2x128xf32, #tpu.memory_space<vmem>>, vector<1x128xf32>,
    %25 = arith.mulf %23, %0 : vector<1x128xf32>
    %cst_20 = arith.constant dense<0.000000e+00> : vector<1xf32>
    %26 = vector.multi_reduction <add>, %25, %cst_20 [1] : vector<1x128xf32> to vector<1xf32>
    %27 = vector.shape_cast %26 : vector<1xf32> to vector<1x1xf32>
    %28 = arith.addf %27, %1 : vector<1x1xf32>
    %c1_21 = arith.constant 1 : index
    %c0_22 = arith.constant 0 : index
    %29 = vector.load %arg5[%c1_21, %c0_22] : memref<2x1xf32, #tpu.memory_space<vmem>>, vector<1x1xf32>
    tpu.vector_store %arg5[%c1_21, %c0_22], %28 {strides = array<i32>} : memref<2x1xf32, #tpu.memory_space<vmem>>, vector<1x1xf32>,
    return
  }
  func.func @transform_0(%arg0: i32) -> (i32, i32, i32, i32) {
    %c0_i32 = arith.constant 0 : i32
    %c0_i32_0 = arith.constant 0 : i32
    %c0_i32_1 = arith.constant 0 : i32
    %c0_i32_2 = arith.constant 0 : i32
    %c0_i32_3 = arith.constant 0 : i32
    return %c0_i32, %c0_i32_0, %c0_i32_1, %c0_i32_2 : i32, i32, i32, i32
  }
  func.func @transform_1(%arg0: i32) -> (i32, i32) {
    %c0_i32 = arith.constant 0 : i32
    %c0_i32_0 = arith.constant 0 : i32
    %c0_i32_1 = arith.constant 0 : i32
    return %c0_i32, %c0_i32_0 : i32, i32
  }
  func.func @transform_2(%arg0: i32) -> (i32, i32) {
    %c0_i32 = arith.constant 0 : i32
    %c0_i32_0 = arith.constant 0 : i32
    %c0_i32_1 = arith.constant 0 : i32
    return %c0_i32, %c0_i32_0 : i32, i32
  }
  func.func @transform_3(%arg0: i32) -> (i32, i32) {
    %c0_i32 = arith.constant 0 : i32
    %c0_i32_0 = arith.constant 0 : i32
    %c0_i32_1 = arith.constant 0 : i32
    return %c0_i32, %c0_i32_0 : i32, i32
  }
  func.func @transform_4(%arg0: i32) -> (i32, i32) {
    %c0_i32 = arith.constant 0 : i32
    %c0_i32_0 = arith.constant 0 : i32
    %c0_i32_1 = arith.constant 0 : i32
    return %c0_i32, %c0_i32_0 : i32, i32
  }
}

</mosaic_0001>

<llo_original>
// kernel: resnet_tail_forward.5
$region0: #{resnet_tail_forward.5}
  #allocation0 [shape = 'u32[]', space=smem, size = 0x4, offset = 0x4, fixed_abs, tag = 'smem constant byte address 0x4 - core index']
  #allocation1 [shape = 'u32[144,128]{1,0:T(1,128)}', space=vmem, size = 0x12000, scoped, tag = 'internal scratch']
  #allocation2 [shape = 'f32[1,1]{1,0:T(1,128)S(1)}', space=vmem, size = 0x200, scoped, tag = 'scoped memory for resnet_tail_forward.5']
  %s0 = inlined_call_operand.vmem [shape: bf16[2,16,16,128], index: 0, kind: input, shape index: {}]
  %s1 = inlined_call_operand.vmem [shape: f32[1,128], index: 1, kind: input, shape index: {}]
  %s2 = inlined_call_operand.<no memory space> [shape: f32[1,1], index: 2, kind: input, shape index: {}]
  %s3 = inlined_call_operand.hbm [shape: f32[2,128], index: 3, kind: output, shape index: {0}]
  %s4 = inlined_call_operand.vmem [shape: f32[2,1], index: 4, kind: output, shape index: {1}]
  %5 = xla_tuple %s3, %s4
  %s6 = sld [smem:[#allocation0]]
  $region30: #{resnet_tail_forward.5} parent=0
    _
  %s8 = ssub.s32 1, %s6
  %s9 = scalar_select 0, %s8, %s6
  %v10 = vstv %s2
  %11 = vst [vmem:[#allocation2] sm:$0x1] %v10
  $region1: #{resnet_tail_forward.5} parent=0
    #allocation3 [shape = 'u8[1024]{0}', space=vmem, size = 0x400, scoped, tag = 'output window, operand 0, single buffered']
    #allocation4 [shape = 's32[1]{0}', space=sflag, size = 0x4, scoped, tag = 'scoped memory for resnet_tail_forward.5']
    %12 = vsyncpa [#allocation4], 0
    // Predicated region
    $region2: #{resnet_tail_forward.5} parent=1 // pred_check
      _
    $region3: #{resnet_tail_forward.5} parent=1 // pred_check_branch
      %14 = sbr.rel (0) target = $region5
    $region4: #{resnet_tail_forward.5} parent=1 // pred_region
      _
    $region5: #{resnet_tail_forward.5} parent=1 // pred_fallthru
      _
    // Predicated region
    $region6: #{resnet_tail_forward.5} parent=1 // pred_check
      _
    $region7: #{resnet_tail_forward.5} parent=1 // pred_check_branch
      %16 = sbr.rel (0) target = $region9
    $region8: #{resnet_tail_forward.5} parent=1 // pred_region
      _
    $region9: #{resnet_tail_forward.5} parent=1 // pred_fallthru
      _
    // Predicated region
    $region10: #{resnet_tail_forward.5} parent=1 // pred_check
      _
    $region11: #{resnet_tail_forward.5} parent=1 // pred_check_branch
      %18 = sbr.rel (0) target = $region13
    $region12: #{resnet_tail_forward.5} parent=1 // pred_region
      _
    $region13: #{resnet_tail_forward.5} parent=1 // pred_fallthru
      _
    %v19 = vld [vmem:[%s1] sm:$0x1]
    %v20 = vld [vmem:[#allocation2] sm:$0x1]
    %v21 = vld [vmem:[%s0] sm:$0xf]
    %v22 = vld [vmem:[%s0 + $0x4] sm:$0xf]
    %v23 = vld [vmem:[%s0 + $0x8] sm:$0xf]
    %v24 = vld [vmem:[%s0 + $0xc] sm:$0xf]
    %v25 = vld [vmem:[%s0 + $0x10] sm:$0xf]
    %v26 = vld [vmem:[%s0 + $0x14] sm:$0xf]
    %v27 = vld [vmem:[%s0 + $0x18] sm:$0xf]
    %v28 = vld [vmem:[%s0 + $0x1c] sm:$0xf]
    %v29 = vld [vmem:[%s0 + $0x20] sm:$0xf]
    %v30 = vld [vmem:[%s0 + $0x24] sm:$0xf]
    %v31 = vld [vmem:[%s0 + $0x28] sm:$0xf]
    %v32 = vld [vmem:[%s0 + $0x2c] sm:$0xf]
    %v33 = vld [vmem:[%s0 + $0x30] sm:$0xf]
    %v34 = vld [vmem:[%s0 + $0x34] sm:$0xf]
    %v35 = vld [vmem:[%s0 + $0x38] sm:$0xf]
    %v36 = vld [vmem:[%s0 + $0x3c] sm:$0xf]
    %v37 = vld [vmem:[%s0 + $0x40] sm:$0xf]
    %v38 = vld [vmem:[%s0 + $0x44] sm:$0xf]
    %v39 = vld [vmem:[%s0 + $0x48] sm:$0xf]
    %v40 = vld [vmem:[%s0 + $0x4c] sm:$0xf]
    %v41 = vld [vmem:[%s0 + $0x50] sm:$0xf]
    %v42 = vld [vmem:[%s0 + $0x54] sm:$0xf]
    %v43 = vld [vmem:[%s0 + $0x58] sm:$0xf]
    %v44 = vld [vmem:[%s0 + $0x5c] sm:$0xf]
    %v45 = vld [vmem:[%s0 + $0x60] sm:$0xf]
    %v46 = vld [vmem:[%s0 + $0x64] sm:$0xf]
    %v47 = vld [vmem:[%s0 + $0x68] sm:$0xf]
    %v48 = vld [vmem:[%s0 + $0x6c] sm:$0xf]
    %v49 = vld [vmem:[%s0 + $0x70] sm:$0xf]
    %v50 = vld [vmem:[%s0 + $0x74] sm:$0xf]
    %v51 = vld [vmem:[%s0 + $0x78] sm:$0xf]
    %v52 = vld [vmem:[%s0 + $0x7c] sm:$0xf]
    %v53 = vunpack.c.l.bf16 %v21
    %v54 = vunpack.c.l.bf16 %v22
    %v55 = vunpack.c.l.bf16 %v23
    %v56 = vunpack.c.l.bf16 %v24
    %v57 = vunpack.c.l.bf16 %v25
    %v58 = vunpack.c.l.bf16 %v26
    %v59 = vunpack.c.l.bf16 %v27
    %v60 = vunpack.c.l.bf16 %v28
    %v61 = vunpack.c.l.bf16 %v29
    %v62 = vunpack.c.l.bf16 %v30
    %v63 = vunpack.c.l.bf16 %v31
    %v64 = vunpack.c.l.bf16 %v32
    %v65 = vunpack.c.l.bf16 %v33
    %v66 = vunpack.c.l.bf16 %v34
    %v67 = vunpack.c.l.bf16 %v35
    %v68 = vunpack.c.l.bf16 %v36
    %v69 = vunpack.c.l.bf16 %v37
    %v70 = vunpack.c.l.bf16 %v38
    %v71 = vunpack.c.l.bf16 %v39
    %v72 = vunpack.c.l.bf16 %v40
    %v73 = vunpack.c.l.bf16 %v41
    %v74 = vunpack.c.l.bf16 %v42
    %v75 = vunpack.c.l.bf16 %v43
    %v76 = vunpack.c.l.bf16 %v44
    %v77 = vunpack.c.l.bf16 %v45
    %v78 = vunpack.c.l.bf16 %v46
    %v79 = vunpack.c.l.bf16 %v47
    %v80 = vunpack.c.l.bf16 %v48
    %v81 = vunpack.c.l.bf16 %v49
    %v82 = vunpack.c.l.bf16 %v50
    %v83 = vunpack.c.l.bf16 %v51
    %v84 = vunpack.c.l.bf16 %v52
    %v85 = vadd.f32 %v53, %v54
    %v86 = vadd.f32 %v85, %v55
    %v87 = vadd.f32 %v86, %v56
    %v88 = vadd.f32 %v87, %v57
    %v89 = vadd.f32 %v88, %v58
    %v90 = vadd.f32 %v89, %v59
    %v91 = vadd.f32 %v90, %v60
    %v92 = vadd.f32 %v91, %v61
    %v93 = vadd.f32 %v92, %v62
    %v94 = vadd.f32 %v93, %v63
    %v95 = vadd.f32 %v94, %v64
    %v96 = vadd.f32 %v95, %v65
    %v97 = vadd.f32 %v96, %v66
    %v98 = vadd.f32 %v97, %v67
    %v99 = vadd.f32 %v98, %v68
    %v100 = vadd.f32 %v99, %v69
    %v101 = vadd.f32 %v100, %v70
    %v102 = vadd.f32 %v101, %v71
    %v103 = vadd.f32 %v102, %v72
    %v104 = vadd.f32 %v103, %v73
    %v105 = vadd.f32 %v104, %v74
    %v106 = vadd.f32 %v105, %v75
    %v107 = vadd.f32 %v106, %v76
    %v108 = vadd.f32 %v107, %v77
    %v109 = vadd.f32 %v108, %v78
    %v110 = vadd.f32 %v109, %v79
    %v111 = vadd.f32 %v110, %v80
    %v112 = vadd.f32 %v111, %v81
    %v113 = vadd.f32 %v112, %v82
    %v114 = vadd.f32 %v113, %v83
    %v115 = vadd.f32 %v114, %v84
    %v116 = vrot.slane %v115, 4
    %v117 = vadd.f32 %v115, %v116
    %v118 = vrot.slane %v117, 2
    %v119 = vadd.f32 %v117, %v118
    %v120 = vrot.slane %v119, 1
    %v121 = vadd.f32 %v119, %v120
    %v122 = vmul.f32 %v121, 0.00390625
    %123 = vst [vmem:[#allocation3] sm:$0x1] %v122
    %v124 = vmul.f32 %v122, %v19
    %vm125 = vcmask 1040384
    %v126 = vsel %vm125, %v124, 0.0
    %127 = vadd.xlane.f32.xlu0 %v126
    %v128 = vpop.xlane.xlu0 %127
    %v129 = vadd.f32 %v128, %v20
    %vm130 = vcmask 0
    %131 = vst.msk [vmem:[%s4] sm:$0x1] %vm130, %v129
    %s132 = scalar_lea.vmem %s0, 128
    %v133 = vld [vmem:[%s132] sm:$0xf]
    %v134 = vld [vmem:[%s132 + $0x4] sm:$0xf]
    %v135 = vld [vmem:[%s132 + $0x8] sm:$0xf]
    %v136 = vld [vmem:[%s132 + $0xc] sm:$0xf]
    %v137 = vld [vmem:[%s132 + $0x10] sm:$0xf]
    %v138 = vld [vmem:[%s132 + $0x14] sm:$0xf]
    %v139 = vld [vmem:[%s132 + $0x18] sm:$0xf]
    %v140 = vld [vmem:[%s132 + $0x1c] sm:$0xf]
    %v141 = vld [vmem:[%s132 + $0x20] sm:$0xf]
    %v142 = vld [vmem:[%s132 + $0x24] sm:$0xf]
    %v143 = vld [vmem:[%s132 + $0x28] sm:$0xf]
    %v144 = vld [vmem:[%s132 + $0x2c] sm:$0xf]
    %v145 = vld [vmem:[%s132 + $0x30] sm:$0xf]
    %v146 = vld [vmem:[%s132 + $0x34] sm:$0xf]
    %v147 = vld [vmem:[%s132 + $0x38] sm:$0xf]
    %v148 = vld [vmem:[%s132 + $0x3c] sm:$0xf]
    %v149 = vld [vmem:[%s132 + $0x40] sm:$0xf]
    %v150 = vld [vmem:[%s132 + $0x44] sm:$0xf]
    %v151 = vld [vmem:[%s132 + $0x48] sm:$0xf]
    %v152 = vld [vmem:[%s132 + $0x4c] sm:$0xf]
    %v153 = vld [vmem:[%s132 + $0x50] sm:$0xf]
    %v154 = vld [vmem:[%s132 + $0x54] sm:$0xf]
    %v155 = vld [vmem:[%s132 + $0x58] sm:$0xf]
    %v156 = vld [vmem:[%s132 + $0x5c] sm:$0xf]
    %v157 = vld [vmem:[%s132 + $0x60] sm:$0xf]
    %v158 = vld [vmem:[%s132 + $0x64] sm:$0xf]
    %v159 = vld [vmem:[%s132 + $0x68] sm:$0xf]
    %v160 = vld [vmem:[%s132 + $0x6c] sm:$0xf]
    %v161 = vld [vmem:[%s132 + $0x70] sm:$0xf]
    %v162 = vld [vmem:[%s132 + $0x74] sm:$0xf]
    %v163 = vld [vmem:[%s132 + $0x78] sm:$0xf]
    %v164 = vld [vmem:[%s132 + $0x7c] sm:$0xf]
    %v165 = vunpack.c.l.bf16 %v133
    %v166 = vunpack.c.l.bf16 %v134
    %v167 = vunpack.c.l.bf16 %v135
    %v168 = vunpack.c.l.bf16 %v136
    %v169 = vunpack.c.l.bf16 %v137
    %v170 = vunpack.c.l.bf16 %v138
    %v171 = vunpack.c.l.bf16 %v139
    %v172 = vunpack.c.l.bf16 %v140
    %v173 = vunpack.c.l.bf16 %v141
    %v174 = vunpack.c.l.bf16 %v142
    %v175 = vunpack.c.l.bf16 %v143
    %v176 = vunpack.c.l.bf16 %v144
    %v177 = vunpack.c.l.bf16 %v145
    %v178 = vunpack.c.l.bf16 %v146
    %v179 = vunpack.c.l.bf16 %v147
    %v180 = vunpack.c.l.bf16 %v148
    %v181 = vunpack.c.l.bf16 %v149
    %v182 = vunpack.c.l.bf16 %v150
    %v183 = vunpack.c.l.bf16 %v151
    %v184 = vunpack.c.l.bf16 %v152
    %v185 = vunpack.c.l.bf16 %v153
    %v186 = vunpack.c.l.bf16 %v154
    %v187 = vunpack.c.l.bf16 %v155
    %v188 = vunpack.c.l.bf16 %v156
    %v189 = vunpack.c.l.bf16 %v157
    %v190 = vunpack.c.l.bf16 %v158
    %v191 = vunpack.c.l.bf16 %v159
    %v192 = vunpack.c.l.bf16 %v160
    %v193 = vunpack.c.l.bf16 %v161
    %v194 = vunpack.c.l.bf16 %v162
    %v195 = vunpack.c.l.bf16 %v163
    %v196 = vunpack.c.l.bf16 %v164
    %v197 = vadd.f32 %v165, %v166
    %v198 = vadd.f32 %v197, %v167
    %v199 = vadd.f32 %v198, %v168
    %v200 = vadd.f32 %v199, %v169
    %v201 = vadd.f32 %v200, %v170
    %v202 = vadd.f32 %v201, %v171
    %v203 = vadd.f32 %v202, %v172
    %v204 = vadd.f32 %v203, %v173
    %v205 = vadd.f32 %v204, %v174
    %v206 = vadd.f32 %v205, %v175
    %v207 = vadd.f32 %v206, %v176
    %v208 = vadd.f32 %v207, %v177
    %v209 = vadd.f32 %v208, %v178
    %v210 = vadd.f32 %v209, %v179
    %v211 = vadd.f32 %v210, %v180
    %v212 = vadd.f32 %v211, %v181
    %v213 = vadd.f32 %v212, %v182
    %v214 = vadd.f32 %v213, %v183
    %v215 = vadd.f32 %v214, %v184
    %v216 = vadd.f32 %v215, %v185
    %v217 = vadd.f32 %v216, %v186
    %v218 = vadd.f32 %v217, %v187
    %v219 = vadd.f32 %v218, %v188
    %v220 = vadd.f32 %v219, %v189
    %v221 = vadd.f32 %v220, %v190
    %v222 = vadd.f32 %v221, %v191
    %v223 = vadd.f32 %v222, %v192
    %v224 = vadd.f32 %v223, %v193
    %v225 = vadd.f32 %v224, %v194
    %v226 = vadd.f32 %v225, %v195
    %v227 = vadd.f32 %v226, %v196
    %v228 = vrot.slane %v227, 4
    %v229 = vadd.f32 %v227, %v228
    %v230 = vrot.slane %v229, 2
    %v231 = vadd.f32 %v229, %v230
    %v232 = vrot.slane %v231, 1
    %v233 = vadd.f32 %v231, %v232
    %v234 = vmul.f32 %v233, 0.00390625
    %235 = vst [vmem:[#allocation3 + $0x1] sm:$0x1] %v234
    %v236 = vmul.f32 %v234, %v19
    %v237 = vsel %vm125, %v236, 0.0
    %238 = vadd.xlane.f32.xlu0 %v237
    %v239 = vpop.xlane.xlu0 %238
    %v240 = vadd.f32 %v239, %v20
    %241 = vst.msk [vmem:[%s4 + $0x1] sm:$0x1] %vm130, %v240
    // Predicated region
    $region14: #{resnet_tail_forward.5} parent=1 // pred_check
      _
    $region15: #{resnet_tail_forward.5} parent=1 // pred_check_branch
      %243 = sbr.rel (0) target = $region17
    $region16: #{resnet_tail_forward.5} parent=1 // pred_region
      %s245 = ssub.s32 32, 32
      %246 = vsyncadd [#allocation4], %s245
      %s248 = sshll.u32 [#allocation3], 4
      %s249 = int_to_ptr.vmem [resolvable:$true] %s248
      %251 = dma.vmem_to_hbm [thread:$0]  %s249, 32, %s3, [#allocation4]
    $region17: #{resnet_tail_forward.5} parent=1 // pred_fallthru
      _
    // Predicated region
    $region18: #{resnet_tail_forward.5} parent=1 // pred_check
      _
    $region19: #{resnet_tail_forward.5} parent=1 // pred_check_branch
      %253 = sbr.rel (0) target = $region21
    $region20: #{resnet_tail_forward.5} parent=1 // pred_region
      _
    $region21: #{resnet_tail_forward.5} parent=1 // pred_fallthru
      _
    // Predicated region
    $region22: #{resnet_tail_forward.5} parent=1 // pred_check
      _
    $region23: #{resnet_tail_forward.5} parent=1 // pred_check_branch
      %255 = sbr.rel (0) target = $region25
    $region24: #{resnet_tail_forward.5} parent=1 // pred_region
      %256 = dma.done [#allocation4], 32
    $region25: #{resnet_tail_forward.5} parent=1 // pred_fallthru
      _
    // Predicated region
    $region26: #{resnet_tail_forward.5} parent=1 // pred_check
      _
    $region27: #{resnet_tail_forward.5} parent=1 // pred_check_branch
      %258 = sbr.rel (0) target = $region29
    $region28: #{resnet_tail_forward.5} parent=1 // pred_region
      _
    $region29: #{resnet_tail_forward.5} parent=1 // pred_fallthru
      _
    %259 = vsyncpa [#allocation4], 1

// kernel: resnet_tail_forward.3
$region0: #{resnet_tail_forward.3}
  #allocation0 [shape = 'u32[]', space=smem, size = 0x4, offset = 0x4, fixed_abs, tag = 'smem constant byte address 0x4 - core index']
  #allocation1 [shape = 'u32[144,128]{1,0:T(1,128)}', space=vmem, size = 0x12000, scoped, tag = 'internal scratch']
  #allocation2 [shape = 'bf16[288,32]{1,0:T(16,128)(2,1)}', space=vmem, size = 0x12000, scoped, tag = 'scratch operand']
  #allocation3 [shape = 'bf16[256,96]{1,0:T(16,128)(2,1)}', space=vmem, size = 0x10000, scoped, tag = 'scratch operand']
  %s0 = inlined_call_operand.vmem [shape: bf16[2,16,16,128], index: 0, kind: input, shape index: {}]
  %s1 = inlined_call_operand.vmem [shape: bf16[128,32], index: 1, kind: input, shape index: {}]
  %s2 = inlined_call_operand.vmem [shape: f32[1,32], index: 2, kind: input, shape index: {}]
  %s3 = inlined_call_operand.vmem [shape: bf16[3,96,32], index: 3, kind: input, shape index: {}]
  %s4 = inlined_call_operand.vmem [shape: f32[1,32], index: 4, kind: input, shape index: {}]
  %s5 = inlined_call_operand.vmem [shape: bf16[32,128], index: 5, kind: input, shape index: {}]
  %s6 = inlined_call_operand.vmem [shape: f32[1,128], index: 6, kind: input, shape index: {}]
  %s7 = inlined_call_operand.vmem [shape: bf16[2,16,16,128], index: 7, kind: output, shape index: {}]
  %s8 = sld [smem:[#allocation0]]
  $region77: #{resnet_tail_forward.3} parent=0
    _
  %s10 = ssub.s32 1, %s8
  %s11 = scalar_select 0, %s10, %s8
  loop: start=0, step=1, limit=4
  $region2: #{resnet_tail_forward.3} parent=0 // loop_pre_header
    _
  $region3: #{resnet_tail_forward.3} parent=0 // loop_header
    %s13 = sphi 0, %s17
    %p14 = scmp.ge.s32.totalorder %s13, 4
    %s20 = sphi 0, %s32
    %s21 = sphi 0, %s28
    %s22 = sphi 0, %s20
    %s23 = sphi 0, %s21
    %s24 = sphi 0, %s22
    %s25 = sphi 0, %s23
    %s35 = sphi 0, %s37
    %s38 = sphi 0, %s35
    %s39 = sphi 0, %s38
    %s55 = sphi 0, %s39
    %s59 = sphi 0, %s59
    %s61 = sphi 0, %s59
    %s62 = sphi 0, %s61
    %s76 = sphi 0, %s62
    %s80 = sphi 0, %s80
    %s82 = sphi 0, %s80
    %s83 = sphi 0, %s82
    %s97 = sphi 0, %s83
    %s101 = sphi 0, %s101
    %s103 = sphi 0, %s101
    %s104 = sphi 0, %s103
    %s118 = sphi 0, %s104
    %s122 = sphi 0, %s122
    %s124 = sphi 0, %s122
    %s125 = sphi 0, %s124
    %s139 = sphi 0, %s125
    %s143 = sphi 0, %s143
    %s145 = sphi 0, %s143
    %s146 = sphi 0, %s145
    %s160 = sphi 0, %s146
    %s164 = sphi 0, %s164
    %s166 = sphi 0, %s164
    %s167 = sphi 0, %s166
    %s181 = sphi 0, %s167
    %s189 = sphi 0, %s191
    %s192 = sphi 0, %s189
    %s193 = sphi 0, %s192
    %s209 = sphi 0, %s193
  $region4: #{resnet_tail_forward.3} parent=0 // loop_header_branch
    %16 = sbr.rel (%p14) target = $region8
  $region5: #{resnet_tail_forward.3} parent=0 // loop_body
    %s18 = ssub.s32 %s13, 1
    %s19 = ssub.s32 %s13, 2
    %s26 = sadd.s32 1, %s21
    %p27 = scmp.ge.s32.totalorder %s26, 1
    %s28 = scalar_select %p27, 0, %s26
    %s29 = sadd.s32 1, %s20
    %s30 = scalar_select %p27, %s29, %s20
    %p31 = scmp.ge.s32.totalorder %s30, 2
    %s32 = scalar_select %p31, 0, %s30
    %s33 = ssub.s32 %s20, %s32
    %p34 = scmp.eq.s32.totalorder %s33, 0
    %s36 = sadd.s32 %s35, 1
    %s37 = scalar_select %p34, %s35, %s36
    %p40 = pneg %p34
    %p41 = scmp.eq.s32.totalorder %s13, 1
    %p42 = por %p40, %p41
    %p43 = scmp.ne.s32.totalorder %s35, %s38
    %p44 = scmp.eq.s32.totalorder %s13, 0
    %p45 = por %p43, %p44
    %p46 = scmp.ne.s32.totalorder %s35, %s38
    %p47 = scmp.eq.s32.totalorder %s18, 1
    %p48 = por %p46, %p47
    %p49 = scmp.ne.s32.totalorder %s38, %s39
    %p50 = scmp.eq.s32.totalorder %s18, 0
    %p51 = por %p49, %p50
    %p52 = scmp.ne.s32.totalorder %s38, %s39
    %p53 = scmp.eq.s32.totalorder %s19, 1
    %p54 = por %p52, %p53
    %p56 = scmp.ne.s32.totalorder %s39, %s55
    %p57 = scmp.eq.s32.totalorder %s19, 0
    %p58 = por %p56, %p57
    %s60 = sadd.s32 %s59, 1
    %p63 = scmp.eq.s32.totalorder %s13, 1
    %p64 = scmp.ne.s32.totalorder %s59, %s61
    %p65 = scmp.eq.s32.totalorder %s13, 0
    %p66 = por %p64, %p65
    %p67 = scmp.ne.s32.totalorder %s59, %s61
    %p68 = scmp.eq.s32.totalorder %s18, 1
    %p69 = por %p67, %p68
    %p70 = scmp.ne.s32.totalorder %s61, %s62
    %p71 = scmp.eq.s32.totalorder %s18, 0
    %p72 = por %p70, %p71
    %p73 = scmp.ne.s32.totalorder %s61, %s62
    %p74 = scmp.eq.s32.totalorder %s19, 1
    %p75 = por %p73, %p74
    %p77 = scmp.ne.s32.totalorder %s62, %s76
    %p78 = scmp.eq.s32.totalorder %s19, 0
    %p79 = por %p77, %p78
    %s81 = sadd.s32 %s80, 1
    %p84 = scmp.eq.s32.totalorder %s13, 1
    %p85 = scmp.ne.s32.totalorder %s80, %s82
    %p86 = scmp.eq.s32.totalorder %s13, 0
    %p87 = por %p85, %p86
    %p88 = scmp.ne.s32.totalorder %s80, %s82
    %p89 = scmp.eq.s32.totalorder %s18, 1
    %p90 = por %p88, %p89
    %p91 = scmp.ne.s32.totalorder %s82, %s83
    %p92 = scmp.eq.s32.totalorder %s18, 0
    %p93 = por %p91, %p92
    %p94 = scmp.ne.s32.totalorder %s82, %s83
    %p95 = scmp.eq.s32.totalorder %s19, 1
    %p96 = por %p94, %p95
    %p98 = scmp.ne.s32.totalorder %s83, %s97
    %p99 = scmp.eq.s32.totalorder %s19, 0
    %p100 = por %p98, %p99
    %s102 = sadd.s32 %s101, 1
    %p105 = scmp.eq.s32.totalorder %s13, 1
    %p106 = scmp.ne.s32.totalorder %s101, %s103
    %p107 = scmp.eq.s32.totalorder %s13, 0
    %p108 = por %p106, %p107
    %p109 = scmp.ne.s32.totalorder %s101, %s103
    %p110 = scmp.eq.s32.totalorder %s18, 1
    %p111 = por %p109, %p110
    %p112 = scmp.ne.s32.totalorder %s103, %s104
    %p113 = scmp.eq.s32.totalorder %s18, 0
    %p114 = por %p112, %p113
    %p115 = scmp.ne.s32.totalorder %s103, %s104
    %p116 = scmp.eq.s32.totalorder %s19, 1
    %p117 = por %p115, %p116
    %p119 = scmp.ne.s32.totalorder %s104, %s118
    %p120 = scmp.eq.s32.totalorder %s19, 0
    %p121 = por %p119, %p120
    %s123 = sadd.s32 %s122, 1
    %p126 = scmp.eq.s32.totalorder %s13, 1
    %p127 = scmp.ne.s32.totalorder %s122, %s124
    %p128 = scmp.eq.s32.totalorder %s13, 0
    %p129 = por %p127, %p128
    %p130 = scmp.ne.s32.totalorder %s122, %s124
    %p131 = scmp.eq.s32.totalorder %s18, 1
    %p132 = por %p130, %p131
    %p133 = scmp.ne.s32.totalorder %s124, %s125
    %p134 = scmp.eq.s32.totalorder %s18, 0
    %p135 = por %p133, %p134
    %p136 = scmp.ne.s32.totalorder %s124, %s125
    %p137 = scmp.eq.s32.totalorder %s19, 1
    %p138 = por %p136, %p137
    %p140 = scmp.ne.s32.totalorder %s125, %s139
    %p141 = scmp.eq.s32.totalorder %s19, 0
    %p142 = por %p140, %p141
    %s144 = sadd.s32 %s143, 1
    %p147 = scmp.eq.s32.totalorder %s13, 1
    %p148 = scmp.ne.s32.totalorder %s143, %s145
    %p149 = scmp.eq.s32.totalorder %s13, 0
    %p150 = por %p148, %p149
    %p151 = scmp.ne.s32.totalorder %s143, %s145
    %p152 = scmp.eq.s32.totalorder %s18, 1
    %p153 = por %p151, %p152
    %p154 = scmp.ne.s32.totalorder %s145, %s146
    %p155 = scmp.eq.s32.totalorder %s18, 0
    %p156 = por %p154, %p155
    %p157 = scmp.ne.s32.totalorder %s145, %s146
    %p158 = scmp.eq.s32.totalorder %s19, 1
    %p159 = por %p157, %p158
    %p161 = scmp.ne.s32.totalorder %s146, %s160
    %p162 = scmp.eq.s32.totalorder %s19, 0
    %p163 = por %p161, %p162
    %s165 = sadd.s32 %s164, 1
    %p168 = scmp.eq.s32.totalorder %s13, 1
    %p169 = scmp.ne.s32.totalorder %s164, %s166
    %p170 = scmp.eq.s32.totalorder %s13, 0
    %p171 = por %p169, %p170
    %p172 = scmp.ne.s32.totalorder %s164, %s166
    %p173 = scmp.eq.s32.totalorder %s18, 1
    %p174 = por %p172, %p173
    %p175 = scmp.ne.s32.totalorder %s166, %s167
    %p176 = scmp.eq.s32.totalorder %s18, 0
    %p177 = por %p175, %p176
    %p178 = scmp.ne.s32.totalorder %s166, %s167
    %p179 = scmp.eq.s32.totalorder %s19, 1
    %p180 = por %p178, %p179
    %p182 = scmp.ne.s32.totalorder %s167, %s181
    %p183 = scmp.eq.s32.totalorder %s19, 0
    %p184 = por %p182, %p183
    %s185 = ssub.s32 %s20, %s32
    %s186 = ssub.s32 %s21, %s28
    %s187 = sor.u32 %s185, %s186
    %p188 = scmp.eq.s32.totalorder %s187, 0
    %s190 = sadd.s32 %s189, 1
    %s191 = scalar_select %p188, %s189, %s190
    %p194 = pneg %p188
    %p195 = scmp.eq.s32.totalorder %s13, 1
    %p196 = por %p194, %p195
    %p197 = scmp.ne.s32.totalorder %s189, %s192
    %p198 = scmp.eq.s32.totalorder %s13, 0
    %p199 = por %p197, %p198
    %p200 = scmp.ne.s32.totalorder %s189, %s192
    %p201 = scmp.eq.s32.totalorder %s18, 1
    %p202 = por %p200, %p201
    %p203 = scmp.ne.s32.totalorder %s192, %s193
    %p204 = scmp.eq.s32.totalorder %s18, 0
    %p205 = por %p203, %p204
    %p206 = scmp.ne.s32.totalorder %s192, %s193
    %p207 = scmp.eq.s32.totalorder %s19, 1
    %p208 = por %p206, %p207
    %p210 = scmp.ne.s32.totalorder %s193, %s209
    %p211 = scmp.eq.s32.totalorder %s19, 0
    %p212 = por %p210, %p211
    %p213 = scmp.le.s32.totalorder 1, %s13
    %p214 = scmp.lt.s32.totalorder %s13, 3
    %p215 = pnand %p213, %p214
    %p216 = pneg %p215
    // Predicated region
    $region9: #{resnet_tail_forward.3} parent=5 // pred_check
      _
    $region10: #{resnet_tail_forward.3} parent=5 // pred_check_branch
      %218 = sbr.rel (%p215) target = $region12
    $region11: #{resnet_tail_forward.3} parent=5 // pred_region
      %s219 = ssub.s32 %s13, 1
      // Predicated region
      $region13: #{resnet_tail_forward.3} parent=11 // pred_check
        %p220 = pneg %p72
      $region14: #{resnet_tail_forward.3} parent=11 // pred_check_branch
        %222 = sbr.rel (%p220) target = $region16
      $region15: #{resnet_tail_forward.3} parent=11 // pred_region
        _
      $region16: #{resnet_tail_forward.3} parent=11 // pred_fallthru
        _
      // Predicated region
      $region17: #{resnet_tail_forward.3} parent=11 // pred_check
        %p223 = pneg %p93
      $region18: #{resnet_tail_forward.3} parent=11 // pred_check_branch
        %225 = sbr.rel (%p223) target = $region20
      $region19: #{resnet_tail_forward.3} parent=11 // pred_region
        _
      $region20: #{resnet_tail_forward.3} parent=11 // pred_fallthru
        _
      // Predicated region
      $region21: #{resnet_tail_forward.3} parent=11 // pred_check
        %p226 = pneg %p114
      $region22: #{resnet_tail_forward.3} parent=11 // pred_check_branch
        %228 = sbr.rel (%p226) target = $region24
      $region23: #{resnet_tail_forward.3} parent=11 // pred_region
        _
      $region24: #{resnet_tail_forward.3} parent=11 // pred_fallthru
        _
      // Predicated region
      $region25: #{resnet_tail_forward.3} parent=11 // pred_check
        %p229 = pneg %p135
      $region26: #{resnet_tail_forward.3} parent=11 // pred_check_branch
        %231 = sbr.rel (%p229) target = $region28
      $region27: #{resnet_tail_forward.3} parent=11 // pred_region
        _
      $region28: #{resnet_tail_forward.3} parent=11 // pred_fallthru
        _
      // Predicated region
      $region29: #{resnet_tail_forward.3} parent=11 // pred_check
        %p232 = pneg %p156
      $region30: #{resnet_tail_forward.3} parent=11 // pred_check_branch
        %234 = sbr.rel (%p232) target = $region32
      $region31: #{resnet_tail_forward.3} parent=11 // pred_region
        _
      $region32: #{resnet_tail_forward.3} parent=11 // pred_fallthru
        _
      // Predicated region
      $region33: #{resnet_tail_forward.3} parent=11 // pred_check
        %p235 = pneg %p177
      $region34: #{resnet_tail_forward.3} parent=11 // pred_check_branch
        %237 = sbr.rel (%p235) target = $region36
      $region35: #{resnet_tail_forward.3} parent=11 // pred_region
        _
      $region36: #{resnet_tail_forward.3} parent=11 // pred_fallthru
        _
    $region12: #{resnet_tail_forward.3} parent=5 // pred_fallthru
      _
    %p238 = scmp.lt.s32.totalorder %s13, 2
    // Predicated region
    $region37: #{resnet_tail_forward.3} parent=5 // pred_check
      %p239 = pneg %p238
    $region38: #{resnet_tail_forward.3} parent=5 // pred_check_branch
      %241 = sbr.rel (%p239) target = $region40
    $region39: #{resnet_tail_forward.3} parent=5 // pred_region
      // Predicated region
      $region41: #{resnet_tail_forward.3} parent=39 // pred_check
        %p242 = pneg %p45
      $region42: #{resnet_tail_forward.3} parent=39 // pred_check_branch
        %244 = sbr.rel (%p242) target = $region44
      $region43: #{resnet_tail_forward.3} parent=39 // pred_region
        %p245 = scmp.lt.s32.totalorder %s20, 1
        %s246 = scalar_select %p245, %s20, 1
        %s247 = smul.addr %s246, 32
        %s248 = smul.addr %s247, 4
        %s249 = scalar_lea.vmem %s0, %s248
      $region44: #{resnet_tail_forward.3} parent=39 // pred_fallthru
        _
    $region40: #{resnet_tail_forward.3} parent=5 // pred_fallthru
      _
    %p250 = scmp.le.s32.totalorder 1, %s13
    %p251 = scmp.lt.s32.totalorder %s13, 3
    %p252 = pnand %p250, %p251
    %p253 = pneg %p252
    // Predicated region
    $region45: #{resnet_tail_forward.3} parent=5 // pred_check
      _
    $region46: #{resnet_tail_forward.3} parent=5 // pred_check_branch
      %255 = sbr.rel (%p252) target = $region48
    $region47: #{resnet_tail_forward.3} parent=5 // pred_region
      %s256 = ssub.s32 %s13, 1
      %p257 = scmp.lt.s32.totalorder %s22, 1
      %s258 = scalar_select %p257, %s22, 1
      %s259 = smul.addr %s258, 32
      %s260 = smul.addr %s259, 4
      %s261 = scalar_lea.vmem %s0, %s260
      %p262 = pneg %p51
      %p263 = pneg %p48
      %p264 = pneg %p72
      %p265 = pneg %p69
      %p266 = pneg %p93
      %p267 = pneg %p90
      %p268 = pneg %p114
      %p269 = pneg %p111
      %p270 = pneg %p135
      %p271 = pneg %p132
      %p272 = pneg %p156
      %p273 = pneg %p153
      %p274 = pneg %p177
      %p275 = pneg %p174
      %p276 = pneg %p205
      %p277 = pneg %p202
      %s278 = smul.u32 16, %s23
      %p279 = scmp.lt.s32.totalorder %s22, 1
      %s280 = scalar_select %p279, %s22, 1
      %p281 = scmp.lt.s32.totalorder %s278, 15
      %s282 = scalar_select %p281, %s278, 15
      %s283 = smul.addr %s282, 2
      %s284 = smul.addr %s280, 32
      %s285 = sadd.s32 %s283, %s284
      %s286 = smul.addr %s285, 4
      %s287 = scalar_lea.vmem %s7, %s286
      %p288 = scmp.lt.s32.totalorder %s22, 1
      %s289 = scalar_select %p288, %s22, 1
      %s290 = smul.addr %s289, 32
      %s291 = smul.addr %s290, 4
      %s292 = scalar_lea.vmem %s0, %s291
      %s293 = smul.u32 16, %s23
      %p294 = scmp.lt.s32.totalorder %s22, 1
      %s295 = scalar_select %p294, %s22, 1
      %p296 = scmp.lt.s32.totalorder %s293, 15
      %s297 = scalar_select %p296, %s293, 15
      %s298 = smul.addr %s297, 2
      %s299 = smul.addr %s295, 32
      %s300 = sadd.s32 %s298, %s299
      %s301 = smul.addr %s300, 4
      %s302 = scalar_lea.vmem %s7, %s301
      %s303 = smul.u32 16, %s23
      %s305 = smul.u32 %s23, 16
      %v306 = vld [vmem:[%s1] sm:$0xf]
      %v307 = vld [vmem:[%s1 + $0x4] sm:$0xf]
      %v308 = vld [vmem:[%s1 + $0x8] sm:$0xf]
      %v309 = vld [vmem:[%s1 + $0xc] sm:$0xf]
      %v310 = vld [vmem:[%s1 + $0x10] sm:$0xf]
      %v311 = vld [vmem:[%s1 + $0x14] sm:$0xf]
      %v312 = vld [vmem:[%s1 + $0x18] sm:$0xf]
      %v313 = vld [vmem:[%s1 + $0x1c] sm:$0xf]
      %v314 = vld [vmem:[%s1 + $0x20] sm:$0xf]
      %v315 = vld [vmem:[%s1 + $0x24] sm:$0xf]
      %v316 = vld [vmem:[%s1 + $0x28] sm:$0xf]
      %v317 = vld [vmem:[%s1 + $0x2c] sm:$0xf]
      %v318 = vld [vmem:[%s1 + $0x30] sm:$0xf]
      %v319 = vld [vmem:[%s1 + $0x34] sm:$0xf]
      %v320 = vld [vmem:[%s1 + $0x38] sm:$0xf]
      %v321 = vld [vmem:[%s1 + $0x3c] sm:$0xf]
      %v322 = vld [vmem:[%s2] sm:$0x1]
      %s323 = smul.u32 %s305, 2
      %s324 = smul.addr %s323, 4
      %s325 = scalar_lea.vmem %s292, %s324
      %v326 = vld [vmem:[%s325] sm:$0xf]
      %v327 = vld [vmem:[%s325 + $0x4] sm:$0xf]
      %v328 = vld [vmem:[%s325 + $0x8] sm:$0xf]
      %v329 = vld [vmem:[%s325 + $0xc] sm:$0xf]
      %v330 = vld [vmem:[%s325 + $0x10] sm:$0xf]
      %v331 = vld [vmem:[%s325 + $0x14] sm:$0xf]
      %v332 = vld [vmem:[%s325 + $0x18] sm:$0xf]
      %v333 = vld [vmem:[%s325 + $0x1c] sm:$0xf]
      %v334 = vld [vmem:[%s325 + $0x20] sm:$0xf]
      %v335 = vld [vmem:[%s325 + $0x24] sm:$0xf]
      %v336 = vld [vmem:[%s325 + $0x28] sm:$0xf]
      %v337 = vld [vmem:[%s325 + $0x2c] sm:$0xf]
      %v338 = vld [vmem:[%s325 + $0x30] sm:$0xf]
      %v339 = vld [vmem:[%s325 + $0x34] sm:$0xf]
      %v340 = vld [vmem:[%s325 + $0x38] sm:$0xf]
      %v341 = vld [vmem:[%s325 + $0x3c] sm:$0xf]
      %v342 = vld [vmem:[%s325 + $0x40] sm:$0xf]
      %v343 = vld [vmem:[%s325 + $0x44] sm:$0xf]
      %v344 = vld [vmem:[%s325 + $0x48] sm:$0xf]
      %v345 = vld [vmem:[%s325 + $0x4c] sm:$0xf]
      %v346 = vld [vmem:[%s325 + $0x50] sm:$0xf]
      %v347 = vld [vmem:[%s325 + $0x54] sm:$0xf]
      %v348 = vld [vmem:[%s325 + $0x58] sm:$0xf]
      %v349 = vld [vmem:[%s325 + $0x5c] sm:$0xf]
      %v350 = vld [vmem:[%s325 + $0x60] sm:$0xf]
      %v351 = vld [vmem:[%s325 + $0x64] sm:$0xf]
      %v352 = vld [vmem:[%s325 + $0x68] sm:$0xf]
      %v353 = vld [vmem:[%s325 + $0x6c] sm:$0xf]
      %v354 = vld [vmem:[%s325 + $0x70] sm:$0xf]
      %v355 = vld [vmem:[%s325 + $0x74] sm:$0xf]
      %v356 = vld [vmem:[%s325 + $0x78] sm:$0xf]
      %v357 = vld [vmem:[%s325 + $0x7c] sm:$0xf]
      %v359 = vlaneseq
      %v360 = vshrl.u32 %v359, 7
      %v361 = vsub.s32 0, %v360
      %v362 = vrot.slane %v322, %v361
      %v396 = vunpack.c.l.b16 %v326
      %v397 = vunpack.c.l.b16 %v327
      %v398 = vunpack.c.l.b16 %v328
      %v399 = vunpack.c.l.b16 %v329
      %v400 = vunpack.c.l.b16 %v330
      %v401 = vunpack.c.l.b16 %v331
      %v402 = vunpack.c.l.b16 %v332
      %v403 = vunpack.c.l.b16 %v333
      %v404 = vunpack.c.l.b16 %v334
      %v405 = vunpack.c.l.b16 %v335
      %v406 = vunpack.c.l.b16 %v336
      %v407 = vunpack.c.l.b16 %v337
      %v408 = vunpack.c.l.b16 %v338
      %v409 = vunpack.c.l.b16 %v339
      %v410 = vunpack.c.l.b16 %v340
      %v411 = vunpack.c.l.b16 %v341
      %v412 = vunpack.c.l.b16 %v342
      %v413 = vunpack.c.l.b16 %v343
      %v414 = vunpack.c.l.b16 %v344
      %v415 = vunpack.c.l.b16 %v345
      %v416 = vunpack.c.l.b16 %v346
      %v417 = vunpack.c.l.b16 %v347
      %v418 = vunpack.c.l.b16 %v348
      %v419 = vunpack.c.l.b16 %v349
      %v420 = vunpack.c.l.b16 %v350
      %v421 = vunpack.c.l.b16 %v351
      %v422 = vunpack.c.l.b16 %v352
      %v423 = vunpack.c.l.b16 %v353
      %v424 = vunpack.c.l.b16 %v354
      %v425 = vunpack.c.l.b16 %v355
      %v426 = vunpack.c.l.b16 %v356
      %v427 = vunpack.c.l.b16 %v357
      %v428 = vpack.c.b16 %v397, %v396
      %v429 = vpack.c.b16 %v399, %v398
      %v430 = vpack.c.b16 %v401, %v400
      %v431 = vpack.c.b16 %v403, %v402
      %v432 = vpack.c.b16 %v405, %v404
      %v433 = vpack.c.b16 %v407, %v406
      %v434 = vpack.c.b16 %v409, %v408
      %v435 = vpack.c.b16 %v411, %v410
      %v436 = vpack.c.b16 %v413, %v412
      %v437 = vpack.c.b16 %v415, %v414
      %v438 = vpack.c.b16 %v417, %v416
      %v439 = vpack.c.b16 %v419, %v418
      %v440 = vpack.c.b16 %v421, %v420
      %v441 = vpack.c.b16 %v423, %v422
      %v442 = vpack.c.b16 %v425, %v424
      %v443 = vpack.c.b16 %v427, %v426
      %v476 = vunpack.c.l.b16 %v306
      %v477 = vunpack.c.l.b16 %v307
      %v478 = vunpack.c.l.b16 %v308
      %v479 = vunpack.c.l.b16 %v309
      %v480 = vunpack.c.l.b16 %v310
      %v481 = vunpack.c.l.b16 %v311
      %v482 = vunpack.c.l.b16 %v312
      %v483 = vunpack.c.l.b16 %v313
      %v484 = vunpack.c.l.b16 %v314
      %v485 = vunpack.c.l.b16 %v315
      %v486 = vunpack.c.l.b16 %v316
      %v487 = vunpack.c.l.b16 %v317
      %v488 = vunpack.c.l.b16 %v318
      %v489 = vunpack.c.l.b16 %v319
      %v490 = vunpack.c.l.b16 %v320
      %v491 = vunpack.c.l.b16 %v321
      %v492 = vpack.c.b16 %v477, %v476
      %v493 = vpack.c.b16 %v479, %v478
      %v494 = vpack.c.b16 %v481, %v480
      %v495 = vpack.c.b16 %v483, %v482
      %v496 = vpack.c.b16 %v485, %v484
      %v497 = vpack.c.b16 %v487, %v486
      %v498 = vpack.c.b16 %v489, %v488
      %v499 = vpack.c.b16 %v491, %v490
      %508 = vmatprep.subr.bf16.mxu0 0
      %509 = vmatpush1.bf16.msra.mxu0 %v492
      %510 = vmatprep.subr.bf16.mxu0 0
      %511 = vmatpush1.bf16.msra.mxu0 %v493
      %512 = vmatprep.subr.bf16.mxu0 0
      %513 = vmatpush1.bf16.msra.mxu0 %v494
      %514 = vmatprep.subr.bf16.mxu0 0
      %515 = vmatpush1.bf16.msra.mxu0 %v495
      %516 = vmatprep.subr.bf16.mxu0 0
      %517 = vmatpush1.bf16.msra.mxu0 %v496
      %518 = vmatprep.subr.bf16.mxu0 0
      %519 = vmatpush1.bf16.msra.mxu0 %v497
      %520 = vmatprep.subr.bf16.mxu0 0
      %521 = vmatpush1.bf16.msra.mxu0 %v498
      %522 = vmatprep.subr.bf16.mxu0 0
      %523 = vmatpush1.bf16.msra.mxu0 %v499
      %524 = vmatprep.subr.bf16.mxu0 0
      %525 = vmatpush1.bf16.msra.mxu0 0
      %526 = vmatprep.subr.bf16.mxu0 0
      %527 = vmatpush1.bf16.msra.mxu0 0
      %528 = vmatprep.subr.bf16.mxu0 0
      %529 = vmatpush1.bf16.msra.mxu0 0
      %530 = vmatprep.subr.bf16.mxu0 0
      %531 = vmatpush1.bf16.msra.mxu0 0
      %532 = vmatprep.subr.bf16.mxu0 0
      %533 = vmatpush1.bf16.msra.mxu0 0
      %534 = vmatprep.subr.bf16.mxu0 0
      %535 = vmatpush1.bf16.msra.mxu0 0
      %536 = vmatprep.subr.bf16.mxu0 0
      %537 = vmatpush1.bf16.msra.mxu0 0
      %538 = vmatprep.subr.bf16.mxu0 0
      %539 = vmatpush1.bf16.msra.mxu0 0
      %540 = vmatprep.mubr.bf16.mxu0 0
      %541 = vmatmul.mubr.bf16.gmra.mrb[0].mxu0 %v428
      %v542 = vpop.f32.mrb[0].mxu0
      %v543 = vadd.f32 %v362, %v542
      %v544 = vpop.f32.mrb[0].mxu0
      %v545 = vpop.f32.mrb[0].mxu0
      %v546 = vadd.f32 %v362, %v545
      %v547 = vpop.f32.mrb[0].mxu0
      %548 = vmatprep.mubr.bf16.mxu0 0
      %549 = vmatmul.mubr.bf16.gmra.mrb[0].mxu0 %v429
      %v550 = vpop.f32.mrb[0].mxu0
      %v551 = vadd.f32 %v362, %v550
      %v552 = vpop.f32.mrb[0].mxu0
      %v553 = vpop.f32.mrb[0].mxu0
      %v554 = vadd.f32 %v362, %v553
      %v555 = vpop.f32.mrb[0].mxu0
      %556 = vmatprep.mubr.bf16.mxu0 0
      %557 = vmatmul.mubr.bf16.gmra.mrb[0].mxu0 %v430
      %v558 = vpop.f32.mrb[0].mxu0
      %v559 = vadd.f32 %v362, %v558
      %v560 = vpop.f32.mrb[0].mxu0
      %v561 = vpop.f32.mrb[0].mxu0
      %v562 = vadd.f32 %v362, %v561
      %v563 = vpop.f32.mrb[0].mxu0
      %564 = vmatprep.mubr.bf16.mxu0 0
      %565 = vmatmul.mubr.bf16.gmra.mrb[0].mxu0 %v431
      %v566 = vpop.f32.mrb[0].mxu0
      %v567 = vadd.f32 %v362, %v566
      %v568 = vpop.f32.mrb[0].mxu0
      %v569 = vpop.f32.mrb[0].mxu0
      %v570 = vadd.f32 %v362, %v569
      %v571 = vpop.f32.mrb[0].mxu0
      %572 = vmatprep.mubr.bf16.mxu0 0
      %573 = vmatmul.mubr.bf16.gmra.mrb[0].mxu0 %v432
      %v574 = vpop.f32.mrb[0].mxu0
      %v575 = vadd.f32 %v362, %v574
      %v576 = vpop.f32.mrb[0].mxu0
      %v577 = vpop.f32.mrb[0].mxu0
      %v578 = vadd.f32 %v362, %v577
      %v579 = vpop.f32.mrb[0].mxu0
      %580 = vmatprep.mubr.bf16.mxu0 0
      %581 = vmatmul.mubr.bf16.gmra.mrb[0].mxu0 %v433
      %v582 = vpop.f32.mrb[0].mxu0
      %v583 = vadd.f32 %v362, %v582
      %v584 = vpop.f32.mrb[0].mxu0
      %v585 = vpop.f32.mrb[0].mxu0
      %v586 = vadd.f32 %v362, %v585
      %v587 = vpop.f32.mrb[0].mxu0
      %588 = vmatprep.mubr.bf16.mxu0 0
      %589 = vmatmul.mubr.bf16.gmra.mrb[0].mxu0 %v434
      %v590 = vpop.f32.mrb[0].mxu0
      %v591 = vadd.f32 %v362, %v590
      %v592 = vpop.f32.mrb[0].mxu0
      %v593 = vpop.f32.mrb[0].mxu0
      %v594 = vadd.f32 %v362, %v593
      %v595 = vpop.f32.mrb[0].mxu0
      %596 = vmatprep.mubr.bf16.mxu0 0
      %597 = vmatmul.mubr.bf16.gmra.mrb[0].mxu0 %v435
      %v598 = vpop.f32.mrb[0].mxu0
      %v599 = vadd.f32 %v362, %v598
      %v600 = vpop.f32.mrb[0].mxu0
      %v601 = vpop.f32.mrb[0].mxu0
      %v602 = vadd.f32 %v362, %v601
      %v603 = vpop.f32.mrb[0].mxu0
      %604 = vmatprep.mubr.bf16.mxu0 0
      %605 = vmatmul.mubr.bf16.gmra.mrb[0].mxu0 %v436
      %v606 = vpop.f32.mrb[0].mxu0
      %v607 = vadd.f32 %v362, %v606
      %v608 = vpop.f32.mrb[0].mxu0
      %v609 = vpop.f32.mrb[0].mxu0
      %v610 = vadd.f32 %v362, %v609
      %v611 = vpop.f32.mrb[0].mxu0
      %612 = vmatprep.mubr.bf16.mxu0 0
      %613 = vmatmul.mubr.bf16.gmra.mrb[0].mxu0 %v437
      %v614 = vpop.f32.mrb[0].mxu0
      %v615 = vadd.f32 %v362, %v614
      %v616 = vpop.f32.mrb[0].mxu0
      %v617 = vpop.f32.mrb[0].mxu0
      %v618 = vadd.f32 %v362, %v617
      %v619 = vpop.f32.mrb[0].mxu0
      %620 = vmatprep.mubr.bf16.mxu0 0
      %621 = vmatmul.mubr.bf16.gmra.mrb[0].mxu0 %v438
      %v622 = vpop.f32.mrb[0].mxu0
      %v623 = vadd.f32 %v362, %v622
      %v624 = vpop.f32.mrb[0].mxu0
      %v625 = vpop.f32.mrb[0].mxu0
      %v626 = vadd.f32 %v362, %v625
      %v627 = vpop.f32.mrb[0].mxu0
      %628 = vmatprep.mubr.bf16.mxu0 0
      %629 = vmatmul.mubr.bf16.gmra.mrb[0].mxu0 %v439
      %v630 = vpop.f32.mrb[0].mxu0
      %v631 = vadd.f32 %v362, %v630
      %v632 = vpop.f32.mrb[0].mxu0
      %v633 = vpop.f32.mrb[0].mxu0
      %v634 = vadd.f32 %v362, %v633
      %v635 = vpop.f32.mrb[0].mxu0
      %636 = vmatprep.mubr.bf16.mxu0 0
      %637 = vmatmul.mubr.bf16.gmra.mrb[0].mxu0 %v440
      %v638 = vpop.f32.mrb[0].mxu0
      %v639 = vadd.f32 %v362, %v638
      %v640 = vpop.f32.mrb[0].mxu0
      %v641 = vpop.f32.mrb[0].mxu0
      %v642 = vadd.f32 %v362, %v641
      %v643 = vpop.f32.mrb[0].mxu0
      %644 = vmatprep.mubr.bf16.mxu0 0
      %645 = vmatmul.mubr.bf16.gmra.mrb[0].mxu0 %v441
      %v646 = vpop.f32.mrb[0].mxu0
      %v647 = vadd.f32 %v362, %v646
      %v648 = vpop.f32.mrb[0].mxu0
      %v649 = vpop.f32.mrb[0].mxu0
      %v650 = vadd.f32 %v362, %v649
      %v651 = vpop.f32.mrb[0].mxu0
      %652 = vmatprep.mubr.bf16.mxu0 0
      %653 = vmatmul.mubr.bf16.gmra.mrb[0].mxu0 %v442
      %v654 = vpop.f32.mrb[0].mxu0
      %v655 = vadd.f32 %v362, %v654
      %v656 = vpop.f32.mrb[0].mxu0
      %v657 = vpop.f32.mrb[0].mxu0
      %v658 = vadd.f32 %v362, %v657
      %v659 = vpop.f32.mrb[0].mxu0
      %660 = vmatprep.mubr.bf16.mxu0 0
      %661 = vmatmul.mubr.bf16.gmra.mrb[0].mxu0 %v443
      %v662 = vpop.f32.mrb[0].mxu0
      %v663 = vadd.f32 %v362, %v662
      %v664 = vpop.f32.mrb[0].mxu0
      %v665 = vpop.f32.mrb[0].mxu0
      %v666 = vadd.f32 %v362, %v665
      %v667 = vpop.f32.mrb[0].mxu0
      %668 = vdwg.mxu0
      %v669 = vmax.f32 %v543, 0.0
      %v670 = vmax.f32 %v546, 0.0
      %v671 = vmax.f32 %v551, 0.0
      %v672 = vmax.f32 %v554, 0.0
      %v673 = vmax.f32 %v559, 0.0
      %v674 = vmax.f32 %v562, 0.0
      %v675 = vmax.f32 %v567, 0.0
      %v676 = vmax.f32 %v570, 0.0
      %v677 = vmax.f32 %v575, 0.0
      %v678 = vmax.f32 %v578, 0.0
      %v679 = vmax.f32 %v583, 0.0
      %v680 = vmax.f32 %v586, 0.0
      %v681 = vmax.f32 %v591, 0.0
      %v682 = vmax.f32 %v594, 0.0
      %v683 = vmax.f32 %v599, 0.0
      %v684 = vmax.f32 %v602, 0.0
      %v685 = vmax.f32 %v607, 0.0
      %v686 = vmax.f32 %v610, 0.0
      %v687 = vmax.f32 %v615, 0.0
      %v688 = vmax.f32 %v618, 0.0
      %v689 = vmax.f32 %v623, 0.0
      %v690 = vmax.f32 %v626, 0.0
      %v691 = vmax.f32 %v631, 0.0
      %v692 = vmax.f32 %v634, 0.0
      %v693 = vmax.f32 %v639, 0.0
      %v694 = vmax.f32 %v642, 0.0
      %v695 = vmax.f32 %v647, 0.0
      %v696 = vmax.f32 %v650, 0.0
      %v697 = vmax.f32 %v655, 0.0
      %v698 = vmax.f32 %v658, 0.0
      %v699 = vmax.f32 %v663, 0.0
      %v700 = vmax.f32 %v666, 0.0
      %v701 = vpack.c.bf16 %v670, %v669
      %v702 = vpack.c.bf16 %v672, %v671
      %v703 = vpack.c.bf16 %v674, %v673
      %v704 = vpack.c.bf16 %v676, %v675
      %v705 = vpack.c.bf16 %v678, %v677
      %v706 = vpack.c.bf16 %v680, %v679
      %v707 = vpack.c.bf16 %v682, %v681
      %v708 = vpack.c.bf16 %v684, %v683
      %v709 = vpack.c.bf16 %v686, %v685
      %v710 = vpack.c.bf16 %v688, %v687
      %v711 = vpack.c.bf16 %v690, %v689
      %v712 = vpack.c.bf16 %v692, %v691
      %v713 = vpack.c.bf16 %v694, %v693
      %v714 = vpack.c.bf16 %v696, %v695
      %v715 = vpack.c.bf16 %v698, %v697
      %v716 = vpack.c.bf16 %v700, %v699
      %vm717 = vcmask 261120
      %718 = vst.msk [vmem:[#allocation2 + $0x8] sm:$0xff] %vm717, %v701
      %719 = vst.msk [vmem:[#allocation2 + $0x10] sm:$0xff] %vm717, %v702
      %720 = vst.msk [vmem:[#allocation2 + $0x18] sm:$0xff] %vm717, %v703
      %721 = vst.msk [vmem:[#allocation2 + $0x20] sm:$0xff] %vm717, %v704
      %722 = vst.msk [vmem:[#allocation2 + $0x28] sm:$0xff] %vm717, %v705
      %723 = vst.msk [vmem:[#allocation2 + $0x30] sm:$0xff] %vm717, %v706
      %724 = vst.msk [vmem:[#allocation2 + $0x38] sm:$0xff] %vm717, %v707
      %725 = vst.msk [vmem:[#allocation2 + $0x40] sm:$0xff] %vm717, %v708
      %726 = vst.msk [vmem:[#allocation2 + $0x48] sm:$0xff] %vm717, %v709
      %727 = vst.msk [vmem:[#allocation2 + $0x50] sm:$0xff] %vm717, %v710
      %728 = vst.msk [vmem:[#allocation2 + $0x58] sm:$0xff] %vm717, %v711
      %729 = vst.msk [vmem:[#allocation2 + $0x60] sm:$0xff] %vm717, %v712
      %730 = vst.msk [vmem:[#allocation2 + $0x68] sm:$0xff] %vm717, %v713
      %731 = vst.msk [vmem:[#allocation2 + $0x70] sm:$0xff] %vm717, %v714
      %732 = vst.msk [vmem:[#allocation2 + $0x78] sm:$0xff] %vm717, %v715
      %733 = vst.msk [vmem:[#allocation2 + $0x80] sm:$0xff] %vm717, %v716
      %p734 = scmp.gt.s32.totalorder %s23, 0
      // Predicated region
      $region49: #{resnet_tail_forward.3} parent=47 // pred_check
        %p735 = pneg %p734
      $region50: #{resnet_tail_forward.3} parent=47 // pred_check_branch
        %737 = sbr.rel (%p735) target = $region52
      $region51: #{resnet_tail_forward.3} parent=47 // pred_region
        %s738 = ssub.s32 %s305, 1
        %s739 = smul.u32 %s738, 2
        %s740 = smul.addr %s739, 4
        %s741 = scalar_lea.vmem %s292, %s740
        %v742 = vld [vmem:[%s741] sm:$0xf]
        %v743 = vld [vmem:[%s741 + $0x4] sm:$0xf]
        %v746 = vunpack.c.l.b16 %v742
        %v747 = vunpack.c.l.b16 %v743
        %v748 = vpack.c.b16 %v747, %v746
        %750 = vmatprep.subr.bf16.mxu0 0
        %751 = vmatpush1.bf16.msra.mxu0 %v492
        %752 = vmatprep.subr.bf16.mxu0 0
        %753 = vmatpush1.bf16.msra.mxu0 %v493
        %754 = vmatprep.subr.bf16.mxu0 0
        %755 = vmatpush1.bf16.msra.mxu0 %v494
        %756 = vmatprep.subr.bf16.mxu0 0
        %757 = vmatpush1.bf16.msra.mxu0 %v495
        %758 = vmatprep.subr.bf16.mxu0 0
        %759 = vmatpush1.bf16.msra.mxu0 %v496
        %760 = vmatprep.subr.bf16.mxu0 0
        %761 = vmatpush1.bf16.msra.mxu0 %v497
        %762 = vmatprep.subr.bf16.mxu0 0
        %763 = vmatpush1.bf16.msra.mxu0 %v498
        %764 = vmatprep.subr.bf16.mxu0 0
        %765 = vmatpush1.bf16.msra.mxu0 %v499
        %766 = vmatprep.subr.bf16.mxu0 0
        %767 = vmatpush1.bf16.msra.mxu0 0
        %768 = vmatprep.subr.bf16.mxu0 0
        %769 = vmatpush1.bf16.msra.mxu0 0
        %770 = vmatprep.subr.bf16.mxu0 0
        %771 = vmatpush1.bf16.msra.mxu0 0
        %772 = vmatprep.subr.bf16.mxu0 0
        %773 = vmatpush1.bf16.msra.mxu0 0
        %774 = vmatprep.subr.bf16.mxu0 0
        %775 = vmatpush1.bf16.msra.mxu0 0
        %776 = vmatprep.subr.bf16.mxu0 0
        %777 = vmatpush1.bf16.msra.mxu0 0
        %778 = vmatprep.subr.bf16.mxu0 0
        %779 = vmatpush1.bf16.msra.mxu0 0
        %780 = vmatprep.subr.bf16.mxu0 0
        %781 = vmatpush1.bf16.msra.mxu0 0
        %782 = vmatprep.mubr.bf16.mxu0 0
        %783 = vmatmul.mubr.bf16.gmra.mrb[0].mxu0 %v748
        %v784 = vpop.f32.mrb[0].mxu0
        %v785 = vadd.f32 %v362, %v784
        %v786 = vpop.f32.mrb[0].mxu0
        %v787 = vpop.f32.mrb[0].mxu0
        %v788 = vadd.f32 %v362, %v787
        %v789 = vpop.f32.mrb[0].mxu0
        %790 = vdwg.mxu0
        %v791 = vmax.f32 %v785, 0.0
        %v792 = vmax.f32 %v788, 0.0
        %v793 = vpack.c.bf16 %v792, %v791
        %794 = vst.msk [vmem:[#allocation2] sm:$0xff] %vm717, %v793
      $region52: #{resnet_tail_forward.3} parent=47 // pred_fallthru
        _
      %p795 = scmp.eq.s32.totalorder %s23, 0
      // Predicated region
      $region53: #{resnet_tail_forward.3} parent=47 // pred_check
        %p796 = pneg %p795
      $region54: #{resnet_tail_forward.3} parent=47 // pred_check_branch
        %798 = sbr.rel (%p796) target = $region56
      $region55: #{resnet_tail_forward.3} parent=47 // pred_region
        %799 = vst.msk [vmem:[#allocation2] sm:$0xff] %vm717, 0
      $region56: #{resnet_tail_forward.3} parent=47 // pred_fallthru
        _
      %p800 = scmp.lt.s32.totalorder %s23, 0
      // Predicated region
      $region57: #{resnet_tail_forward.3} parent=47 // pred_check
        %p801 = pneg %p800
      $region58: #{resnet_tail_forward.3} parent=47 // pred_check_branch
        %803 = sbr.rel (%p801) target = $region60
      $region59: #{resnet_tail_forward.3} parent=47 // pred_region
        %s804 = sadd.s32 %s305, 16
        %s805 = smul.u32 %s804, 2
        %s806 = smul.addr %s805, 4
        %s807 = scalar_lea.vmem %s292, %s806
        %v808 = vld [vmem:[%s807] sm:$0xf]
        %v809 = vld [vmem:[%s807 + $0x4] sm:$0xf]
        %v812 = vunpack.c.l.b16 %v808
        %v813 = vunpack.c.l.b16 %v809
        %v814 = vpack.c.b16 %v813, %v812
        %816 = vmatprep.subr.bf16.mxu0 0
        %817 = vmatpush1.bf16.msra.mxu0 %v492
        %818 = vmatprep.subr.bf16.mxu0 0
        %819 = vmatpush1.bf16.msra.mxu0 %v493
        %820 = vmatprep.subr.bf16.mxu0 0
        %821 = vmatpush1.bf16.msra.mxu0 %v494
        %822 = vmatprep.subr.bf16.mxu0 0
        %823 = vmatpush1.bf16.msra.mxu0 %v495
        %824 = vmatprep.subr.bf16.mxu0 0
        %825 = vmatpush1.bf16.msra.mxu0 %v496
        %826 = vmatprep.subr.bf16.mxu0 0
        %827 = vmatpush1.bf16.msra.mxu0 %v497
        %828 = vmatprep.subr.bf16.mxu0 0
        %829 = vmatpush1.bf16.msra.mxu0 %v498
        %830 = vmatprep.subr.bf16.mxu0 0
        %831 = vmatpush1.bf16.msra.mxu0 %v499
        %832 = vmatprep.subr.bf16.mxu0 0
        %833 = vmatpush1.bf16.msra.mxu0 0
        %834 = vmatprep.subr.bf16.mxu0 0
        %835 = vmatpush1.bf16.msra.mxu0 0
        %836 = vmatprep.subr.bf16.mxu0 0
        %837 = vmatpush1.bf16.msra.mxu0 0
        %838 = vmatprep.subr.bf16.mxu0 0
        %839 = vmatpush1.bf16.msra.mxu0 0
        %840 = vmatprep.subr.bf16.mxu0 0
        %841 = vmatpush1.bf16.msra.mxu0 0
        %842 = vmatprep.subr.bf16.mxu0 0
        %843 = vmatpush1.bf16.msra.mxu0 0
        %844 = vmatprep.subr.bf16.mxu0 0
        %845 = vmatpush1.bf16.msra.mxu0 0
        %846 = vmatprep.subr.bf16.mxu0 0
        %847 = vmatpush1.bf16.msra.mxu0 0
        %848 = vmatprep.mubr.bf16.mxu0 0
        %849 = vmatmul.mubr.bf16.gmra.mrb[0].mxu0 %v814
        %v850 = vpop.f32.mrb[0].mxu0
        %v851 = vadd.f32 %v362, %v850
        %v852 = vpop.f32.mrb[0].mxu0
        %v853 = vpop.f32.mrb[0].mxu0
        %v854 = vadd.f32 %v362, %v853
        %v855 = vpop.f32.mrb[0].mxu0
        %856 = vdwg.mxu0
        %v857 = vmax.f32 %v851, 0.0
        %v858 = vmax.f32 %v854, 0.0
        %v859 = vpack.c.bf16 %v858, %v857
        %860 = vst.msk [vmem:[#allocation2 + $0x88] sm:$0xff] %vm717, %v859
      $region60: #{resnet_tail_forward.3} parent=47 // pred_fallthru
        _
      // Predicated region
      $region61: #{resnet_tail_forward.3} parent=47 // pred_check
        %p861 = pneg %p795
      $region62: #{resnet_tail_forward.3} parent=47 // pred_check_branch
        %863 = sbr.rel (%p861) target = $region64
      $region63: #{resnet_tail_forward.3} parent=47 // pred_region
        %864 = vst.msk [vmem:[#allocation2 + $0x88] sm:$0xff] %vm717, 0
      $region64: #{resnet_tail_forward.3} parent=47 // pred_fallthru
        _
      %v865 = vld [vmem:[#allocation2] sm:$0xff]
      %v866 = vld [vmem:[#allocation2 + $0x8] sm:$0xff]
      %v867 = vld [vmem:[#allocation2 + $0x10] sm:$0xff]
      %v868 = vld [vmem:[#allocation2 + $0x18] sm:$0xff]
      %v869 = vld [vmem:[#allocation2 + $0x20] sm:$0xff]
      %v870 = vld [vmem:[#allocation2 + $0x28] sm:$0xff]
      %v871 = vld [vmem:[#allocation2 + $0x30] sm:$0xff]
      %v872 = vld [vmem:[#allocation2 + $0x38] sm:$0xff]
      %v873 = vld [vmem:[#allocation2 + $0x40] sm:$0xff]
      %v874 = vld [vmem:[#allocation2 + $0x48] sm:$0xff]
      %v875 = vld [vmem:[#allocation2 + $0x50] sm:$0xff]
      %v876 = vld [vmem:[#allocation2 + $0x58] sm:$0xff]
      %v877 = vld [vmem:[#allocation2 + $0x60] sm:$0xff]
      %v878 = vld [vmem:[#allocation2 + $0x68] sm:$0xff]
      %v879 = vld [vmem:[#allocation2 + $0x70] sm:$0xff]
      %v880 = vld [vmem:[#allocation2 + $0x78] sm:$0xff]
      %881 = vst.msk [vmem:[#allocation3] sm:$0xff] %vm717, %v865
      %882 = vst.msk [vmem:[#allocation3 + $0x8] sm:$0xff] %vm717, %v866
      %883 = vst.msk [vmem:[#allocation3 + $0x10] sm:$0xff] %vm717, %v867
      %884 = vst.msk [vmem:[#allocation3 + $0x18] sm:$0xff] %vm717, %v868
      %885 = vst.msk [vmem:[#allocation3 + $0x20] sm:$0xff] %vm717, %v869
      %886 = vst.msk [vmem:[#allocation3 + $0x28] sm:$0xff] %vm717, %v870
      %887 = vst.msk [vmem:[#allocation3 + $0x30] sm:$0xff] %vm717, %v871
      %888 = vst.msk [vmem:[#allocation3 + $0x38] sm:$0xff] %vm717, %v872
      %889 = vst.msk [vmem:[#allocation3 + $0x40] sm:$0xff] %vm717, %v873
      %890 = vst.msk [vmem:[#allocation3 + $0x48] sm:$0xff] %vm717, %v874
      %891 = vst.msk [vmem:[#allocation3 + $0x50] sm:$0xff] %vm717, %v875
      %892 = vst.msk [vmem:[#allocation3 + $0x58] sm:$0xff] %vm717, %v876
      %893 = vst.msk [vmem:[#allocation3 + $0x60] sm:$0xff] %vm717, %v877
      %894 = vst.msk [vmem:[#allocation3 + $0x68] sm:$0xff] %vm717, %v878
      %895 = vst.msk [vmem:[#allocation3 + $0x70] sm:$0xff] %vm717, %v879
      %896 = vst.msk [vmem:[#allocation3 + $0x78] sm:$0xff] %vm717, %v880
      %v897 = vld [vmem:[#allocation2 + $0x8] sm:$0xff]
      %v898 = vld [vmem:[#allocation2 + $0x10] sm:$0xff]
      %v899 = vld [vmem:[#allocation2 + $0x18] sm:$0xff]
      %v900 = vld [vmem:[#allocation2 + $0x20] sm:$0xff]
      %v901 = vld [vmem:[#allocation2 + $0x28] sm:$0xff]
      %v902 = vld [vmem:[#allocation2 + $0x30] sm:$0xff]
      %v903 = vld [vmem:[#allocation2 + $0x38] sm:$0xff]
      %v904 = vld [vmem:[#allocation2 + $0x40] sm:$0xff]
      %v905 = vld [vmem:[#allocation2 + $0x48] sm:$0xff]
      %v906 = vld [vmem:[#allocation2 + $0x50] sm:$0xff]
      %v907 = vld [vmem:[#allocation2 + $0x58] sm:$0xff]
      %v908 = vld [vmem:[#allocation2 + $0x60] sm:$0xff]
      %v909 = vld [vmem:[#allocation2 + $0x68] sm:$0xff]
      %v910 = vld [vmem:[#allocation2 + $0x70] sm:$0xff]
      %v911 = vld [vmem:[#allocation2 + $0x78] sm:$0xff]
      %v912 = vld [vmem:[#allocation2 + $0x80] sm:$0xff]
      %929 = vrot.lane.b32.xlu0 %v897, 32
      %v930 = vpop.permute.xlu0 %929
      %931 = vrot.lane.b32.xlu0 %v898, 32
      %v932 = vpop.permute.xlu0 %931
      %933 = vrot.lane.b32.xlu0 %v899, 32
      %v934 = vpop.permute.xlu0 %933
      %935 = vrot.lane.b32.xlu0 %v900, 32
      %v936 = vpop.permute.xlu0 %935
      %937 = vrot.lane.b32.xlu0 %v901, 32
      %v938 = vpop.permute.xlu0 %937
      %939 = vrot.lane.b32.xlu0 %v902, 32
      %v940 = vpop.permute.xlu0 %939
      %941 = vrot.lane.b32.xlu0 %v903, 32
      %v942 = vpop.permute.xlu0 %941
      %943 = vrot.lane.b32.xlu0 %v904, 32
      %v944 = vpop.permute.xlu0 %943
      %945 = vrot.lane.b32.xlu0 %v905, 32
      %v946 = vpop.permute.xlu0 %945
      %947 = vrot.lane.b32.xlu0 %v906, 32
      %v948 = vpop.permute.xlu0 %947
      %949 = vrot.lane.b32.xlu0 %v907, 32
      %v950 = vpop.permute.xlu0 %949
      %951 = vrot.lane.b32.xlu0 %v908, 32
      %v952 = vpop.permute.xlu0 %951
      %953 = vrot.lane.b32.xlu0 %v909, 32
      %v954 = vpop.permute.xlu0 %953
      %955 = vrot.lane.b32.xlu0 %v910, 32
      %v956 = vpop.permute.xlu0 %955
      %957 = vrot.lane.b32.xlu0 %v911, 32
      %v958 = vpop.permute.xlu0 %957
      %959 = vrot.lane.b32.xlu0 %v912, 32
      %v960 = vpop.permute.xlu0 %959
      %vm977 = vcmask 523520
      %978 = vst.msk [vmem:[#allocation3] sm:$0xff] %vm977, %v930
      %979 = vst.msk [vmem:[#allocation3 + $0x8] sm:$0xff] %vm977, %v932
      %980 = vst.msk [vmem:[#allocation3 + $0x10] sm:$0xff] %vm977, %v934
      %981 = vst.msk [vmem:[#allocation3 + $0x18] sm:$0xff] %vm977, %v936
      %982 = vst.msk [vmem:[#allocation3 + $0x20] sm:$0xff] %vm977, %v938
      %983 = vst.msk [vmem:[#allocation3 + $0x28] sm:$0xff] %vm977, %v940
      %984 = vst.msk [vmem:[#allocation3 + $0x30] sm:$0xff] %vm977, %v942
      %985 = vst.msk [vmem:[#allocation3 + $0x38] sm:$0xff] %vm977, %v944
      %986 = vst.msk [vmem:[#allocation3 + $0x40] sm:$0xff] %vm977, %v946
      %987 = vst.msk [vmem:[#allocation3 + $0x48] sm:$0xff] %vm977, %v948
      %988 = vst.msk [vmem:[#allocation3 + $0x50] sm:$0xff] %vm977, %v950
      %989 = vst.msk [vmem:[#allocation3 + $0x58] sm:$0xff] %vm977, %v952
      %990 = vst.msk [vmem:[#allocation3 + $0x60] sm:$0xff] %vm977, %v954
      %991 = vst.msk [vmem:[#allocation3 + $0x68] sm:$0xff] %vm977, %v956
      %992 = vst.msk [vmem:[#allocation3 + $0x70] sm:$0xff] %vm977, %v958
      %993 = vst.msk [vmem:[#allocation3 + $0x78] sm:$0xff] %vm977, %v960
      %v994 = vld [vmem:[#allocation2 + $0x10] sm:$0xff]
      %v995 = vld [vmem:[#allocation2 + $0x18] sm:$0xff]
      %v996 = vld [vmem:[#allocation2 + $0x20] sm:$0xff]
      %v997 = vld [vmem:[#allocation2 + $0x28] sm:$0xff]
      %v998 = vld [vmem:[#allocation2 + $0x30] sm:$0xff]
      %v999 = vld [vmem:[#allocation2 + $0x38] sm:$0xff]
      %v1000 = vld [vmem:[#allocation2 + $0x40] sm:$0xff]
      %v1001 = vld [vmem:[#allocation2 + $0x48] sm:$0xff]
      %v1002 = vld [vmem:[#allocation2 + $0x50] sm:$0xff]
      %v1003 = vld [vmem:[#allocation2 + $0x58] sm:$0xff]
      %v1004 = vld [vmem:[#allocation2 + $0x60] sm:$0xff]
      %v1005 = vld [vmem:[#allocation2 + $0x68] sm:$0xff]
      %v1006 = vld [vmem:[#allocation2 + $0x70] sm:$0xff]
      %v1007 = vld [vmem:[#allocation2 + $0x78] sm:$0xff]
      %v1008 = vld [vmem:[#allocation2 + $0x80] sm:$0xff]
      %v1009 = vld [vmem:[#allocation2 + $0x88] sm:$0xff]
      %1026 = vrot.lane.b32.xlu0 %v994, 64
      %v1027 = vpop.permute.xlu0 %1026
      %1028 = vrot.lane.b32.xlu0 %v995, 64
      %v1029 = vpop.permute.xlu0 %1028
      %1030 = vrot.lane.b32.xlu0 %v996, 64
      %v1031 = vpop.permute.xlu0 %1030
      %1032 = vrot.lane.b32.xlu0 %v997, 64
      %v1033 = vpop.permute.xlu0 %1032
      %1034 = vrot.lane.b32.xlu0 %v998, 64
      %v1035 = vpop.permute.xlu0 %1034
      %1036 = vrot.lane.b32.xlu0 %v999, 64
      %v1037 = vpop.permute.xlu0 %1036
      %1038 = vrot.lane.b32.xlu0 %v1000, 64
      %v1039 = vpop.permute.xlu0 %1038
      %1040 = vrot.lane.b32.xlu0 %v1001, 64
      %v1041 = vpop.permute.xlu0 %1040
      %1042 = vrot.lane.b32.xlu0 %v1002, 64
      %v1043 = vpop.permute.xlu0 %1042
      %1044 = vrot.lane.b32.xlu0 %v1003, 64
      %v1045 = vpop.permute.xlu0 %1044
      %1046 = vrot.lane.b32.xlu0 %v1004, 64
      %v1047 = vpop.permute.xlu0 %1046
      %1048 = vrot.lane.b32.xlu0 %v1005, 64
      %v1049 = vpop.permute.xlu0 %1048
      %1050 = vrot.lane.b32.xlu0 %v1006, 64
      %v1051 = vpop.permute.xlu0 %1050
      %1052 = vrot.lane.b32.xlu0 %v1007, 64
      %v1053 = vpop.permute.xlu0 %1052
      %1054 = vrot.lane.b32.xlu0 %v1008, 64
      %v1055 = vpop.permute.xlu0 %1054
      %1056 = vrot.lane.b32.xlu0 %v1009, 64
      %v1057 = vpop.permute.xlu0 %1056
      %vm1074 = vcmask 785920
      %1075 = vst.msk [vmem:[#allocation3] sm:$0xff] %vm1074, %v1027
      %1076 = vst.msk [vmem:[#allocation3 + $0x8] sm:$0xff] %vm1074, %v1029
      %1077 = vst.msk [vmem:[#allocation3 + $0x10] sm:$0xff] %vm1074, %v1031
      %1078 = vst.msk [vmem:[#allocation3 + $0x18] sm:$0xff] %vm1074, %v1033
      %1079 = vst.msk [vmem:[#allocation3 + $0x20] sm:$0xff] %vm1074, %v1035
      %1080 = vst.msk [vmem:[#allocation3 + $0x28] sm:$0xff] %vm1074, %v1037
      %1081 = vst.msk [vmem:[#allocation3 + $0x30] sm:$0xff] %vm1074, %v1039
      %1082 = vst.msk [vmem:[#allocation3 + $0x38] sm:$0xff] %vm1074, %v1041
      %1083 = vst.msk [vmem:[#allocation3 + $0x40] sm:$0xff] %vm1074, %v1043
      %1084 = vst.msk [vmem:[#allocation3 + $0x48] sm:$0xff] %vm1074, %v1045
      %1085 = vst.msk [vmem:[#allocation3 + $0x50] sm:$0xff] %vm1074, %v1047
      %1086 = vst.msk [vmem:[#allocation3 + $0x58] sm:$0xff] %vm1074, %v1049
      %1087 = vst.msk [vmem:[#allocation3 + $0x60] sm:$0xff] %vm1074, %v1051
      %1088 = vst.msk [vmem:[#allocation3 + $0x68] sm:$0xff] %vm1074, %v1053
      %1089 = vst.msk [vmem:[#allocation3 + $0x70] sm:$0xff] %vm1074, %v1055
      %1090 = vst.msk [vmem:[#allocation3 + $0x78] sm:$0xff] %vm1074, %v1057
      %v1091 = vld [vmem:[#allocation3] sm:$0xff]
      %v1092 = vld [vmem:[#allocation3 + $0x8] sm:$0xff]
      %v1093 = vld [vmem:[#allocation3 + $0x10] sm:$0xff]
      %v1094 = vld [vmem:[#allocation3 + $0x18] sm:$0xff]
      %v1095 = vld [vmem:[#allocation3 + $0x20] sm:$0xff]
      %v1096 = vld [vmem:[#allocation3 + $0x28] sm:$0xff]
      %v1097 = vld [vmem:[#allocation3 + $0x30] sm:$0xff]
      %v1098 = vld [vmem:[#allocation3 + $0x38] sm:$0xff]
      %v1099 = vld [vmem:[#allocation3 + $0x40] sm:$0xff]
      %v1100 = vld [vmem:[#allocation3 + $0x48] sm:$0xff]
      %v1101 = vld [vmem:[#allocation3 + $0x50] sm:$0xff]
      %v1102 = vld [vmem:[#allocation3 + $0x58] sm:$0xff]
      %v1103 = vld [vmem:[#allocation3 + $0x60] sm:$0xff]
      %v1104 = vld [vmem:[#allocation3 + $0x68] sm:$0xff]
      %v1105 = vld [vmem:[#allocation3 + $0x70] sm:$0xff]
      %v1106 = vld [vmem:[#allocation3 + $0x78] sm:$0xff]
      %v1107 = vlaneseq
      %v1108 = vshrl.u32 %v1107, 7
      %v1109 = vadd.s32 %v1108, 8
      %v1110 = vadd.s32 %v1108, 16
      %v1111 = vadd.s32 %v1108, 24
      %v1112 = vadd.s32 %v1108, 32
      %v1113 = vadd.s32 %v1108, 40
      %v1114 = vadd.s32 %v1108, 48
      %v1115 = vadd.s32 %v1108, 56
      %v1116 = vadd.s32 %v1108, 64
      %v1117 = vadd.s32 %v1108, 72
      %v1118 = vadd.s32 %v1108, 80
      %v1119 = vadd.s32 %v1108, 88
      %v1120 = vadd.s32 %v1108, 96
      %v1121 = vadd.s32 %v1108, 104
      %v1122 = vadd.s32 %v1108, 112
      %v1123 = vadd.s32 %v1108, 120
      %v1124 = vadd.s32 %v1108, 128
      %v1125 = vadd.s32 %v1108, 136
      %v1126 = vadd.s32 %v1108, 144
      %v1127 = vadd.s32 %v1108, 152
      %v1128 = vadd.s32 %v1108, 160
      %v1129 = vadd.s32 %v1108, 168
      %v1130 = vadd.s32 %v1108, 176
      %v1131 = vadd.s32 %v1108, 184
      %v1132 = vadd.s32 %v1108, 192
      %v1133 = vadd.s32 %v1108, 200
      %v1134 = vadd.s32 %v1108, 208
      %v1135 = vadd.s32 %v1108, 216
      %v1136 = vadd.s32 %v1108, 224
      %v1137 = vadd.s32 %v1108, 232
      %v1138 = vadd.s32 %v1108, 240
      %v1139 = vadd.s32 %v1108, 248
      %vm1140 = vcmp.lt.s32.totalorder %v1108, 0
      %v1141 = vsub.s32 0, %v1108
      %v1142 = vsel %vm1140, %v1141, %v1108
      %v1143 = vshrl.u32 %v1142, 4
      %v1144 = vand.u32 %v1142, 15
      %v1145 = vsub.s32 0, %v1144
      %v1146 = vsel %vm1140, %v1145, %v1144
      %vm1147 = vcmp.lt.s32.totalorder %v1109, 0
      %v1148 = vsub.s32 0, %v1109
      %v1149 = vsel %vm1147, %v1148, %v1109
      %v1150 = vshrl.u32 %v1149, 4
      %v1151 = vand.u32 %v1149, 15
      %v1152 = vsub.s32 0, %v1151
      %v1153 = vsel %vm1147, %v1152, %v1151
      %vm1154 = vcmp.lt.s32.totalorder %v1110, 0
      %v1155 = vsub.s32 0, %v1110
      %v1156 = vsel %vm1154, %v1155, %v1110
      %v1157 = vshrl.u32 %v1156, 4
      %v1158 = vand.u32 %v1156, 15
      %v1159 = vsub.s32 0, %v1158
      %v1160 = vsel %vm1154, %v1159, %v1158
      %vm1161 = vcmp.lt.s32.totalorder %v1111, 0
      %v1162 = vsub.s32 0, %v1111
      %v1163 = vsel %vm1161, %v1162, %v1111
      %v1164 = vshrl.u32 %v1163, 4
      %v1165 = vand.u32 %v1163, 15
      %v1166 = vsub.s32 0, %v1165
      %v1167 = vsel %vm1161, %v1166, %v1165
      %vm1168 = vcmp.lt.s32.totalorder %v1112, 0
      %v1169 = vsub.s32 0, %v1112
      %v1170 = vsel %vm1168, %v1169, %v1112
      %v1171 = vshrl.u32 %v1170, 4
      %v1172 = vand.u32 %v1170, 15
      %v1173 = vsub.s32 0, %v1172
      %v1174 = vsel %vm1168, %v1173, %v1172
      %vm1175 = vcmp.lt.s32.totalorder %v1113, 0
      %v1176 = vsub.s32 0, %v1113
      %v1177 = vsel %vm1175, %v1176, %v1113
      %v1178 = vshrl.u32 %v1177, 4
      %v1179 = vand.u32 %v1177, 15
      %v1180 = vsub.s32 0, %v1179
      %v1181 = vsel %vm1175, %v1180, %v1179
      %vm1182 = vcmp.lt.s32.totalorder %v1114, 0
      %v1183 = vsub.s32 0, %v1114
      %v1184 = vsel %vm1182, %v1183, %v1114
      %v1185 = vshrl.u32 %v1184, 4
      %v1186 = vand.u32 %v1184, 15
      %v1187 = vsub.s32 0, %v1186
      %v1188 = vsel %vm1182, %v1187, %v1186
      %vm1189 = vcmp.lt.s32.totalorder %v1115, 0
      %v1190 = vsub.s32 0, %v1115
      %v1191 = vsel %vm1189, %v1190, %v1115
      %v1192 = vshrl.u32 %v1191, 4
      %v1193 = vand.u32 %v1191, 15
      %v1194 = vsub.s32 0, %v1193
      %v1195 = vsel %vm1189, %v1194, %v1193
      %vm1196 = vcmp.lt.s32.totalorder %v1116, 0
      %v1197 = vsub.s32 0, %v1116
      %v1198 = vsel %vm1196, %v1197, %v1116
      %v1199 = vshrl.u32 %v1198, 4
      %v1200 = vand.u32 %v1198, 15
      %v1201 = vsub.s32 0, %v1200
      %v1202 = vsel %vm1196, %v1201, %v1200
      %vm1203 = vcmp.lt.s32.totalorder %v1117, 0
      %v1204 = vsub.s32 0, %v1117
      %v1205 = vsel %vm1203, %v1204, %v1117
      %v1206 = vshrl.u32 %v1205, 4
      %v1207 = vand.u32 %v1205, 15
      %v1208 = vsub.s32 0, %v1207
      %v1209 = vsel %vm1203, %v1208, %v1207
      %vm1210 = vcmp.lt.s32.totalorder %v1118, 0
      %v1211 = vsub.s32 0, %v1118
      %v1212 = vsel %vm1210, %v1211, %v1118
      %v1213 = vshrl.u32 %v1212, 4
      %v1214 = vand.u32 %v1212, 15
      %v1215 = vsub.s32 0, %v1214
      %v1216 = vsel %vm1210, %v1215, %v1214
      %vm1217 = vcmp.lt.s32.totalorder %v1119, 0
      %v1218 = vsub.s32 0, %v1119
      %v1219 = vsel %vm1217, %v1218, %v1119
      %v1220 = vshrl.u32 %v1219, 4
      %v1221 = vand.u32 %v1219, 15
      %v1222 = vsub.s32 0, %v1221
      %v1223 = vsel %vm1217, %v1222, %v1221
      %vm1224 = vcmp.lt.s32.totalorder %v1120, 0
      %v1225 = vsub.s32 0, %v1120
      %v1226 = vsel %vm1224, %v1225, %v1120
      %v1227 = vshrl.u32 %v1226, 4
      %v1228 = vand.u32 %v1226, 15
      %v1229 = vsub.s32 0, %v1228
      %v1230 = vsel %vm1224, %v1229, %v1228
      %vm1231 = vcmp.lt.s32.totalorder %v1121, 0
      %v1232 = vsub.s32 0, %v1121
      %v1233 = vsel %vm1231, %v1232, %v1121
      %v1234 = vshrl.u32 %v1233, 4
      %v1235 = vand.u32 %v1233, 15
      %v1236 = vsub.s32 0, %v1235
      %v1237 = vsel %vm1231, %v1236, %v1235
      %vm1238 = vcmp.lt.s32.totalorder %v1122, 0
      %v1239 = vsub.s32 0, %v1122
      %v1240 = vsel %vm1238, %v1239, %v1122
      %v1241 = vshrl.u32 %v1240, 4
      %v1242 = vand.u32 %v1240, 15
      %v1243 = vsub.s32 0, %v1242
      %v1244 = vsel %vm1238, %v1243, %v1242
      %vm1245 = vcmp.lt.s32.totalorder %v1123, 0
      %v1246 = vsub.s32 0, %v1123
      %v1247 = vsel %vm1245, %v1246, %v1123
      %v1248 = vshrl.u32 %v1247, 4
      %v1249 = vand.u32 %v1247, 15
      %v1250 = vsub.s32 0, %v1249
      %v1251 = vsel %vm1245, %v1250, %v1249
      %vm1252 = vcmp.lt.s32.totalorder %v1124, 0
      %v1253 = vsub.s32 0, %v1124
      %v1254 = vsel %vm1252, %v1253, %v1124
      %v1255 = vshrl.u32 %v1254, 4
      %v1256 = vand.u32 %v1254, 15
      %v1257 = vsub.s32 0, %v1256
      %v1258 = vsel %vm1252, %v1257, %v1256
      %vm1259 = vcmp.lt.s32.totalorder %v1125, 0
      %v1260 = vsub.s32 0, %v1125
      %v1261 = vsel %vm1259, %v1260, %v1125
      %v1262 = vshrl.u32 %v1261, 4
      %v1263 = vand.u32 %v1261, 15
      %v1264 = vsub.s32 0, %v1263
      %v1265 = vsel %vm1259, %v1264, %v1263
      %vm1266 = vcmp.lt.s32.totalorder %v1126, 0
      %v1267 = vsub.s32 0, %v1126
      %v1268 = vsel %vm1266, %v1267, %v1126
      %v1269 = vshrl.u32 %v1268, 4
      %v1270 = vand.u32 %v1268, 15
      %v1271 = vsub.s32 0, %v1270
      %v1272 = vsel %vm1266, %v1271, %v1270
      %vm1273 = vcmp.lt.s32.totalorder %v1127, 0
      %v1274 = vsub.s32 0, %v1127
      %v1275 = vsel %vm1273, %v1274, %v1127
      %v1276 = vshrl.u32 %v1275, 4
      %v1277 = vand.u32 %v1275, 15
      %v1278 = vsub.s32 0, %v1277
      %v1279 = vsel %vm1273, %v1278, %v1277
      %vm1280 = vcmp.lt.s32.totalorder %v1128, 0
      %v1281 = vsub.s32 0, %v1128
      %v1282 = vsel %vm1280, %v1281, %v1128
      %v1283 = vshrl.u32 %v1282, 4
      %v1284 = vand.u32 %v1282, 15
      %v1285 = vsub.s32 0, %v1284
      %v1286 = vsel %vm1280, %v1285, %v1284
      %vm1287 = vcmp.lt.s32.totalorder %v1129, 0
      %v1288 = vsub.s32 0, %v1129
      %v1289 = vsel %vm1287, %v1288, %v1129
      %v1290 = vshrl.u32 %v1289, 4
      %v1291 = vand.u32 %v1289, 15
      %v1292 = vsub.s32 0, %v1291
      %v1293 = vsel %vm1287, %v1292, %v1291
      %vm1294 = vcmp.lt.s32.totalorder %v1130, 0
      %v1295 = vsub.s32 0, %v1130
      %v1296 = vsel %vm1294, %v1295, %v1130
      %v1297 = vshrl.u32 %v1296, 4
      %v1298 = vand.u32 %v1296, 15
      %v1299 = vsub.s32 0, %v1298
      %v1300 = vsel %vm1294, %v1299, %v1298
      %vm1301 = vcmp.lt.s32.totalorder %v1131, 0
      %v1302 = vsub.s32 0, %v1131
      %v1303 = vsel %vm1301, %v1302, %v1131
      %v1304 = vshrl.u32 %v1303, 4
      %v1305 = vand.u32 %v1303, 15
      %v1306 = vsub.s32 0, %v1305
      %v1307 = vsel %vm1301, %v1306, %v1305
      %vm1308 = vcmp.lt.s32.totalorder %v1132, 0
      %v1309 = vsub.s32 0, %v1132
      %v1310 = vsel %vm1308, %v1309, %v1132
      %v1311 = vshrl.u32 %v1310, 4
      %v1312 = vand.u32 %v1310, 15
      %v1313 = vsub.s32 0, %v1312
      %v1314 = vsel %vm1308, %v1313, %v1312
      %vm1315 = vcmp.lt.s32.totalorder %v1133, 0
      %v1316 = vsub.s32 0, %v1133
      %v1317 = vsel %vm1315, %v1316, %v1133
      %v1318 = vshrl.u32 %v1317, 4
      %v1319 = vand.u32 %v1317, 15
      %v1320 = vsub.s32 0, %v1319
      %v1321 = vsel %vm1315, %v1320, %v1319
      %vm1322 = vcmp.lt.s32.totalorder %v1134, 0
      %v1323 = vsub.s32 0, %v1134
      %v1324 = vsel %vm1322, %v1323, %v1134
      %v1325 = vshrl.u32 %v1324, 4
      %v1326 = vand.u32 %v1324, 15
      %v1327 = vsub.s32 0, %v1326
      %v1328 = vsel %vm1322, %v1327, %v1326
      %vm1329 = vcmp.lt.s32.totalorder %v1135, 0
      %v1330 = vsub.s32 0, %v1135
      %v1331 = vsel %vm1329, %v1330, %v1135
      %v1332 = vshrl.u32 %v1331, 4
      %v1333 = vand.u32 %v1331, 15
      %v1334 = vsub.s32 0, %v1333
      %v1335 = vsel %vm1329, %v1334, %v1333
      %vm1336 = vcmp.lt.s32.totalorder %v1136, 0
      %v1337 = vsub.s32 0, %v1136
      %v1338 = vsel %vm1336, %v1337, %v1136
      %v1339 = vshrl.u32 %v1338, 4
      %v1340 = vand.u32 %v1338, 15
      %v1341 = vsub.s32 0, %v1340
      %v1342 = vsel %vm1336, %v1341, %v1340
      %vm1343 = vcmp.lt.s32.totalorder %v1137, 0
      %v1344 = vsub.s32 0, %v1137
      %v1345 = vsel %vm1343, %v1344, %v1137
      %v1346 = vshrl.u32 %v1345, 4
      %v1347 = vand.u32 %v1345, 15
      %v1348 = vsub.s32 0, %v1347
      %v1349 = vsel %vm1343, %v1348, %v1347
      %vm1350 = vcmp.lt.s32.totalorder %v1138, 0
      %v1351 = vsub.s32 0, %v1138
      %v1352 = vsel %vm1350, %v1351, %v1138
      %v1353 = vshrl.u32 %v1352, 4
      %v1354 = vand.u32 %v1352, 15
      %v1355 = vsub.s32 0, %v1354
      %v1356 = vsel %vm1350, %v1355, %v1354
      %vm1357 = vcmp.lt.s32.totalorder %v1139, 0
      %v1358 = vsub.s32 0, %v1139
      %v1359 = vsel %vm1357, %v1358, %v1139
      %v1360 = vshrl.u32 %v1359, 4
      %v1361 = vand.u32 %v1359, 15
      %v1362 = vsub.s32 0, %v1361
      %v1363 = vsel %vm1357, %v1362, %v1361
      %vm1364 = vcmp.ne.s32.totalorder %v1146, 0
      %vm1365 = vcmp.ne.s32.totalorder %v1153, 0
      %vm1366 = vcmp.ne.s32.totalorder %v1160, 0
      %vm1367 = vcmp.ne.s32.totalorder %v1167, 0
      %vm1368 = vcmp.ne.s32.totalorder %v1174, 0
      %vm1369 = vcmp.ne.s32.totalorder %v1181, 0
      %vm1370 = vcmp.ne.s32.totalorder %v1188, 0
      %vm1371 = vcmp.ne.s32.totalorder %v1195, 0
      %vm1372 = vcmp.ne.s32.totalorder %v1202, 0
      %vm1373 = vcmp.ne.s32.totalorder %v1209, 0
      %vm1374 = vcmp.ne.s32.totalorder %v1216, 0
      %vm1375 = vcmp.ne.s32.totalorder %v1223, 0
      %vm1376 = vcmp.ne.s32.totalorder %v1230, 0
      %vm1377 = vcmp.ne.s32.totalorder %v1237, 0
      %vm1378 = vcmp.ne.s32.totalorder %v1244, 0
      %vm1379 = vcmp.ne.s32.totalorder %v1251, 0
      %vm1380 = vcmp.ne.s32.totalorder %v1258, 0
      %vm1381 = vcmp.ne.s32.totalorder %v1265, 0
      %vm1382 = vcmp.ne.s32.totalorder %v1272, 0
      %vm1383 = vcmp.ne.s32.totalorder %v1279, 0
      %vm1384 = vcmp.ne.s32.totalorder %v1286, 0
      %vm1385 = vcmp.ne.s32.totalorder %v1293, 0
      %vm1386 = vcmp.ne.s32.totalorder %v1300, 0
      %vm1387 = vcmp.ne.s32.totalorder %v1307, 0
      %vm1388 = vcmp.ne.s32.totalorder %v1314, 0
      %vm1389 = vcmp.ne.s32.totalorder %v1321, 0
      %vm1390 = vcmp.ne.s32.totalorder %v1328, 0
      %vm1391 = vcmp.ne.s32.totalorder %v1335, 0
      %vm1392 = vcmp.ne.s32.totalorder %v1342, 0
      %vm1393 = vcmp.ne.s32.totalorder %v1349, 0
      %vm1394 = vcmp.ne.s32.totalorder %v1356, 0
      %vm1395 = vcmp.ne.s32.totalorder %v1363, 0
      %vm1396 = vcmp.lt.s32.totalorder %v1146, 0
      %vm1397 = vcmp.lt.s32.totalorder %v1153, 0
      %vm1398 = vcmp.lt.s32.totalorder %v1160, 0
      %vm1399 = vcmp.lt.s32.totalorder %v1167, 0
      %vm1400 = vcmp.lt.s32.totalorder %v1174, 0
      %vm1401 = vcmp.lt.s32.totalorder %v1181, 0
      %vm1402 = vcmp.lt.s32.totalorder %v1188, 0
      %vm1403 = vcmp.lt.s32.totalorder %v1195, 0
      %vm1404 = vcmp.lt.s32.totalorder %v1202, 0
      %vm1405 = vcmp.lt.s32.totalorder %v1209, 0
      %vm1406 = vcmp.lt.s32.totalorder %v1216, 0
      %vm1407 = vcmp.lt.s32.totalorder %v1223, 0
      %vm1408 = vcmp.lt.s32.totalorder %v1230, 0
      %vm1409 = vcmp.lt.s32.totalorder %v1237, 0
      %vm1410 = vcmp.lt.s32.totalorder %v1244, 0
      %vm1411 = vcmp.lt.s32.totalorder %v1251, 0
      %vm1412 = vcmp.lt.s32.totalorder %v1258, 0
      %vm1413 = vcmp.lt.s32.totalorder %v1265, 0
      %vm1414 = vcmp.lt.s32.totalorder %v1272, 0
      %vm1415 = vcmp.lt.s32.totalorder %v1279, 0
      %vm1416 = vcmp.lt.s32.totalorder %v1286, 0
      %vm1417 = vcmp.lt.s32.totalorder %v1293, 0
      %vm1418 = vcmp.lt.s32.totalorder %v1300, 0
      %vm1419 = vcmp.lt.s32.totalorder %v1307, 0
      %vm1420 = vcmp.lt.s32.totalorder %v1314, 0
      %vm1421 = vcmp.lt.s32.totalorder %v1321, 0
      %vm1422 = vcmp.lt.s32.totalorder %v1328, 0
      %vm1423 = vcmp.lt.s32.totalorder %v1335, 0
      %vm1424 = vcmp.lt.s32.totalorder %v1342, 0
      %vm1425 = vcmp.lt.s32.totalorder %v1349, 0
      %vm1426 = vcmp.lt.s32.totalorder %v1356, 0
      %vm1427 = vcmp.lt.s32.totalorder %v1363, 0
      %vm1428 = vmand %vm1396, %vm1364
      %vm1429 = vmand %vm1397, %vm1365
      %vm1430 = vmand %vm1398, %vm1366
      %vm1431 = vmand %vm1399, %vm1367
      %vm1432 = vmand %vm1400, %vm1368
      %vm1433 = vmand %vm1401, %vm1369
      %vm1434 = vmand %vm1402, %vm1370
      %vm1435 = vmand %vm1403, %vm1371
      %vm1436 = vmand %vm1404, %vm1372
      %vm1437 = vmand %vm1405, %vm1373
      %vm1438 = vmand %vm1406, %vm1374
      %vm1439 = vmand %vm1407, %vm1375
      %vm1440 = vmand %vm1408, %vm1376
      %vm1441 = vmand %vm1409, %vm1377
      %vm1442 = vmand %vm1410, %vm1378
      %vm1443 = vmand %vm1411, %vm1379
      %vm1444 = vmand %vm1412, %vm1380
      %vm1445 = vmand %vm1413, %vm1381
      %vm1446 = vmand %vm1414, %vm1382
      %vm1447 = vmand %vm1415, %vm1383
      %vm1448 = vmand %vm1416, %vm1384
      %vm1449 = vmand %vm1417, %vm1385
      %vm1450 = vmand %vm1418, %vm1386
      %vm1451 = vmand %vm1419, %vm1387
      %vm1452 = vmand %vm1420, %vm1388
      %vm1453 = vmand %vm1421, %vm1389
      %vm1454 = vmand %vm1422, %vm1390
      %vm1455 = vmand %vm1423, %vm1391
      %vm1456 = vmand %vm1424, %vm1392
      %vm1457 = vmand %vm1425, %vm1393
      %vm1458 = vmand %vm1426, %vm1394
      %vm1459 = vmand %vm1427, %vm1395
      %v1460 = vadd.s32 %v1146, 16
      %v1461 = vadd.s32 %v1153, 16
      %v1462 = vadd.s32 %v1160, 16
      %v1463 = vadd.s32 %v1167, 16
      %v1464 = vadd.s32 %v1174, 16
      %v1465 = vadd.s32 %v1181, 16
      %v1466 = vadd.s32 %v1188, 16
      %v1467 = vadd.s32 %v1195, 16
      %v1468 = vadd.s32 %v1202, 16
      %v1469 = vadd.s32 %v1209, 16
      %v1470 = vadd.s32 %v1216, 16
      %v1471 = vadd.s32 %v1223, 16
      %v1472 = vadd.s32 %v1230, 16
      %v1473 = vadd.s32 %v1237, 16
      %v1474 = vadd.s32 %v1244, 16
      %v1475 = vadd.s32 %v1251, 16
      %v1476 = vadd.s32 %v1258, 16
      %v1477 = vadd.s32 %v1265, 16
      %v1478 = vadd.s32 %v1272, 16
      %v1479 = vadd.s32 %v1279, 16
      %v1480 = vadd.s32 %v1286, 16
      %v1481 = vadd.s32 %v1293, 16
      %v1482 = vadd.s32 %v1300, 16
      %v1483 = vadd.s32 %v1307, 16
      %v1484 = vadd.s32 %v1314, 16
      %v1485 = vadd.s32 %v1321, 16
      %v1486 = vadd.s32 %v1328, 16
      %v1487 = vadd.s32 %v1335, 16
      %v1488 = vadd.s32 %v1342, 16
      %v1489 = vadd.s32 %v1349, 16
      %v1490 = vadd.s32 %v1356, 16
      %v1491 = vadd.s32 %v1363, 16
      %v1492 = vsel %vm1428, %v1460, %v1146
      %v1493 = vsel %vm1429, %v1461, %v1153
      %v1494 = vsel %vm1430, %v1462, %v1160
      %v1495 = vsel %vm1431, %v1463, %v1167
      %v1496 = vsel %vm1432, %v1464, %v1174
      %v1497 = vsel %vm1433, %v1465, %v1181
      %v1498 = vsel %vm1434, %v1466, %v1188
      %v1499 = vsel %vm1435, %v1467, %v1195
      %v1500 = vsel %vm1436, %v1468, %v1202
      %v1501 = vsel %vm1437, %v1469, %v1209
      %v1502 = vsel %vm1438, %v1470, %v1216
      %v1503 = vsel %vm1439, %v1471, %v1223
      %v1504 = vsel %vm1440, %v1472, %v1230
      %v1505 = vsel %vm1441, %v1473, %v1237
      %v1506 = vsel %vm1442, %v1474, %v1244
      %v1507 = vsel %vm1443, %v1475, %v1251
      %v1508 = vsel %vm1444, %v1476, %v1258
      %v1509 = vsel %vm1445, %v1477, %v1265
      %v1510 = vsel %vm1446, %v1478, %v1272
      %v1511 = vsel %vm1447, %v1479, %v1279
      %v1512 = vsel %vm1448, %v1480, %v1286
      %v1513 = vsel %vm1449, %v1481, %v1293
      %v1514 = vsel %vm1450, %v1482, %v1300
      %v1515 = vsel %vm1451, %v1483, %v1307
      %v1516 = vsel %vm1452, %v1484, %v1314
      %v1517 = vsel %vm1453, %v1485, %v1321
      %v1518 = vsel %vm1454, %v1486, %v1328
      %v1519 = vsel %vm1455, %v1487, %v1335
      %v1520 = vsel %vm1456, %v1488, %v1342
      %v1521 = vsel %vm1457, %v1489, %v1349
      %v1522 = vsel %vm1458, %v1490, %v1356
      %v1523 = vsel %vm1459, %v1491, %v1363
      %v1524 = vld [vmem:[%s3] sm:$0xf]
      %v1525 = vld [vmem:[%s3 + $0x4] sm:$0xf]
      %v1526 = vld [vmem:[%s3 + $0x8] sm:$0xf]
      %v1527 = vld [vmem:[%s3 + $0xc] sm:$0xf]
      %v1528 = vld [vmem:[%s3 + $0x10] sm:$0xf]
      %v1529 = vld [vmem:[%s3 + $0x14] sm:$0xf]
      %v1530 = vld [vmem:[%s3 + $0x18] sm:$0xf]
      %v1531 = vld [vmem:[%s3 + $0x1c] sm:$0xf]
      %v1532 = vld [vmem:[%s3 + $0x20] sm:$0xf]
      %v1533 = vld [vmem:[%s3 + $0x24] sm:$0xf]
      %v1534 = vld [vmem:[%s3 + $0x28] sm:$0xf]
      %v1535 = vld [vmem:[%s3 + $0x2c] sm:$0xf]
      %v1548 = vunpack.c.l.b16 %v1524
      %v1549 = vunpack.c.l.b16 %v1525
      %v1550 = vunpack.c.l.b16 %v1526
      %v1551 = vunpack.c.l.b16 %v1527
      %v1552 = vunpack.c.l.b16 %v1528
      %v1553 = vunpack.c.l.b16 %v1529
      %v1554 = vunpack.c.l.b16 %v1530
      %v1555 = vunpack.c.l.b16 %v1531
      %v1556 = vunpack.c.l.b16 %v1532
      %v1557 = vunpack.c.l.b16 %v1533
      %v1558 = vunpack.c.l.b16 %v1534
      %v1559 = vunpack.c.l.b16 %v1535
      %v1560 = vpack.c.b16 %v1549, %v1548
      %v1561 = vpack.c.b16 %v1551, %v1550
      %v1562 = vpack.c.b16 %v1553, %v1552
      %v1563 = vpack.c.b16 %v1555, %v1554
      %v1564 = vpack.c.b16 %v1557, %v1556
      %v1565 = vpack.c.b16 %v1559, %v1558
      %vm1572 = vcmask 785408
      %v1574 = vsel %vm1572, %v1091, 0
      %v1577 = vsel %vm1572, %v1092, 0
      %v1580 = vsel %vm1572, %v1093, 0
      %v1583 = vsel %vm1572, %v1094, 0
      %v1586 = vsel %vm1572, %v1095, 0
      %v1589 = vsel %vm1572, %v1096, 0
      %v1592 = vsel %vm1572, %v1097, 0
      %v1595 = vsel %vm1572, %v1098, 0
      %v1598 = vsel %vm1572, %v1099, 0
      %v1601 = vsel %vm1572, %v1100, 0
      %v1604 = vsel %vm1572, %v1101, 0
      %v1607 = vsel %vm1572, %v1102, 0
      %v1610 = vsel %vm1572, %v1103, 0
      %v1613 = vsel %vm1572, %v1104, 0
      %v1616 = vsel %vm1572, %v1105, 0
      %v1619 = vsel %vm1572, %v1106, 0
      %1621 = vmatprep.subr.bf16.mxu0 0
      %1622 = vmatpush1.bf16.msra.mxu0 %v1560
      %1623 = vmatprep.subr.bf16.mxu0 0
      %1624 = vmatpush1.bf16.msra.mxu0 %v1561
      %1625 = vmatprep.subr.bf16.mxu0 0
      %1626 = vmatpush1.bf16.msra.mxu0 %v1562
      %1627 = vmatprep.subr.bf16.mxu0 0
      %1628 = vmatpush1.bf16.msra.mxu0 %v1563
      %1629 = vmatprep.subr.bf16.mxu0 0
      %1630 = vmatpush1.bf16.msra.mxu0 %v1564
      %1631 = vmatprep.subr.bf16.mxu0 0
      %1632 = vmatpush1.bf16.msra.mxu0 %v1565
      %1633 = vmatprep.subr.bf16.mxu0 0
      %1634 = vmatpush1.bf16.msra.mxu0 0
      %1635 = vmatprep.subr.bf16.mxu0 0
      %1636 = vmatpush1.bf16.msra.mxu0 0
      %1637 = vmatprep.subr.bf16.mxu0 0
      %1638 = vmatpush1.bf16.msra.mxu0 0
      %1639 = vmatprep.subr.bf16.mxu0 0
      %1640 = vmatpush1.bf16.msra.mxu0 0
      %1641 = vmatprep.subr.bf16.mxu0 0
      %1642 = vmatpush1.bf16.msra.mxu0 0
      %1643 = vmatprep.subr.bf16.mxu0 0
      %1644 = vmatpush1.bf16.msra.mxu0 0
      %1645 = vmatprep.subr.bf16.mxu0 0
      %1646 = vmatpush1.bf16.msra.mxu0 0
      %1647 = vmatprep.subr.bf16.mxu0 0
      %1648 = vmatpush1.bf16.msra.mxu0 0
      %1649 = vmatprep.subr.bf16.mxu0 0
      %1650 = vmatpush1.bf16.msra.mxu0 0
      %1651 = vmatprep.subr.bf16.mxu0 0
      %1652 = vmatpush1.bf16.msra.mxu0 0
      %1653 = vmatprep.mubr.bf16.mxu0 0
      %1654 = vmatmul.mubr.bf16.gmra.mrb[0].mxu0 %v1574
      %v1655 = vpop.f32.mrb[0].mxu0
      %v1656 = vadd.f32 0.0, %v1655
      %v1657 = vpop.f32.mrb[0].mxu0
      %v1658 = vpop.f32.mrb[0].mxu0
      %v1659 = vadd.f32 0.0, %v1658
      %v1660 = vpop.f32.mrb[0].mxu0
      %1661 = vmatprep.mubr.bf16.mxu0 0
      %1662 = vmatmul.mubr.bf16.gmra.mrb[0].mxu0 %v1577
      %v1663 = vpop.f32.mrb[0].mxu0
      %v1664 = vadd.f32 0.0, %v1663
      %v1665 = vpop.f32.mrb[0].mxu0
      %v1666 = vpop.f32.mrb[0].mxu0
      %v1667 = vadd.f32 0.0, %v1666
      %v1668 = vpop.f32.mrb[0].mxu0
      %1669 = vmatprep.mubr.bf16.mxu0 0
      %1670 = vmatmul.mubr.bf16.gmra.mrb[0].mxu0 %v1580
      %v1671 = vpop.f32.mrb[0].mxu0
      %v1672 = vadd.f32 0.0, %v1671
      %v1673 = vpop.f32.mrb[0].mxu0
      %v1674 = vpop.f32.mrb[0].mxu0
      %v1675 = vadd.f32 0.0, %v1674
      %v1676 = vpop.f32.mrb[0].mxu0
      %1677 = vmatprep.mubr.bf16.mxu0 0
      %1678 = vmatmul.mubr.bf16.gmra.mrb[0].mxu0 %v1583
      %v1679 = vpop.f32.mrb[0].mxu0
      %v1680 = vadd.f32 0.0, %v1679
      %v1681 = vpop.f32.mrb[0].mxu0
      %v1682 = vpop.f32.mrb[0].mxu0
      %v1683 = vadd.f32 0.0, %v1682
      %v1684 = vpop.f32.mrb[0].mxu0
      %1685 = vmatprep.mubr.bf16.mxu0 0
      %1686 = vmatmul.mubr.bf16.gmra.mrb[0].mxu0 %v1586
      %v1687 = vpop.f32.mrb[0].mxu0
      %v1688 = vadd.f32 0.0, %v1687
      %v1689 = vpop.f32.mrb[0].mxu0
      %v1690 = vpop.f32.mrb[0].mxu0
      %v1691 = vadd.f32 0.0, %v1690
      %v1692 = vpop.f32.mrb[0].mxu0
      %1693 = vmatprep.mubr.bf16.mxu0 0
      %1694 = vmatmul.mubr.bf16.gmra.mrb[0].mxu0 %v1589
      %v1695 = vpop.f32.mrb[0].mxu0
      %v1696 = vadd.f32 0.0, %v1695
      %v1697 = vpop.f32.mrb[0].mxu0
      %v1698 = vpop.f32.mrb[0].mxu0
      %v1699 = vadd.f32 0.0, %v1698
      %v1700 = vpop.f32.mrb[0].mxu0
      %1701 = vmatprep.mubr.bf16.mxu0 0
      %1702 = vmatmul.mubr.bf16.gmra.mrb[0].mxu0 %v1592
      %v1703 = vpop.f32.mrb[0].mxu0
      %v1704 = vadd.f32 0.0, %v1703
      %v1705 = vpop.f32.mrb[0].mxu0
      %v1706 = vpop.f32.mrb[0].mxu0
      %v1707 = vadd.f32 0.0, %v1706
      %v1708 = vpop.f32.mrb[0].mxu0
      %1709 = vmatprep.mubr.bf16.mxu0 0
      %1710 = vmatmul.mubr.bf16.gmra.mrb[0].mxu0 %v1595
      %v1711 = vpop.f32.mrb[0].mxu0
      %v1712 = vadd.f32 0.0, %v1711
      %v1713 = vpop.f32.mrb[0].mxu0
      %v1714 = vpop.f32.mrb[0].mxu0
      %v1715 = vadd.f32 0.0, %v1714
      %v1716 = vpop.f32.mrb[0].mxu0
      %1717 = vmatprep.mubr.bf16.mxu0 0
      %1718 = vmatmul.mubr.bf16.gmra.mrb[0].mxu0 %v1598
      %v1719 = vpop.f32.mrb[0].mxu0
      %v1720 = vadd.f32 0.0, %v1719
      %v1721 = vpop.f32.mrb[0].mxu0
      %v1722 = vpop.f32.mrb[0].mxu0
      %v1723 = vadd.f32 0.0, %v1722
      %v1724 = vpop.f32.mrb[0].mxu0
      %1725 = vmatprep.mubr.bf16.mxu0 0
      %1726 = vmatmul.mubr.bf16.gmra.mrb[0].mxu0 %v1601
      %v1727 = vpop.f32.mrb[0].mxu0
      %v1728 = vadd.f32 0.0, %v1727
      %v1729 = vpop.f32.mrb[0].mxu0
      %v1730 = vpop.f32.mrb[0].mxu0
      %v1731 = vadd.f32 0.0, %v1730
      %v1732 = vpop.f32.mrb[0].mxu0
      %1733 = vmatprep.mubr.bf16.mxu0 0
      %1734 = vmatmul.mubr.bf16.gmra.mrb[0].mxu0 %v1604
      %v1735 = vpop.f32.mrb[0].mxu0
      %v1736 = vadd.f32 0.0, %v1735
      %v1737 = vpop.f32.mrb[0].mxu0
      %v1738 = vpop.f32.mrb[0].mxu0
      %v1739 = vadd.f32 0.0, %v1738
      %v1740 = vpop.f32.mrb[0].mxu0
      %1741 = vmatprep.mubr.bf16.mxu0 0
      %1742 = vmatmul.mubr.bf16.gmra.mrb[0].mxu0 %v1607
      %v1743 = vpop.f32.mrb[0].mxu0
      %v1744 = vadd.f32 0.0, %v1743
      %v1745 = vpop.f32.mrb[0].mxu0
      %v1746 = vpop.f32.mrb[0].mxu0
      %v1747 = vadd.f32 0.0, %v1746
      %v1748 = vpop.f32.mrb[0].mxu0
      %1749 = vmatprep.mubr.bf16.mxu0 0
      %1750 = vmatmul.mubr.bf16.gmra.mrb[0].mxu0 %v1610
      %v1751 = vpop.f32.mrb[0].mxu0
      %v1752 = vadd.f32 0.0, %v1751
      %v1753 = vpop.f32.mrb[0].mxu0
      %v1754 = vpop.f32.mrb[0].mxu0
      %v1755 = vadd.f32 0.0, %v1754
      %v1756 = vpop.f32.mrb[0].mxu0
      %1757 = vmatprep.mubr.bf16.mxu0 0
      %1758 = vmatmul.mubr.bf16.gmra.mrb[0].mxu0 %v1613
      %v1759 = vpop.f32.mrb[0].mxu0
      %v1760 = vadd.f32 0.0, %v1759
      %v1761 = vpop.f32.mrb[0].mxu0
      %v1762 = vpop.f32.mrb[0].mxu0
      %v1763 = vadd.f32 0.0, %v1762
      %v1764 = vpop.f32.mrb[0].mxu0
      %1765 = vmatprep.mubr.bf16.mxu0 0
      %1766 = vmatmul.mubr.bf16.gmra.mrb[0].mxu0 %v1616
      %v1767 = vpop.f32.mrb[0].mxu0
      %v1768 = vadd.f32 0.0, %v1767
      %v1769 = vpop.f32.mrb[0].mxu0
      %v1770 = vpop.f32.mrb[0].mxu0
      %v1771 = vadd.f32 0.0, %v1770
      %v1772 = vpop.f32.mrb[0].mxu0
      %1773 = vmatprep.mubr.bf16.mxu0 0
      %1774 = vmatmul.mubr.bf16.gmra.mrb[0].mxu0 %v1619
      %v1775 = vpop.f32.mrb[0].mxu0
      %v1776 = vadd.f32 0.0, %v1775
      %v1777 = vpop.f32.mrb[0].mxu0
      %v1778 = vpop.f32.mrb[0].mxu0
      %v1779 = vadd.f32 0.0, %v1778
      %v1780 = vpop.f32.mrb[0].mxu0
      %1781 = vdwg.mxu0
      %s1782 = scalar_lea.vmem %s3, 48
      %v1783 = vld [vmem:[%s1782] sm:$0xf]
      %v1784 = vld [vmem:[%s1782 + $0x4] sm:$0xf]
      %v1785 = vld [vmem:[%s1782 + $0x8] sm:$0xf]
      %v1786 = vld [vmem:[%s1782 + $0xc] sm:$0xf]
      %v1787 = vld [vmem:[%s1782 + $0x10] sm:$0xf]
      %v1788 = vld [vmem:[%s1782 + $0x14] sm:$0xf]
      %v1789 = vld [vmem:[%s1782 + $0x18] sm:$0xf]
      %v1790 = vld [vmem:[%s1782 + $0x1c] sm:$0xf]
      %v1791 = vld [vmem:[%s1782 + $0x20] sm:$0xf]
      %v1792 = vld [vmem:[%s1782 + $0x24] sm:$0xf]
      %v1793 = vld [vmem:[%s1782 + $0x28] sm:$0xf]
      %v1794 = vld [vmem:[%s1782 + $0x2c] sm:$0xf]
      %s1795 = scalar_lea.vmem %s3, 96
      %v1796 = vld [vmem:[%s1795] sm:$0xf]
      %v1797 = vld [vmem:[%s1795 + $0x4] sm:$0xf]
      %v1798 = vld [vmem:[%s1795 + $0x8] sm:$0xf]
      %v1799 = vld [vmem:[%s1795 + $0xc] sm:$0xf]
      %v1800 = vld [vmem:[%s1795 + $0x10] sm:$0xf]
      %v1801 = vld [vmem:[%s1795 + $0x14] sm:$0xf]
      %v1802 = vld [vmem:[%s1795 + $0x18] sm:$0xf]
      %v1803 = vld [vmem:[%s1795 + $0x1c] sm:$0xf]
      %v1804 = vld [vmem:[%s1795 + $0x20] sm:$0xf]
      %v1805 = vld [vmem:[%s1795 + $0x24] sm:$0xf]
      %v1806 = vld [vmem:[%s1795 + $0x28] sm:$0xf]
      %v1807 = vld [vmem:[%s1795 + $0x2c] sm:$0xf]
      %v1820 = vunpack.c.l.b16 %v1796
      %v1821 = vunpack.c.l.b16 %v1797
      %v1822 = vunpack.c.l.b16 %v1798
      %v1823 = vunpack.c.l.b16 %v1799
      %v1824 = vunpack.c.l.b16 %v1800
      %v1825 = vunpack.c.l.b16 %v1801
      %v1826 = vunpack.c.l.b16 %v1802
      %v1827 = vunpack.c.l.b16 %v1803
      %v1828 = vunpack.c.l.b16 %v1804
      %v1829 = vunpack.c.l.b16 %v1805
      %v1830 = vunpack.c.l.b16 %v1806
      %v1831 = vunpack.c.l.b16 %v1807
      %v1832 = vpack.c.b16 %v1821, %v1820
      %v1833 = vpack.c.b16 %v1823, %v1822
      %v1834 = vpack.c.b16 %v1825, %v1824
      %v1835 = vpack.c.b16 %v1827, %v1826
      %v1836 = vpack.c.b16 %v1829, %v1828
      %v1837 = vpack.c.b16 %v1831, %v1830
      %1844 = vmatprep.subr.bf16.mxu0 0
      %1845 = vmatpush1.bf16.msra.mxu0 %v1832
      %1846 = vmatprep.subr.bf16.mxu0 0
      %1847 = vmatpush1.bf16.msra.mxu0 %v1833
      %1848 = vmatprep.subr.bf16.mxu0 0
      %1849 = vmatpush1.bf16.msra.mxu0 %v1834
      %1850 = vmatprep.subr.bf16.mxu0 0
      %1851 = vmatpush1.bf16.msra.mxu0 %v1835
      %1852 = vmatprep.subr.bf16.mxu0 0
      %1853 = vmatpush1.bf16.msra.mxu0 %v1836
      %1854 = vmatprep.subr.bf16.mxu0 0
      %1855 = vmatpush1.bf16.msra.mxu0 %v1837
      %1856 = vmatprep.subr.bf16.mxu0 0
      %1857 = vmatpush1.bf16.msra.mxu0 0
      %1858 = vmatprep.subr.bf16.mxu0 0
      %1859 = vmatpush1.bf16.msra.mxu0 0
      %1860 = vmatprep.subr.bf16.mxu0 0
      %1861 = vmatpush1.bf16.msra.mxu0 0
      %1862 = vmatprep.subr.bf16.mxu0 0
      %1863 = vmatpush1.bf16.msra.mxu0 0
      %1864 = vmatprep.subr.bf16.mxu0 0
      %1865 = vmatpush1.bf16.msra.mxu0 0
      %1866 = vmatprep.subr.bf16.mxu0 0
      %1867 = vmatpush1.bf16.msra.mxu0 0
      %1868 = vmatprep.subr.bf16.mxu0 0
      %1869 = vmatpush1.bf16.msra.mxu0 0
      %1870 = vmatprep.subr.bf16.mxu0 0
      %1871 = vmatpush1.bf16.msra.mxu0 0
      %1872 = vmatprep.subr.bf16.mxu0 0
      %1873 = vmatpush1.bf16.msra.mxu0 0
      %1874 = vmatprep.subr.bf16.mxu0 0
      %1875 = vmatpush1.bf16.msra.mxu0 0
      %1876 = vmatprep.mubr.bf16.mxu0 0
      %1877 = vmatmul.mubr.bf16.gmra.mrb[0].mxu0 %v1574
      %v1878 = vpop.f32.mrb[0].mxu0
      %v1879 = vadd.f32 0.0, %v1878
      %v1880 = vpop.f32.mrb[0].mxu0
      %v1881 = vpop.f32.mrb[0].mxu0
      %v1882 = vadd.f32 0.0, %v1881
      %v1883 = vpop.f32.mrb[0].mxu0
      %1884 = vmatprep.mubr.bf16.mxu0 0
      %1885 = vmatmul.mubr.bf16.gmra.mrb[0].mxu0 %v1577
      %v1886 = vpop.f32.mrb[0].mxu0
      %v1887 = vadd.f32 0.0, %v1886
      %v1888 = vpop.f32.mrb[0].mxu0
      %v1889 = vpop.f32.mrb[0].mxu0
      %v1890 = vadd.f32 0.0, %v1889
      %v1891 = vpop.f32.mrb[0].mxu0
      %1892 = vmatprep.mubr.bf16.mxu0 0
      %1893 = vmatmul.mubr.bf16.gmra.mrb[0].mxu0 %v1580
      %v1894 = vpop.f32.mrb[0].mxu0
      %v1895 = vadd.f32 0.0, %v1894
      %v1896 = vpop.f32.mrb[0].mxu0
      %v1897 = vpop.f32.mrb[0].mxu0
      %v1898 = vadd.f32 0.0, %v1897
      %v1899 = vpop.f32.mrb[0].mxu0
      %1900 = vmatprep.mubr.bf16.mxu0 0
      %1901 = vmatmul.mubr.bf16.gmra.mrb[0].mxu0 %v1583
      %v1902 = vpop.f32.mrb[0].mxu0
      %v1903 = vadd.f32 0.0, %v1902
      %v1904 = vpop.f32.mrb[0].mxu0
      %v1905 = vpop.f32.mrb[0].mxu0
      %v1906 = vadd.f32 0.0, %v1905
      %v1907 = vpop.f32.mrb[0].mxu0
      %1908 = vmatprep.mubr.bf16.mxu0 0
      %1909 = vmatmul.mubr.bf16.gmra.mrb[0].mxu0 %v1586
      %v1910 = vpop.f32.mrb[0].mxu0
      %v1911 = vadd.f32 0.0, %v1910
      %v1912 = vpop.f32.mrb[0].mxu0
      %v1913 = vpop.f32.mrb[0].mxu0
      %v1914 = vadd.f32 0.0, %v1913
      %v1915 = vpop.f32.mrb[0].mxu0
      %1916 = vmatprep.mubr.bf16.mxu0 0
      %1917 = vmatmul.mubr.bf16.gmra.mrb[0].mxu0 %v1589
      %v1918 = vpop.f32.mrb[0].mxu0
      %v1919 = vadd.f32 0.0, %v1918
      %v1920 = vpop.f32.mrb[0].mxu0
      %v1921 = vpop.f32.mrb[0].mxu0
      %v1922 = vadd.f32 0.0, %v1921
      %v1923 = vpop.f32.mrb[0].mxu0
      %1924 = vmatprep.mubr.bf16.mxu0 0
      %1925 = vmatmul.mubr.bf16.gmra.mrb[0].mxu0 %v1592
      %v1926 = vpop.f32.mrb[0].mxu0
      %v1927 = vadd.f32 0.0, %v1926
      %v1928 = vpop.f32.mrb[0].mxu0
      %v1929 = vpop.f32.mrb[0].mxu0
      %v1930 = vadd.f32 0.0, %v1929
      %v1931 = vpop.f32.mrb[0].mxu0
      %1932 = vmatprep.mubr.bf16.mxu0 0
      %1933 = vmatmul.mubr.bf16.gmra.mrb[0].mxu0 %v1595
      %v1934 = vpop.f32.mrb[0].mxu0
      %v1935 = vadd.f32 0.0, %v1934
      %v1936 = vpop.f32.mrb[0].mxu0
      %v1937 = vpop.f32.mrb[0].mxu0
      %v1938 = vadd.f32 0.0, %v1937
      %v1939 = vpop.f32.mrb[0].mxu0
      %1940 = vmatprep.mubr.bf16.mxu0 0
      %1941 = vmatmul.mubr.bf16.gmra.mrb[0].mxu0 %v1598
      %v1942 = vpop.f32.mrb[0].mxu0
      %v1943 = vadd.f32 0.0, %v1942
      %v1944 = vpop.f32.mrb[0].mxu0
      %v1945 = vpop.f32.mrb[0].mxu0
      %v1946 = vadd.f32 0.0, %v1945
      %v1947 = vpop.f32.mrb[0].mxu0
      %1948 = vmatprep.mubr.bf16.mxu0 0
      %1949 = vmatmul.mubr.bf16.gmra.mrb[0].mxu0 %v1601
      %v1950 = vpop.f32.mrb[0].mxu0
      %v1951 = vadd.f32 0.0, %v1950
      %v1952 = vpop.f32.mrb[0].mxu0
      %v1953 = vpop.f32.mrb[0].mxu0
      %v1954 = vadd.f32 0.0, %v1953
      %v1955 = vpop.f32.mrb[0].mxu0
      %1956 = vmatprep.mubr.bf16.mxu0 0
      %1957 = vmatmul.mubr.bf16.gmra.mrb[0].mxu0 %v1604
      %v1958 = vpop.f32.mrb[0].mxu0
      %v1959 = vadd.f32 0.0, %v1958
      %v1960 = vpop.f32.mrb[0].mxu0
      %v1961 = vpop.f32.mrb[0].mxu0
      %v1962 = vadd.f32 0.0, %v1961
      %v1963 = vpop.f32.mrb[0].mxu0
      %1964 = vmatprep.mubr.bf16.mxu0 0
      %1965 = vmatmul.mubr.bf16.gmra.mrb[0].mxu0 %v1607
      %v1966 = vpop.f32.mrb[0].mxu0
      %v1967 = vadd.f32 0.0, %v1966
      %v1968 = vpop.f32.mrb[0].mxu0
      %v1969 = vpop.f32.mrb[0].mxu0
      %v1970 = vadd.f32 0.0, %v1969
      %v1971 = vpop.f32.mrb[0].mxu0
      %1972 = vmatprep.mubr.bf16.mxu0 0
      %1973 = vmatmul.mubr.bf16.gmra.mrb[0].mxu0 %v1610
      %v1974 = vpop.f32.mrb[0].mxu0
      %v1975 = vadd.f32 0.0, %v1974
      %v1976 = vpop.f32.mrb[0].mxu0
      %v1977 = vpop.f32.mrb[0].mxu0
      %v1978 = vadd.f32 0.0, %v1977
      %v1979 = vpop.f32.mrb[0].mxu0
      %1980 = vmatprep.mubr.bf16.mxu0 0
      %1981 = vmatmul.mubr.bf16.gmra.mrb[0].mxu0 %v1613
      %v1982 = vpop.f32.mrb[0].mxu0
      %v1983 = vadd.f32 0.0, %v1982
      %v1984 = vpop.f32.mrb[0].mxu0
      %v1985 = vpop.f32.mrb[0].mxu0
      %v1986 = vadd.f32 0.0, %v1985
      %v1987 = vpop.f32.mrb[0].mxu0
      %1988 = vmatprep.mubr.bf16.mxu0 0
      %1989 = vmatmul.mubr.bf16.gmra.mrb[0].mxu0 %v1616
      %v1990 = vpop.f32.mrb[0].mxu0
      %v1991 = vadd.f32 0.0, %v1990
      %v1992 = vpop.f32.mrb[0].mxu0
      %v1993 = vpop.f32.mrb[0].mxu0
      %v1994 = vadd.f32 0.0, %v1993
      %v1995 = vpop.f32.mrb[0].mxu0
      %1996 = vmatprep.mubr.bf16.mxu0 0
      %1997 = vmatmul.mubr.bf16.gmra.mrb[0].mxu0 %v1619
      %v1998 = vpop.f32.mrb[0].mxu0
      %v1999 = vadd.f32 0.0, %v1998
      %v2000 = vpop.f32.mrb[0].mxu0
      %v2001 = vpop.f32.mrb[0].mxu0
      %v2002 = vadd.f32 0.0, %v2001
      %v2003 = vpop.f32.mrb[0].mxu0
      %2004 = vdwg.mxu0
      %vm2005 = vcmp.ge.s32.totalorder %v1492, 1
      %vm2006 = vcmp.ge.s32.totalorder %v1493, 1
      %vm2007 = vcmp.ge.s32.totalorder %v1494, 1
      %vm2008 = vcmp.ge.s32.totalorder %v1495, 1
      %vm2009 = vcmp.ge.s32.totalorder %v1496, 1
      %vm2010 = vcmp.ge.s32.totalorder %v1497, 1
      %vm2011 = vcmp.ge.s32.totalorder %v1498, 1
      %vm2012 = vcmp.ge.s32.totalorder %v1499, 1
      %vm2013 = vcmp.ge.s32.totalorder %v1500, 1
      %vm2014 = vcmp.ge.s32.totalorder %v1501, 1
      %vm2015 = vcmp.ge.s32.totalorder %v1502, 1
      %vm2016 = vcmp.ge.s32.totalorder %v1503, 1
      %vm2017 = vcmp.ge.s32.totalorder %v1504, 1
      %vm2018 = vcmp.ge.s32.totalorder %v1505, 1
      %vm2019 = vcmp.ge.s32.totalorder %v1506, 1
      %vm2020 = vcmp.ge.s32.totalorder %v1507, 1
      %vm2021 = vcmp.ge.s32.totalorder %v1508, 1
      %vm2022 = vcmp.ge.s32.totalorder %v1509, 1
      %vm2023 = vcmp.ge.s32.totalorder %v1510, 1
      %vm2024 = vcmp.ge.s32.totalorder %v1511, 1
      %vm2025 = vcmp.ge.s32.totalorder %v1512, 1
      %vm2026 = vcmp.ge.s32.totalorder %v1513, 1
      %vm2027 = vcmp.ge.s32.totalorder %v1514, 1
      %vm2028 = vcmp.ge.s32.totalorder %v1515, 1
      %vm2029 = vcmp.ge.s32.totalorder %v1516, 1
      %vm2030 = vcmp.ge.s32.totalorder %v1517, 1
      %vm2031 = vcmp.ge.s32.totalorder %v1518, 1
      %vm2032 = vcmp.ge.s32.totalorder %v1519, 1
      %vm2033 = vcmp.ge.s32.totalorder %v1520, 1
      %vm2034 = vcmp.ge.s32.totalorder %v1521, 1
      %vm2035 = vcmp.ge.s32.totalorder %v1522, 1
      %vm2036 = vcmp.ge.s32.totalorder %v1523, 1
      %v2037 = vrot.slane %v1656, 7
      %v2038 = vrot.slane %v1659, 7
      %v2039 = vrot.slane %v1664, 7
      %v2040 = vrot.slane %v1667, 7
      %v2041 = vrot.slane %v1672, 7
      %v2042 = vrot.slane %v1675, 7
      %v2043 = vrot.slane %v1680, 7
      %v2044 = vrot.slane %v1683, 7
      %v2045 = vrot.slane %v1688, 7
      %v2046 = vrot.slane %v1691, 7
      %v2047 = vrot.slane %v1696, 7
      %v2048 = vrot.slane %v1699, 7
      %v2049 = vrot.slane %v1704, 7
      %v2050 = vrot.slane %v1707, 7
      %v2051 = vrot.slane %v1712, 7
      %v2052 = vrot.slane %v1715, 7
      %v2053 = vrot.slane %v1720, 7
      %v2054 = vrot.slane %v1723, 7
      %v2055 = vrot.slane %v1728, 7
      %v2056 = vrot.slane %v1731, 7
      %v2057 = vrot.slane %v1736, 7
      %v2058 = vrot.slane %v1739, 7
      %v2059 = vrot.slane %v1744, 7
      %v2060 = vrot.slane %v1747, 7
      %v2061 = vrot.slane %v1752, 7
      %v2062 = vrot.slane %v1755, 7
      %v2063 = vrot.slane %v1760, 7
      %v2064 = vrot.slane %v1763, 7
      %v2065 = vrot.slane %v1768, 7
      %v2066 = vrot.slane %v1771, 7
      %v2067 = vrot.slane %v1776, 7
      %v2068 = vrot.slane %v1779, 7
      %vm2069 = vcmp.lt.s32.totalorder %v1108, 1
      %v2070 = vsel %vm2069, %v2067, %v2068
      %v2071 = vsel %vm2069, %v2066, %v2067
      %v2072 = vsel %vm2069, %v2065, %v2066
      %v2073 = vsel %vm2069, %v2064, %v2065
      %v2074 = vsel %vm2069, %v2063, %v2064
      %v2075 = vsel %vm2069, %v2062, %v2063
      %v2076 = vsel %vm2069, %v2061, %v2062
      %v2077 = vsel %vm2069, %v2060, %v2061
      %v2078 = vsel %vm2069, %v2059, %v2060
      %v2079 = vsel %vm2069, %v2058, %v2059
      %v2080 = vsel %vm2069, %v2057, %v2058
      %v2081 = vsel %vm2069, %v2056, %v2057
      %v2082 = vsel %vm2069, %v2055, %v2056
      %v2083 = vsel %vm2069, %v2054, %v2055
      %v2084 = vsel %vm2069, %v2053, %v2054
      %v2085 = vsel %vm2069, %v2052, %v2053
      %v2086 = vsel %vm2069, %v2051, %v2052
      %v2087 = vsel %vm2069, %v2050, %v2051
      %v2088 = vsel %vm2069, %v2049, %v2050
      %v2089 = vsel %vm2069, %v2048, %v2049
      %v2090 = vsel %vm2069, %v2047, %v2048
      %v2091 = vsel %vm2069, %v2046, %v2047
      %v2092 = vsel %vm2069, %v2045, %v2046
      %v2093 = vsel %vm2069, %v2044, %v2045
      %v2094 = vsel %vm2069, %v2043, %v2044
      %v2095 = vsel %vm2069, %v2042, %v2043
      %v2096 = vsel %vm2069, %v2041, %v2042
      %v2097 = vsel %vm2069, %v2040, %v2041
      %v2098 = vsel %vm2069, %v2039, %v2040
      %v2099 = vsel %vm2069, %v2038, %v2039
      %v2100 = vsel %vm2069, %v2037, %v2038
      %v2101 = vsel %vm2069, %v2068, %v2037
      %v2102 = vsel %vm2005, 1, 0
      %v2103 = vsel %vm2006, 1, 0
      %v2104 = vsel %vm2007, 1, 0
      %v2105 = vsel %vm2008, 1, 0
      %v2106 = vsel %vm2009, 1, 0
      %v2107 = vsel %vm2010, 1, 0
      %v2108 = vsel %vm2011, 1, 0
      %v2109 = vsel %vm2012, 1, 0
      %v2110 = vsel %vm2013, 1, 0
      %v2111 = vsel %vm2014, 1, 0
      %v2112 = vsel %vm2015, 1, 0
      %v2113 = vsel %vm2016, 1, 0
      %v2114 = vsel %vm2017, 1, 0
      %v2115 = vsel %vm2018, 1, 0
      %v2116 = vsel %vm2019, 1, 0
      %v2117 = vsel %vm2020, 1, 0
      %v2118 = vsel %vm2021, 1, 0
      %v2119 = vsel %vm2022, 1, 0
      %v2120 = vsel %vm2023, 1, 0
      %v2121 = vsel %vm2024, 1, 0
      %v2122 = vsel %vm2025, 1, 0
      %v2123 = vsel %vm2026, 1, 0
      %v2124 = vsel %vm2027, 1, 0
      %v2125 = vsel %vm2028, 1, 0
      %v2126 = vsel %vm2029, 1, 0
      %v2127 = vsel %vm2030, 1, 0
      %v2128 = vsel %vm2031, 1, 0
      %v2129 = vsel %vm2032, 1, 0
      %v2130 = vsel %vm2033, 1, 0
      %v2131 = vsel %vm2034, 1, 0
      %v2132 = vsel %vm2035, 1, 0
      %v2133 = vsel %vm2036, 1, 0
      %vm2134 = vcmp.eq.s32.totalorder %v2102, 1
      %vm2135 = vcmp.eq.s32.totalorder %v2103, 1
      %vm2136 = vcmp.eq.s32.totalorder %v2104, 1
      %vm2137 = vcmp.eq.s32.totalorder %v2105, 1
      %vm2138 = vcmp.eq.s32.totalorder %v2106, 1
      %vm2139 = vcmp.eq.s32.totalorder %v2107, 1
      %vm2140 = vcmp.eq.s32.totalorder %v2108, 1
      %vm2141 = vcmp.eq.s32.totalorder %v2109, 1
      %vm2142 = vcmp.eq.s32.totalorder %v2110, 1
      %vm2143 = vcmp.eq.s32.totalorder %v2111, 1
      %vm2144 = vcmp.eq.s32.totalorder %v2112, 1
      %vm2145 = vcmp.eq.s32.totalorder %v2113, 1
      %vm2146 = vcmp.eq.s32.totalorder %v2114, 1
      %vm2147 = vcmp.eq.s32.totalorder %v2115, 1
      %vm2148 = vcmp.eq.s32.totalorder %v2116, 1
      %vm2149 = vcmp.eq.s32.totalorder %v2117, 1
      %vm2150 = vcmp.eq.s32.totalorder %v2118, 1
      %vm2151 = vcmp.eq.s32.totalorder %v2119, 1
      %vm2152 = vcmp.eq.s32.totalorder %v2120, 1
      %vm2153 = vcmp.eq.s32.totalorder %v2121, 1
      %vm2154 = vcmp.eq.s32.totalorder %v2122, 1
      %vm2155 = vcmp.eq.s32.totalorder %v2123, 1
      %vm2156 = vcmp.eq.s32.totalorder %v2124, 1
      %vm2157 = vcmp.eq.s32.totalorder %v2125, 1
      %vm2158 = vcmp.eq.s32.totalorder %v2126, 1
      %vm2159 = vcmp.eq.s32.totalorder %v2127, 1
      %vm2160 = vcmp.eq.s32.totalorder %v2128, 1
      %vm2161 = vcmp.eq.s32.totalorder %v2129, 1
      %vm2162 = vcmp.eq.s32.totalorder %v2130, 1
      %vm2163 = vcmp.eq.s32.totalorder %v2131, 1
      %vm2164 = vcmp.eq.s32.totalorder %v2132, 1
      %vm2165 = vcmp.eq.s32.totalorder %v2133, 1
      %v2166 = vsel %vm2134, %v2101, 0.0
      %v2167 = vsel %vm2135, %v2100, 0.0
      %v2168 = vsel %vm2136, %v2099, 0.0
      %v2169 = vsel %vm2137, %v2098, 0.0
      %v2170 = vsel %vm2138, %v2097, 0.0
      %v2171 = vsel %vm2139, %v2096, 0.0
      %v2172 = vsel %vm2140, %v2095, 0.0
      %v2173 = vsel %vm2141, %v2094, 0.0
      %v2174 = vsel %vm2142, %v2093, 0.0
      %v2175 = vsel %vm2143, %v2092, 0.0
      %v2176 = vsel %vm2144, %v2091, 0.0
      %v2177 = vsel %vm2145, %v2090, 0.0
      %v2178 = vsel %vm2146, %v2089, 0.0
      %v2179 = vsel %vm2147, %v2088, 0.0
      %v2180 = vsel %vm2148, %v2087, 0.0
      %v2181 = vsel %vm2149, %v2086, 0.0
      %v2182 = vsel %vm2150, %v2085, 0.0
      %v2183 = vsel %vm2151, %v2084, 0.0
      %v2184 = vsel %vm2152, %v2083, 0.0
      %v2185 = vsel %vm2153, %v2082, 0.0
      %v2186 = vsel %vm2154, %v2081, 0.0
      %v2187 = vsel %vm2155, %v2080, 0.0
      %v2188 = vsel %vm2156, %v2079, 0.0
      %v2189 = vsel %vm2157, %v2078, 0.0
      %v2190 = vsel %vm2158, %v2077, 0.0
      %v2191 = vsel %vm2159, %v2076, 0.0
      %v2192 = vsel %vm2160, %v2075, 0.0
      %v2193 = vsel %vm2161, %v2074, 0.0
      %v2194 = vsel %vm2162, %v2073, 0.0
      %v2195 = vsel %vm2163, %v2072, 0.0
      %v2196 = vsel %vm2164, %v2071, 0.0
      %v2197 = vsel %vm2165, %v2070, 0.0
      %v2210 = vunpack.c.l.b16 %v1783
      %v2211 = vunpack.c.l.b16 %v1784
      %v2212 = vunpack.c.l.b16 %v1785
      %v2213 = vunpack.c.l.b16 %v1786
      %v2214 = vunpack.c.l.b16 %v1787
      %v2215 = vunpack.c.l.b16 %v1788
      %v2216 = vunpack.c.l.b16 %v1789
      %v2217 = vunpack.c.l.b16 %v1790
      %v2218 = vunpack.c.l.b16 %v1791
      %v2219 = vunpack.c.l.b16 %v1792
      %v2220 = vunpack.c.l.b16 %v1793
      %v2221 = vunpack.c.l.b16 %v1794
      %v2222 = vpack.c.b16 %v2211, %v2210
      %v2223 = vpack.c.b16 %v2213, %v2212
      %v2224 = vpack.c.b16 %v2215, %v2214
      %v2225 = vpack.c.b16 %v2217, %v2216
      %v2226 = vpack.c.b16 %v2219, %v2218
      %v2227 = vpack.c.b16 %v2221, %v2220
      %2234 = vmatprep.subr.bf16.mxu0 0
      %2235 = vmatpush1.bf16.msra.mxu0 %v2222
      %2236 = vmatprep.subr.bf16.mxu0 0
      %2237 = vmatpush1.bf16.msra.mxu0 %v2223
      %2238 = vmatprep.subr.bf16.mxu0 0
      %2239 = vmatpush1.bf16.msra.mxu0 %v2224
      %2240 = vmatprep.subr.bf16.mxu0 0
      %2241 = vmatpush1.bf16.msra.mxu0 %v2225
      %2242 = vmatprep.subr.bf16.mxu0 0
      %2243 = vmatpush1.bf16.msra.mxu0 %v2226
      %2244 = vmatprep.subr.bf16.mxu0 0
      %2245 = vmatpush1.bf16.msra.mxu0 %v2227
      %2246 = vmatprep.subr.bf16.mxu0 0
      %2247 = vmatpush1.bf16.msra.mxu0 0
      %2248 = vmatprep.subr.bf16.mxu0 0
      %2249 = vmatpush1.bf16.msra.mxu0 0
      %2250 = vmatprep.subr.bf16.mxu0 0
      %2251 = vmatpush1.bf16.msra.mxu0 0
      %2252 = vmatprep.subr.bf16.mxu0 0
      %2253 = vmatpush1.bf16.msra.mxu0 0
      %2254 = vmatprep.subr.bf16.mxu0 0
      %2255 = vmatpush1.bf16.msra.mxu0 0
      %2256 = vmatprep.subr.bf16.mxu0 0
      %2257 = vmatpush1.bf16.msra.mxu0 0
      %2258 = vmatprep.subr.bf16.mxu0 0
      %2259 = vmatpush1.bf16.msra.mxu0 0
      %2260 = vmatprep.subr.bf16.mxu0 0
      %2261 = vmatpush1.bf16.msra.mxu0 0
      %2262 = vmatprep.subr.bf16.mxu0 0
      %2263 = vmatpush1.bf16.msra.mxu0 0
      %2264 = vmatprep.subr.bf16.mxu0 0
      %2265 = vmatpush1.bf16.msra.mxu0 0
      %2266 = vmatprep.mubr.bf16.mxu0 0
      %2267 = vmatmul.mubr.bf16.gmra.mrb[0].mxu0 %v1574
      %v2268 = vpop.f32.mrb[0].mxu0
      %v2269 = vadd.f32 %v2166, %v2268
      %v2270 = vpop.f32.mrb[0].mxu0
      %v2271 = vpop.f32.mrb[0].mxu0
      %v2272 = vadd.f32 %v2167, %v2271
      %v2273 = vpop.f32.mrb[0].mxu0
      %2274 = vmatprep.mubr.bf16.mxu0 0
      %2275 = vmatmul.mubr.bf16.gmra.mrb[0].mxu0 %v1577
      %v2276 = vpop.f32.mrb[0].mxu0
      %v2277 = vadd.f32 %v2168, %v2276
      %v2278 = vpop.f32.mrb[0].mxu0
      %v2279 = vpop.f32.mrb[0].mxu0
      %v2280 = vadd.f32 %v2169, %v2279
      %v2281 = vpop.f32.mrb[0].mxu0
      %2282 = vmatprep.mubr.bf16.mxu0 0
      %2283 = vmatmul.mubr.bf16.gmra.mrb[0].mxu0 %v1580
      %v2284 = vpop.f32.mrb[0].mxu0
      %v2285 = vadd.f32 %v2170, %v2284
      %v2286 = vpop.f32.mrb[0].mxu0
      %v2287 = vpop.f32.mrb[0].mxu0
      %v2288 = vadd.f32 %v2171, %v2287
      %v2289 = vpop.f32.mrb[0].mxu0
      %2290 = vmatprep.mubr.bf16.mxu0 0
      %2291 = vmatmul.mubr.bf16.gmra.mrb[0].mxu0 %v1583
      %v2292 = vpop.f32.mrb[0].mxu0
      %v2293 = vadd.f32 %v2172, %v2292
      %v2294 = vpop.f32.mrb[0].mxu0
      %v2295 = vpop.f32.mrb[0].mxu0
      %v2296 = vadd.f32 %v2173, %v2295
      %v2297 = vpop.f32.mrb[0].mxu0
      %2298 = vmatprep.mubr.bf16.mxu0 0
      %2299 = vmatmul.mubr.bf16.gmra.mrb[0].mxu0 %v1586
      %v2300 = vpop.f32.mrb[0].mxu0
      %v2301 = vadd.f32 %v2174, %v2300
      %v2302 = vpop.f32.mrb[0].mxu0
      %v2303 = vpop.f32.mrb[0].mxu0
      %v2304 = vadd.f32 %v2175, %v2303
      %v2305 = vpop.f32.mrb[0].mxu0
      %2306 = vmatprep.mubr.bf16.mxu0 0
      %2307 = vmatmul.mubr.bf16.gmra.mrb[0].mxu0 %v1589
      %v2308 = vpop.f32.mrb[0].mxu0
      %v2309 = vadd.f32 %v2176, %v2308
      %v2310 = vpop.f32.mrb[0].mxu0
      %v2311 = vpop.f32.mrb[0].mxu0
      %v2312 = vadd.f32 %v2177, %v2311
      %v2313 = vpop.f32.mrb[0].mxu0
      %2314 = vmatprep.mubr.bf16.mxu0 0
      %2315 = vmatmul.mubr.bf16.gmra.mrb[0].mxu0 %v1592
      %v2316 = vpop.f32.mrb[0].mxu0
      %v2317 = vadd.f32 %v2178, %v2316
      %v2318 = vpop.f32.mrb[0].mxu0
      %v2319 = vpop.f32.mrb[0].mxu0
      %v2320 = vadd.f32 %v2179, %v2319
      %v2321 = vpop.f32.mrb[0].mxu0
      %2322 = vmatprep.mubr.bf16.mxu0 0
      %2323 = vmatmul.mubr.bf16.gmra.mrb[0].mxu0 %v1595
      %v2324 = vpop.f32.mrb[0].mxu0
      %v2325 = vadd.f32 %v2180, %v2324
      %v2326 = vpop.f32.mrb[0].mxu0
      %v2327 = vpop.f32.mrb[0].mxu0
      %v2328 = vadd.f32 %v2181, %v2327
      %v2329 = vpop.f32.mrb[0].mxu0
      %2330 = vmatprep.mubr.bf16.mxu0 0
      %2331 = vmatmul.mubr.bf16.gmra.mrb[0].mxu0 %v1598
      %v2332 = vpop.f32.mrb[0].mxu0
      %v2333 = vadd.f32 %v2182, %v2332
      %v2334 = vpop.f32.mrb[0].mxu0
      %v2335 = vpop.f32.mrb[0].mxu0
      %v2336 = vadd.f32 %v2183, %v2335
      %v2337 = vpop.f32.mrb[0].mxu0
      %2338 = vmatprep.mubr.bf16.mxu0 0
      %2339 = vmatmul.mubr.bf16.gmra.mrb[0].mxu0 %v1601
      %v2340 = vpop.f32.mrb[0].mxu0
      %v2341 = vadd.f32 %v2184, %v2340
      %v2342 = vpop.f32.mrb[0].mxu0
      %v2343 = vpop.f32.mrb[0].mxu0
      %v2344 = vadd.f32 %v2185, %v2343
      %v2345 = vpop.f32.mrb[0].mxu0
      %2346 = vmatprep.mubr.bf16.mxu0 0
      %2347 = vmatmul.mubr.bf16.gmra.mrb[0].mxu0 %v1604
      %v2348 = vpop.f32.mrb[0].mxu0
      %v2349 = vadd.f32 %v2186, %v2348
      %v2350 = vpop.f32.mrb[0].mxu0
      %v2351 = vpop.f32.mrb[0].mxu0
      %v2352 = vadd.f32 %v2187, %v2351
      %v2353 = vpop.f32.mrb[0].mxu0
      %2354 = vmatprep.mubr.bf16.mxu0 0
      %2355 = vmatmul.mubr.bf16.gmra.mrb[0].mxu0 %v1607
      %v2356 = vpop.f32.mrb[0].mxu0
      %v2357 = vadd.f32 %v2188, %v2356
      %v2358 = vpop.f32.mrb[0].mxu0
      %v2359 = vpop.f32.mrb[0].mxu0
      %v2360 = vadd.f32 %v2189, %v2359
      %v2361 = vpop.f32.mrb[0].mxu0
      %2362 = vmatprep.mubr.bf16.mxu0 0
      %2363 = vmatmul.mubr.bf16.gmra.mrb[0].mxu0 %v1610
      %v2364 = vpop.f32.mrb[0].mxu0
      %v2365 = vadd.f32 %v2190, %v2364
      %v2366 = vpop.f32.mrb[0].mxu0
      %v2367 = vpop.f32.mrb[0].mxu0
      %v2368 = vadd.f32 %v2191, %v2367
      %v2369 = vpop.f32.mrb[0].mxu0
      %2370 = vmatprep.mubr.bf16.mxu0 0
      %2371 = vmatmul.mubr.bf16.gmra.mrb[0].mxu0 %v1613
      %v2372 = vpop.f32.mrb[0].mxu0
      %v2373 = vadd.f32 %v2192, %v2372
      %v2374 = vpop.f32.mrb[0].mxu0
      %v2375 = vpop.f32.mrb[0].mxu0
      %v2376 = vadd.f32 %v2193, %v2375
      %v2377 = vpop.f32.mrb[0].mxu0
      %2378 = vmatprep.mubr.bf16.mxu0 0
      %2379 = vmatmul.mubr.bf16.gmra.mrb[0].mxu0 %v1616
      %v2380 = vpop.f32.mrb[0].mxu0
      %v2381 = vadd.f32 %v2194, %v2380
      %v2382 = vpop.f32.mrb[0].mxu0
      %v2383 = vpop.f32.mrb[0].mxu0
      %v2384 = vadd.f32 %v2195, %v2383
      %v2385 = vpop.f32.mrb[0].mxu0
      %2386 = vmatprep.mubr.bf16.mxu0 0
      %2387 = vmatmul.mubr.bf16.gmra.mrb[0].mxu0 %v1619
      %v2388 = vpop.f32.mrb[0].mxu0
      %v2389 = vadd.f32 %v2196, %v2388
      %v2390 = vpop.f32.mrb[0].mxu0
      %v2391 = vpop.f32.mrb[0].mxu0
      %v2392 = vadd.f32 %v2197, %v2391
      %v2393 = vpop.f32.mrb[0].mxu0
      %2394 = vdwg.mxu0
      %vm2395 = vcmp.le.s32.totalorder %v1492, 14
      %vm2396 = vcmp.le.s32.totalorder %v1493, 14
      %vm2397 = vcmp.le.s32.totalorder %v1494, 14
      %vm2398 = vcmp.le.s32.totalorder %v1495, 14
      %vm2399 = vcmp.le.s32.totalorder %v1496, 14
      %vm2400 = vcmp.le.s32.totalorder %v1497, 14
      %vm2401 = vcmp.le.s32.totalorder %v1498, 14
      %vm2402 = vcmp.le.s32.totalorder %v1499, 14
      %vm2403 = vcmp.le.s32.totalorder %v1500, 14
      %vm2404 = vcmp.le.s32.totalorder %v1501, 14
      %vm2405 = vcmp.le.s32.totalorder %v1502, 14
      %vm2406 = vcmp.le.s32.totalorder %v1503, 14
      %vm2407 = vcmp.le.s32.totalorder %v1504, 14
      %vm2408 = vcmp.le.s32.totalorder %v1505, 14
      %vm2409 = vcmp.le.s32.totalorder %v1506, 14
      %vm2410 = vcmp.le.s32.totalorder %v1507, 14
      %vm2411 = vcmp.le.s32.totalorder %v1508, 14
      %vm2412 = vcmp.le.s32.totalorder %v1509, 14
      %vm2413 = vcmp.le.s32.totalorder %v1510, 14
      %vm2414 = vcmp.le.s32.totalorder %v1511, 14
      %vm2415 = vcmp.le.s32.totalorder %v1512, 14
      %vm2416 = vcmp.le.s32.totalorder %v1513, 14
      %vm2417 = vcmp.le.s32.totalorder %v1514, 14
      %vm2418 = vcmp.le.s32.totalorder %v1515, 14
      %vm2419 = vcmp.le.s32.totalorder %v1516, 14
      %vm2420 = vcmp.le.s32.totalorder %v1517, 14
      %vm2421 = vcmp.le.s32.totalorder %v1518, 14
      %vm2422 = vcmp.le.s32.totalorder %v1519, 14
      %vm2423 = vcmp.le.s32.totalorder %v1520, 14
      %vm2424 = vcmp.le.s32.totalorder %v1521, 14
      %vm2425 = vcmp.le.s32.totalorder %v1522, 14
      %vm2426 = vcmp.le.s32.totalorder %v1523, 14
      %v2427 = vrot.slane %v1879, 1
      %v2428 = vrot.slane %v1882, 1
      %v2429 = vrot.slane %v1887, 1
      %v2430 = vrot.slane %v1890, 1
      %v2431 = vrot.slane %v1895, 1
      %v2432 = vrot.slane %v1898, 1
      %v2433 = vrot.slane %v1903, 1
      %v2434 = vrot.slane %v1906, 1
      %v2435 = vrot.slane %v1911, 1
      %v2436 = vrot.slane %v1914, 1
      %v2437 = vrot.slane %v1919, 1
      %v2438 = vrot.slane %v1922, 1
      %v2439 = vrot.slane %v1927, 1
      %v2440 = vrot.slane %v1930, 1
      %v2441 = vrot.slane %v1935, 1
      %v2442 = vrot.slane %v1938, 1
      %v2443 = vrot.slane %v1943, 1
      %v2444 = vrot.slane %v1946, 1
      %v2445 = vrot.slane %v1951, 1
      %v2446 = vrot.slane %v1954, 1
      %v2447 = vrot.slane %v1959, 1
      %v2448 = vrot.slane %v1962, 1
      %v2449 = vrot.slane %v1967, 1
      %v2450 = vrot.slane %v1970, 1
      %v2451 = vrot.slane %v1975, 1
      %v2452 = vrot.slane %v1978, 1
      %v2453 = vrot.slane %v1983, 1
      %v2454 = vrot.slane %v1986, 1
      %v2455 = vrot.slane %v1991, 1
      %v2456 = vrot.slane %v1994, 1
      %v2457 = vrot.slane %v1999, 1
      %v2458 = vrot.slane %v2002, 1
      %vm2459 = vcmp.lt.s32.totalorder %v1108, 7
      %v2460 = vsel %vm2459, %v2457, %v2458
      %v2461 = vsel %vm2459, %v2456, %v2457
      %v2462 = vsel %vm2459, %v2455, %v2456
      %v2463 = vsel %vm2459, %v2454, %v2455
      %v2464 = vsel %vm2459, %v2453, %v2454
      %v2465 = vsel %vm2459, %v2452, %v2453
      %v2466 = vsel %vm2459, %v2451, %v2452
      %v2467 = vsel %vm2459, %v2450, %v2451
      %v2468 = vsel %vm2459, %v2449, %v2450
      %v2469 = vsel %vm2459, %v2448, %v2449
      %v2470 = vsel %vm2459, %v2447, %v2448
      %v2471 = vsel %vm2459, %v2446, %v2447
      %v2472 = vsel %vm2459, %v2445, %v2446
      %v2473 = vsel %vm2459, %v2444, %v2445
      %v2474 = vsel %vm2459, %v2443, %v2444
      %v2475 = vsel %vm2459, %v2442, %v2443
      %v2476 = vsel %vm2459, %v2441, %v2442
      %v2477 = vsel %vm2459, %v2440, %v2441
      %v2478 = vsel %vm2459, %v2439, %v2440
      %v2479 = vsel %vm2459, %v2438, %v2439
      %v2480 = vsel %vm2459, %v2437, %v2438
      %v2481 = vsel %vm2459, %v2436, %v2437
      %v2482 = vsel %vm2459, %v2435, %v2436
      %v2483 = vsel %vm2459, %v2434, %v2435
      %v2484 = vsel %vm2459, %v2433, %v2434
      %v2485 = vsel %vm2459, %v2432, %v2433
      %v2486 = vsel %vm2459, %v2431, %v2432
      %v2487 = vsel %vm2459, %v2430, %v2431
      %v2488 = vsel %vm2459, %v2429, %v2430
      %v2489 = vsel %vm2459, %v2428, %v2429
      %v2490 = vsel %vm2459, %v2427, %v2428
      %v2491 = vsel %vm2459, %v2458, %v2427
      %v2492 = vsel %vm2395, 1, 0
      %v2493 = vsel %vm2396, 1, 0
      %v2494 = vsel %vm2397, 1, 0
      %v2495 = vsel %vm2398, 1, 0
      %v2496 = vsel %vm2399, 1, 0
      %v2497 = vsel %vm2400, 1, 0
      %v2498 = vsel %vm2401, 1, 0
      %v2499 = vsel %vm2402, 1, 0
      %v2500 = vsel %vm2403, 1, 0
      %v2501 = vsel %vm2404, 1, 0
      %v2502 = vsel %vm2405, 1, 0
      %v2503 = vsel %vm2406, 1, 0
      %v2504 = vsel %vm2407, 1, 0
      %v2505 = vsel %vm2408, 1, 0
      %v2506 = vsel %vm2409, 1, 0
      %v2507 = vsel %vm2410, 1, 0
      %v2508 = vsel %vm2411, 1, 0
      %v2509 = vsel %vm2412, 1, 0
      %v2510 = vsel %vm2413, 1, 0
      %v2511 = vsel %vm2414, 1, 0
      %v2512 = vsel %vm2415, 1, 0
      %v2513 = vsel %vm2416, 1, 0
      %v2514 = vsel %vm2417, 1, 0
      %v2515 = vsel %vm2418, 1, 0
      %v2516 = vsel %vm2419, 1, 0
      %v2517 = vsel %vm2420, 1, 0
      %v2518 = vsel %vm2421, 1, 0
      %v2519 = vsel %vm2422, 1, 0
      %v2520 = vsel %vm2423, 1, 0
      %v2521 = vsel %vm2424, 1, 0
      %v2522 = vsel %vm2425, 1, 0
      %v2523 = vsel %vm2426, 1, 0
      %vm2524 = vcmp.eq.s32.totalorder %v2492, 1
      %vm2525 = vcmp.eq.s32.totalorder %v2493, 1
      %vm2526 = vcmp.eq.s32.totalorder %v2494, 1
      %vm2527 = vcmp.eq.s32.totalorder %v2495, 1
      %vm2528 = vcmp.eq.s32.totalorder %v2496, 1
      %vm2529 = vcmp.eq.s32.totalorder %v2497, 1
      %vm2530 = vcmp.eq.s32.totalorder %v2498, 1
      %vm2531 = vcmp.eq.s32.totalorder %v2499, 1
      %vm2532 = vcmp.eq.s32.totalorder %v2500, 1
      %vm2533 = vcmp.eq.s32.totalorder %v2501, 1
      %vm2534 = vcmp.eq.s32.totalorder %v2502, 1
      %vm2535 = vcmp.eq.s32.totalorder %v2503, 1
      %vm2536 = vcmp.eq.s32.totalorder %v2504, 1
      %vm2537 = vcmp.eq.s32.totalorder %v2505, 1
      %vm2538 = vcmp.eq.s32.totalorder %v2506, 1
      %vm2539 = vcmp.eq.s32.totalorder %v2507, 1
      %vm2540 = vcmp.eq.s32.totalorder %v2508, 1
      %vm2541 = vcmp.eq.s32.totalorder %v2509, 1
      %vm2542 = vcmp.eq.s32.totalorder %v2510, 1
      %vm2543 = vcmp.eq.s32.totalorder %v2511, 1
      %vm2544 = vcmp.eq.s32.totalorder %v2512, 1
      %vm2545 = vcmp.eq.s32.totalorder %v2513, 1
      %vm2546 = vcmp.eq.s32.totalorder %v2514, 1
      %vm2547 = vcmp.eq.s32.totalorder %v2515, 1
      %vm2548 = vcmp.eq.s32.totalorder %v2516, 1
      %vm2549 = vcmp.eq.s32.totalorder %v2517, 1
      %vm2550 = vcmp.eq.s32.totalorder %v2518, 1
      %vm2551 = vcmp.eq.s32.totalorder %v2519, 1
      %vm2552 = vcmp.eq.s32.totalorder %v2520, 1
      %vm2553 = vcmp.eq.s32.totalorder %v2521, 1
      %vm2554 = vcmp.eq.s32.totalorder %v2522, 1
      %vm2555 = vcmp.eq.s32.totalorder %v2523, 1
      %v2556 = vsel %vm2524, %v2490, 0.0
      %v2557 = vsel %vm2525, %v2489, 0.0
      %v2558 = vsel %vm2526, %v2488, 0.0
      %v2559 = vsel %vm2527, %v2487, 0.0
      %v2560 = vsel %vm2528, %v2486, 0.0
      %v2561 = vsel %vm2529, %v2485, 0.0
      %v2562 = vsel %vm2530, %v2484, 0.0
      %v2563 = vsel %vm2531, %v2483, 0.0
      %v2564 = vsel %vm2532, %v2482, 0.0
      %v2565 = vsel %vm2533, %v2481, 0.0
      %v2566 = vsel %vm2534, %v2480, 0.0
      %v2567 = vsel %vm2535, %v2479, 0.0
      %v2568 = vsel %vm2536, %v2478, 0.0
      %v2569 = vsel %vm2537, %v2477, 0.0
      %v2570 = vsel %vm2538, %v2476, 0.0
      %v2571 = vsel %vm2539, %v2475, 0.0
      %v2572 = vsel %vm2540, %v2474, 0.0
      %v2573 = vsel %vm2541, %v2473, 0.0
      %v2574 = vsel %vm2542, %v2472, 0.0
      %v2575 = vsel %vm2543, %v2471, 0.0
      %v2576 = vsel %vm2544, %v2470, 0.0
      %v2577 = vsel %vm2545, %v2469, 0.0
      %v2578 = vsel %vm2546, %v2468, 0.0
      %v2579 = vsel %vm2547, %v2467, 0.0
      %v2580 = vsel %vm2548, %v2466, 0.0
      %v2581 = vsel %vm2549, %v2465, 0.0
      %v2582 = vsel %vm2550, %v2464, 0.0
      %v2583 = vsel %vm2551, %v2463, 0.0
      %v2584 = vsel %vm2552, %v2462, 0.0
      %v2585 = vsel %vm2553, %v2461, 0.0
      %v2586 = vsel %vm2554, %v2460, 0.0
      %v2587 = vsel %vm2555, %v2491, 0.0
      %v2588 = vadd.f32 %v2269, %v2556
      %v2589 = vadd.f32 %v2272, %v2557
      %v2590 = vadd.f32 %v2277, %v2558
      %v2591 = vadd.f32 %v2280, %v2559
      %v2592 = vadd.f32 %v2285, %v2560
      %v2593 = vadd.f32 %v2288, %v2561
      %v2594 = vadd.f32 %v2293, %v2562
      %v2595 = vadd.f32 %v2296, %v2563
      %v2596 = vadd.f32 %v2301, %v2564
      %v2597 = vadd.f32 %v2304, %v2565
      %v2598 = vadd.f32 %v2309, %v2566
      %v2599 = vadd.f32 %v2312, %v2567
      %v2600 = vadd.f32 %v2317, %v2568
      %v2601 = vadd.f32 %v2320, %v2569
      %v2602 = vadd.f32 %v2325, %v2570
      %v2603 = vadd.f32 %v2328, %v2571
      %v2604 = vadd.f32 %v2333, %v2572
      %v2605 = vadd.f32 %v2336, %v2573
      %v2606 = vadd.f32 %v2341, %v2574
      %v2607 = vadd.f32 %v2344, %v2575
      %v2608 = vadd.f32 %v2349, %v2576
      %v2609 = vadd.f32 %v2352, %v2577
      %v2610 = vadd.f32 %v2357, %v2578
      %v2611 = vadd.f32 %v2360, %v2579
      %v2612 = vadd.f32 %v2365, %v2580
      %v2613 = vadd.f32 %v2368, %v2581
      %v2614 = vadd.f32 %v2373, %v2582
      %v2615 = vadd.f32 %v2376, %v2583
      %v2616 = vadd.f32 %v2381, %v2584
      %v2617 = vadd.f32 %v2384, %v2585
      %v2618 = vadd.f32 %v2389, %v2586
      %v2619 = vadd.f32 %v2392, %v2587
      %v2620 = vld [vmem:[%s4] sm:$0x1]
      %v2622 = vlaneseq
      %v2623 = vshrl.u32 %v2622, 7
      %v2624 = vsub.s32 0, %v2623
      %v2625 = vrot.slane %v2620, %v2624
      %v2627 = vadd.f32 %v2588, %v2625
      %v2628 = vadd.f32 %v2589, %v2625
      %v2629 = vadd.f32 %v2590, %v2625
      %v2630 = vadd.f32 %v2591, %v2625
      %v2631 = vadd.f32 %v2592, %v2625
      %v2632 = vadd.f32 %v2593, %v2625
      %v2633 = vadd.f32 %v2594, %v2625
      %v2634 = vadd.f32 %v2595, %v2625
      %v2635 = vadd.f32 %v2596, %v2625
      %v2636 = vadd.f32 %v2597, %v2625
      %v2637 = vadd.f32 %v2598, %v2625
      %v2638 = vadd.f32 %v2599, %v2625
      %v2639 = vadd.f32 %v2600, %v2625
      %v2640 = vadd.f32 %v2601, %v2625
      %v2641 = vadd.f32 %v2602, %v2625
      %v2642 = vadd.f32 %v2603, %v2625
      %v2643 = vadd.f32 %v2604, %v2625
      %v2644 = vadd.f32 %v2605, %v2625
      %v2645 = vadd.f32 %v2606, %v2625
      %v2646 = vadd.f32 %v2607, %v2625
      %v2647 = vadd.f32 %v2608, %v2625
      %v2648 = vadd.f32 %v2609, %v2625
      %v2649 = vadd.f32 %v2610, %v2625
      %v2650 = vadd.f32 %v2611, %v2625
      %v2651 = vadd.f32 %v2612, %v2625
      %v2652 = vadd.f32 %v2613, %v2625
      %v2653 = vadd.f32 %v2614, %v2625
      %v2654 = vadd.f32 %v2615, %v2625
      %v2655 = vadd.f32 %v2616, %v2625
      %v2656 = vadd.f32 %v2617, %v2625
      %v2657 = vadd.f32 %v2618, %v2625
      %v2658 = vadd.f32 %v2619, %v2625
      %v2659 = vmax.f32 %v2627, 0.0
      %v2660 = vmax.f32 %v2628, 0.0
      %v2661 = vmax.f32 %v2629, 0.0
      %v2662 = vmax.f32 %v2630, 0.0
      %v2663 = vmax.f32 %v2631, 0.0
      %v2664 = vmax.f32 %v2632, 0.0
      %v2665 = vmax.f32 %v2633, 0.0
      %v2666 = vmax.f32 %v2634, 0.0
      %v2667 = vmax.f32 %v2635, 0.0
      %v2668 = vmax.f32 %v2636, 0.0
      %v2669 = vmax.f32 %v2637, 0.0
      %v2670 = vmax.f32 %v2638, 0.0
      %v2671 = vmax.f32 %v2639, 0.0
      %v2672 = vmax.f32 %v2640, 0.0
      %v2673 = vmax.f32 %v2641, 0.0
      %v2674 = vmax.f32 %v2642, 0.0
      %v2675 = vmax.f32 %v2643, 0.0
      %v2676 = vmax.f32 %v2644, 0.0
      %v2677 = vmax.f32 %v2645, 0.0
      %v2678 = vmax.f32 %v2646, 0.0
      %v2679 = vmax.f32 %v2647, 0.0
      %v2680 = vmax.f32 %v2648, 0.0
      %v2681 = vmax.f32 %v2649, 0.0
      %v2682 = vmax.f32 %v2650, 0.0
      %v2683 = vmax.f32 %v2651, 0.0
      %v2684 = vmax.f32 %v2652, 0.0
      %v2685 = vmax.f32 %v2653, 0.0
      %v2686 = vmax.f32 %v2654, 0.0
      %v2687 = vmax.f32 %v2655, 0.0
      %v2688 = vmax.f32 %v2656, 0.0
      %v2689 = vmax.f32 %v2657, 0.0
      %v2690 = vmax.f32 %v2658, 0.0
      %v2691 = vpack.c.bf16 %v2660, %v2659
      %v2692 = vpack.c.bf16 %v2662, %v2661
      %v2693 = vpack.c.bf16 %v2664, %v2663
      %v2694 = vpack.c.bf16 %v2666, %v2665
      %v2695 = vpack.c.bf16 %v2668, %v2667
      %v2696 = vpack.c.bf16 %v2670, %v2669
      %v2697 = vpack.c.bf16 %v2672, %v2671
      %v2698 = vpack.c.bf16 %v2674, %v2673
      %v2699 = vpack.c.bf16 %v2676, %v2675
      %v2700 = vpack.c.bf16 %v2678, %v2677
      %v2701 = vpack.c.bf16 %v2680, %v2679
      %v2702 = vpack.c.bf16 %v2682, %v2681
      %v2703 = vpack.c.bf16 %v2684, %v2683
      %v2704 = vpack.c.bf16 %v2686, %v2685
      %v2705 = vpack.c.bf16 %v2688, %v2687
      %v2706 = vpack.c.bf16 %v2690, %v2689
      %v2707 = vld [vmem:[%s5] sm:$0xf]
      %v2708 = vld [vmem:[%s5 + $0x4] sm:$0xf]
      %v2709 = vld [vmem:[%s5 + $0x8] sm:$0xf]
      %v2710 = vld [vmem:[%s5 + $0xc] sm:$0xf]
      %v2711 = vld [vmem:[%s6] sm:$0x1]
      %v2713 = vlaneseq
      %v2714 = vshrl.u32 %v2713, 7
      %v2715 = vsub.s32 0, %v2714
      %v2716 = vrot.slane %v2711, %v2715
      %v2722 = vunpack.c.l.b16 %v2707
      %v2723 = vunpack.c.l.b16 %v2708
      %v2724 = vunpack.c.l.b16 %v2709
      %v2725 = vunpack.c.l.b16 %v2710
      %v2726 = vpack.c.b16 %v2723, %v2722
      %v2727 = vpack.c.b16 %v2725, %v2724
      %v2731 = vsel %vm717, %v2691, 0
      %v2734 = vsel %vm717, %v2692, 0
      %v2737 = vsel %vm717, %v2693, 0
      %v2740 = vsel %vm717, %v2694, 0
      %v2743 = vsel %vm717, %v2695, 0
      %v2746 = vsel %vm717, %v2696, 0
      %v2749 = vsel %vm717, %v2697, 0
      %v2752 = vsel %vm717, %v2698, 0
      %v2755 = vsel %vm717, %v2699, 0
      %v2758 = vsel %vm717, %v2700, 0
      %v2761 = vsel %vm717, %v2701, 0
      %v2764 = vsel %vm717, %v2702, 0
      %v2767 = vsel %vm717, %v2703, 0
      %v2770 = vsel %vm717, %v2704, 0
      %v2773 = vsel %vm717, %v2705, 0
      %v2776 = vsel %vm717, %v2706, 0
      %2778 = vmatprep.subr.bf16.mxu0 0
      %2779 = vmatpush1.bf16.msra.mxu0 %v2726
      %2780 = vmatprep.subr.bf16.mxu0 0
      %2781 = vmatpush1.bf16.msra.mxu0 %v2727
      %2782 = vmatprep.subr.bf16.mxu0 0
      %2783 = vmatpush1.bf16.msra.mxu0 0
      %2784 = vmatprep.subr.bf16.mxu0 0
      %2785 = vmatpush1.bf16.msra.mxu0 0
      %2786 = vmatprep.subr.bf16.mxu0 0
      %2787 = vmatpush1.bf16.msra.mxu0 0
      %2788 = vmatprep.subr.bf16.mxu0 0
      %2789 = vmatpush1.bf16.msra.mxu0 0
      %2790 = vmatprep.subr.bf16.mxu0 0
      %2791 = vmatpush1.bf16.msra.mxu0 0
      %2792 = vmatprep.subr.bf16.mxu0 0
      %2793 = vmatpush1.bf16.msra.mxu0 0
      %2794 = vmatprep.subr.bf16.mxu0 0
      %2795 = vmatpush1.bf16.msra.mxu0 0
      %2796 = vmatprep.subr.bf16.mxu0 0
      %2797 = vmatpush1.bf16.msra.mxu0 0
      %2798 = vmatprep.subr.bf16.mxu0 0
      %2799 = vmatpush1.bf16.msra.mxu0 0
      %2800 = vmatprep.subr.bf16.mxu0 0
      %2801 = vmatpush1.bf16.msra.mxu0 0
      %2802 = vmatprep.subr.bf16.mxu0 0
      %2803 = vmatpush1.bf16.msra.mxu0 0
      %2804 = vmatprep.subr.bf16.mxu0 0
      %2805 = vmatpush1.bf16.msra.mxu0 0
      %2806 = vmatprep.subr.bf16.mxu0 0
      %2807 = vmatpush1.bf16.msra.mxu0 0
      %2808 = vmatprep.subr.bf16.mxu0 0
      %2809 = vmatpush1.bf16.msra.mxu0 0
      %2810 = vmatprep.mubr.bf16.mxu0 0
      %2811 = vmatmul.mubr.bf16.gmra.mrb[0].mxu0 %v2731
      %v2812 = vpop.f32.mrb[0].mxu0
      %v2813 = vadd.f32 %v2716, %v2812
      %v2814 = vpop.f32.mrb[0].mxu0
      %v2815 = vpop.f32.mrb[0].mxu0
      %v2816 = vadd.f32 %v2716, %v2815
      %v2817 = vpop.f32.mrb[0].mxu0
      %2818 = vmatprep.mubr.bf16.mxu0 0
      %2819 = vmatmul.mubr.bf16.gmra.mrb[0].mxu0 %v2734
      %v2820 = vpop.f32.mrb[0].mxu0
      %v2821 = vadd.f32 %v2716, %v2820
      %v2822 = vpop.f32.mrb[0].mxu0
      %v2823 = vpop.f32.mrb[0].mxu0
      %v2824 = vadd.f32 %v2716, %v2823
      %v2825 = vpop.f32.mrb[0].mxu0
      %2826 = vmatprep.mubr.bf16.mxu0 0
      %2827 = vmatmul.mubr.bf16.gmra.mrb[0].mxu0 %v2737
      %v2828 = vpop.f32.mrb[0].mxu0
      %v2829 = vadd.f32 %v2716, %v2828
      %v2830 = vpop.f32.mrb[0].mxu0
      %v2831 = vpop.f32.mrb[0].mxu0
      %v2832 = vadd.f32 %v2716, %v2831
      %v2833 = vpop.f32.mrb[0].mxu0
      %2834 = vmatprep.mubr.bf16.mxu0 0
      %2835 = vmatmul.mubr.bf16.gmra.mrb[0].mxu0 %v2740
      %v2836 = vpop.f32.mrb[0].mxu0
      %v2837 = vadd.f32 %v2716, %v2836
      %v2838 = vpop.f32.mrb[0].mxu0
      %v2839 = vpop.f32.mrb[0].mxu0
      %v2840 = vadd.f32 %v2716, %v2839
      %v2841 = vpop.f32.mrb[0].mxu0
      %2842 = vmatprep.mubr.bf16.mxu0 0
      %2843 = vmatmul.mubr.bf16.gmra.mrb[0].mxu0 %v2743
      %v2844 = vpop.f32.mrb[0].mxu0
      %v2845 = vadd.f32 %v2716, %v2844
      %v2846 = vpop.f32.mrb[0].mxu0
      %v2847 = vpop.f32.mrb[0].mxu0
      %v2848 = vadd.f32 %v2716, %v2847
      %v2849 = vpop.f32.mrb[0].mxu0
      %2850 = vmatprep.mubr.bf16.mxu0 0
      %2851 = vmatmul.mubr.bf16.gmra.mrb[0].mxu0 %v2746
      %v2852 = vpop.f32.mrb[0].mxu0
      %v2853 = vadd.f32 %v2716, %v2852
      %v2854 = vpop.f32.mrb[0].mxu0
      %v2855 = vpop.f32.mrb[0].mxu0
      %v2856 = vadd.f32 %v2716, %v2855
      %v2857 = vpop.f32.mrb[0].mxu0
      %2858 = vmatprep.mubr.bf16.mxu0 0
      %2859 = vmatmul.mubr.bf16.gmra.mrb[0].mxu0 %v2749
      %v2860 = vpop.f32.mrb[0].mxu0
      %v2861 = vadd.f32 %v2716, %v2860
      %v2862 = vpop.f32.mrb[0].mxu0
      %v2863 = vpop.f32.mrb[0].mxu0
      %v2864 = vadd.f32 %v2716, %v2863
      %v2865 = vpop.f32.mrb[0].mxu0
      %2866 = vmatprep.mubr.bf16.mxu0 0
      %2867 = vmatmul.mubr.bf16.gmra.mrb[0].mxu0 %v2752
      %v2868 = vpop.f32.mrb[0].mxu0
      %v2869 = vadd.f32 %v2716, %v2868
      %v2870 = vpop.f32.mrb[0].mxu0
      %v2871 = vpop.f32.mrb[0].mxu0
      %v2872 = vadd.f32 %v2716, %v2871
      %v2873 = vpop.f32.mrb[0].mxu0
      %2874 = vmatprep.mubr.bf16.mxu0 0
      %2875 = vmatmul.mubr.bf16.gmra.mrb[0].mxu0 %v2755
      %v2876 = vpop.f32.mrb[0].mxu0
      %v2877 = vadd.f32 %v2716, %v2876
      %v2878 = vpop.f32.mrb[0].mxu0
      %v2879 = vpop.f32.mrb[0].mxu0
      %v2880 = vadd.f32 %v2716, %v2879
      %v2881 = vpop.f32.mrb[0].mxu0
      %2882 = vmatprep.mubr.bf16.mxu0 0
      %2883 = vmatmul.mubr.bf16.gmra.mrb[0].mxu0 %v2758
      %v2884 = vpop.f32.mrb[0].mxu0
      %v2885 = vadd.f32 %v2716, %v2884
      %v2886 = vpop.f32.mrb[0].mxu0
      %v2887 = vpop.f32.mrb[0].mxu0
      %v2888 = vadd.f32 %v2716, %v2887
      %v2889 = vpop.f32.mrb[0].mxu0
      %2890 = vmatprep.mubr.bf16.mxu0 0
      %2891 = vmatmul.mubr.bf16.gmra.mrb[0].mxu0 %v2761
      %v2892 = vpop.f32.mrb[0].mxu0
      %v2893 = vadd.f32 %v2716, %v2892
      %v2894 = vpop.f32.mrb[0].mxu0
      %v2895 = vpop.f32.mrb[0].mxu0
      %v2896 = vadd.f32 %v2716, %v2895
      %v2897 = vpop.f32.mrb[0].mxu0
      %2898 = vmatprep.mubr.bf16.mxu0 0
      %2899 = vmatmul.mubr.bf16.gmra.mrb[0].mxu0 %v2764
      %v2900 = vpop.f32.mrb[0].mxu0
      %v2901 = vadd.f32 %v2716, %v2900
      %v2902 = vpop.f32.mrb[0].mxu0
      %v2903 = vpop.f32.mrb[0].mxu0
      %v2904 = vadd.f32 %v2716, %v2903
      %v2905 = vpop.f32.mrb[0].mxu0
      %2906 = vmatprep.mubr.bf16.mxu0 0
      %2907 = vmatmul.mubr.bf16.gmra.mrb[0].mxu0 %v2767
      %v2908 = vpop.f32.mrb[0].mxu0
      %v2909 = vadd.f32 %v2716, %v2908
      %v2910 = vpop.f32.mrb[0].mxu0
      %v2911 = vpop.f32.mrb[0].mxu0
      %v2912 = vadd.f32 %v2716, %v2911
      %v2913 = vpop.f32.mrb[0].mxu0
      %2914 = vmatprep.mubr.bf16.mxu0 0
      %2915 = vmatmul.mubr.bf16.gmra.mrb[0].mxu0 %v2770
      %v2916 = vpop.f32.mrb[0].mxu0
      %v2917 = vadd.f32 %v2716, %v2916
      %v2918 = vpop.f32.mrb[0].mxu0
      %v2919 = vpop.f32.mrb[0].mxu0
      %v2920 = vadd.f32 %v2716, %v2919
      %v2921 = vpop.f32.mrb[0].mxu0
      %2922 = vmatprep.mubr.bf16.mxu0 0
      %2923 = vmatmul.mubr.bf16.gmra.mrb[0].mxu0 %v2773
      %v2924 = vpop.f32.mrb[0].mxu0
      %v2925 = vadd.f32 %v2716, %v2924
      %v2926 = vpop.f32.mrb[0].mxu0
      %v2927 = vpop.f32.mrb[0].mxu0
      %v2928 = vadd.f32 %v2716, %v2927
      %v2929 = vpop.f32.mrb[0].mxu0
      %2930 = vmatprep.mubr.bf16.mxu0 0
      %2931 = vmatmul.mubr.bf16.gmra.mrb[0].mxu0 %v2776
      %v2932 = vpop.f32.mrb[0].mxu0
      %v2933 = vadd.f32 %v2716, %v2932
      %v2934 = vpop.f32.mrb[0].mxu0
      %v2935 = vpop.f32.mrb[0].mxu0
      %v2936 = vadd.f32 %v2716, %v2935
      %v2937 = vpop.f32.mrb[0].mxu0
      %2938 = vdwg.mxu0
      %v2939 = vunpack.c.l.bf16 %v326
      %v2940 = vunpack.c.l.bf16 %v327
      %v2941 = vunpack.c.l.bf16 %v328
      %v2942 = vunpack.c.l.bf16 %v329
      %v2943 = vunpack.c.l.bf16 %v330
      %v2944 = vunpack.c.l.bf16 %v331
      %v2945 = vunpack.c.l.bf16 %v332
      %v2946 = vunpack.c.l.bf16 %v333
      %v2947 = vunpack.c.l.bf16 %v334
      %v2948 = vunpack.c.l.bf16 %v335
      %v2949 = vunpack.c.l.bf16 %v336
      %v2950 = vunpack.c.l.bf16 %v337
      %v2951 = vunpack.c.l.bf16 %v338
      %v2952 = vunpack.c.l.bf16 %v339
      %v2953 = vunpack.c.l.bf16 %v340
      %v2954 = vunpack.c.l.bf16 %v341
      %v2955 = vunpack.c.l.bf16 %v342
      %v2956 = vunpack.c.l.bf16 %v343
      %v2957 = vunpack.c.l.bf16 %v344
      %v2958 = vunpack.c.l.bf16 %v345
      %v2959 = vunpack.c.l.bf16 %v346
      %v2960 = vunpack.c.l.bf16 %v347
      %v2961 = vunpack.c.l.bf16 %v348
      %v2962 = vunpack.c.l.bf16 %v349
      %v2963 = vunpack.c.l.bf16 %v350
      %v2964 = vunpack.c.l.bf16 %v351
      %v2965 = vunpack.c.l.bf16 %v352
      %v2966 = vunpack.c.l.bf16 %v353
      %v2967 = vunpack.c.l.bf16 %v354
      %v2968 = vunpack.c.l.bf16 %v355
      %v2969 = vunpack.c.l.bf16 %v356
      %v2970 = vunpack.c.l.bf16 %v357
      %v2971 = vadd.f32 %v2813, %v2939
      %v2972 = vadd.f32 %v2816, %v2940
      %v2973 = vadd.f32 %v2821, %v2941
      %v2974 = vadd.f32 %v2824, %v2942
      %v2975 = vadd.f32 %v2829, %v2943
      %v2976 = vadd.f32 %v2832, %v2944
      %v2977 = vadd.f32 %v2837, %v2945
      %v2978 = vadd.f32 %v2840, %v2946
      %v2979 = vadd.f32 %v2845, %v2947
      %v2980 = vadd.f32 %v2848, %v2948
      %v2981 = vadd.f32 %v2853, %v2949
      %v2982 = vadd.f32 %v2856, %v2950
      %v2983 = vadd.f32 %v2861, %v2951
      %v2984 = vadd.f32 %v2864, %v2952
      %v2985 = vadd.f32 %v2869, %v2953
      %v2986 = vadd.f32 %v2872, %v2954
      %v2987 = vadd.f32 %v2877, %v2955
      %v2988 = vadd.f32 %v2880, %v2956
      %v2989 = vadd.f32 %v2885, %v2957
      %v2990 = vadd.f32 %v2888, %v2958
      %v2991 = vadd.f32 %v2893, %v2959
      %v2992 = vadd.f32 %v2896, %v2960
      %v2993 = vadd.f32 %v2901, %v2961
      %v2994 = vadd.f32 %v2904, %v2962
      %v2995 = vadd.f32 %v2909, %v2963
      %v2996 = vadd.f32 %v2912, %v2964
      %v2997 = vadd.f32 %v2917, %v2965
      %v2998 = vadd.f32 %v2920, %v2966
      %v2999 = vadd.f32 %v2925, %v2967
      %v3000 = vadd.f32 %v2928, %v2968
      %v3001 = vadd.f32 %v2933, %v2969
      %v3002 = vadd.f32 %v2936, %v2970
      %v3003 = vmax.f32 %v2971, 0.0
      %v3004 = vmax.f32 %v2972, 0.0
      %v3005 = vmax.f32 %v2973, 0.0
      %v3006 = vmax.f32 %v2974, 0.0
      %v3007 = vmax.f32 %v2975, 0.0
      %v3008 = vmax.f32 %v2976, 0.0
      %v3009 = vmax.f32 %v2977, 0.0
      %v3010 = vmax.f32 %v2978, 0.0
      %v3011 = vmax.f32 %v2979, 0.0
      %v3012 = vmax.f32 %v2980, 0.0
      %v3013 = vmax.f32 %v2981, 0.0
      %v3014 = vmax.f32 %v2982, 0.0
      %v3015 = vmax.f32 %v2983, 0.0
      %v3016 = vmax.f32 %v2984, 0.0
      %v3017 = vmax.f32 %v2985, 0.0
      %v3018 = vmax.f32 %v2986, 0.0
      %v3019 = vmax.f32 %v2987, 0.0
      %v3020 = vmax.f32 %v2988, 0.0
      %v3021 = vmax.f32 %v2989, 0.0
      %v3022 = vmax.f32 %v2990, 0.0
      %v3023 = vmax.f32 %v2991, 0.0
      %v3024 = vmax.f32 %v2992, 0.0
      %v3025 = vmax.f32 %v2993, 0.0
      %v3026 = vmax.f32 %v2994, 0.0
      %v3027 = vmax.f32 %v2995, 0.0
      %v3028 = vmax.f32 %v2996, 0.0
      %v3029 = vmax.f32 %v2997, 0.0
      %v3030 = vmax.f32 %v2998, 0.0
      %v3031 = vmax.f32 %v2999, 0.0
      %v3032 = vmax.f32 %v3000, 0.0
      %v3033 = vmax.f32 %v3001, 0.0
      %v3034 = vmax.f32 %v3002, 0.0
      %v3035 = vpack.c.bf16 %v3004, %v3003
      %v3036 = vpack.c.bf16 %v3006, %v3005
      %v3037 = vpack.c.bf16 %v3008, %v3007
      %v3038 = vpack.c.bf16 %v3010, %v3009
      %v3039 = vpack.c.bf16 %v3012, %v3011
      %v3040 = vpack.c.bf16 %v3014, %v3013
      %v3041 = vpack.c.bf16 %v3016, %v3015
      %v3042 = vpack.c.bf16 %v3018, %v3017
      %v3043 = vpack.c.bf16 %v3020, %v3019
      %v3044 = vpack.c.bf16 %v3022, %v3021
      %v3045 = vpack.c.bf16 %v3024, %v3023
      %v3046 = vpack.c.bf16 %v3026, %v3025
      %v3047 = vpack.c.bf16 %v3028, %v3027
      %v3048 = vpack.c.bf16 %v3030, %v3029
      %v3049 = vpack.c.bf16 %v3032, %v3031
      %v3050 = vpack.c.bf16 %v3034, %v3033
      %v3067 = vunpack.c.l.b16 %v3035
      %v3068 = vunpack.c.h.b16 %v3035
      %v3069 = vunpack.c.l.b16 %v3036
      %v3070 = vunpack.c.h.b16 %v3036
      %v3071 = vunpack.c.l.b16 %v3037
      %v3072 = vunpack.c.h.b16 %v3037
      %v3073 = vunpack.c.l.b16 %v3038
      %v3074 = vunpack.c.h.b16 %v3038
      %v3075 = vunpack.c.l.b16 %v3039
      %v3076 = vunpack.c.h.b16 %v3039
      %v3077 = vunpack.c.l.b16 %v3040
      %v3078 = vunpack.c.h.b16 %v3040
      %v3079 = vunpack.c.l.b16 %v3041
      %v3080 = vunpack.c.h.b16 %v3041
      %v3081 = vunpack.c.l.b16 %v3042
      %v3082 = vunpack.c.h.b16 %v3042
      %v3083 = vunpack.c.l.b16 %v3043
      %v3084 = vunpack.c.h.b16 %v3043
      %v3085 = vunpack.c.l.b16 %v3044
      %v3086 = vunpack.c.h.b16 %v3044
      %v3087 = vunpack.c.l.b16 %v3045
      %v3088 = vunpack.c.h.b16 %v3045
      %v3089 = vunpack.c.l.b16 %v3046
      %v3090 = vunpack.c.h.b16 %v3046
      %v3091 = vunpack.c.l.b16 %v3047
      %v3092 = vunpack.c.h.b16 %v3047
      %v3093 = vunpack.c.l.b16 %v3048
      %v3094 = vunpack.c.h.b16 %v3048
      %v3095 = vunpack.c.l.b16 %v3049
      %v3096 = vunpack.c.h.b16 %v3049
      %v3097 = vunpack.c.l.b16 %v3050
      %v3098 = vunpack.c.h.b16 %v3050
      %v3099 = vpack.c.b16 %v3067, %v3067
      %v3100 = vpack.c.b16 %v3068, %v3068
      %v3101 = vpack.c.b16 %v3069, %v3069
      %v3102 = vpack.c.b16 %v3070, %v3070
      %v3103 = vpack.c.b16 %v3071, %v3071
      %v3104 = vpack.c.b16 %v3072, %v3072
      %v3105 = vpack.c.b16 %v3073, %v3073
      %v3106 = vpack.c.b16 %v3074, %v3074
      %v3107 = vpack.c.b16 %v3075, %v3075
      %v3108 = vpack.c.b16 %v3076, %v3076
      %v3109 = vpack.c.b16 %v3077, %v3077
      %v3110 = vpack.c.b16 %v3078, %v3078
      %v3111 = vpack.c.b16 %v3079, %v3079
      %v3112 = vpack.c.b16 %v3080, %v3080
      %v3113 = vpack.c.b16 %v3081, %v3081
      %v3114 = vpack.c.b16 %v3082, %v3082
      %v3115 = vpack.c.b16 %v3083, %v3083
      %v3116 = vpack.c.b16 %v3084, %v3084
      %v3117 = vpack.c.b16 %v3085, %v3085
      %v3118 = vpack.c.b16 %v3086, %v3086
      %v3119 = vpack.c.b16 %v3087, %v3087
      %v3120 = vpack.c.b16 %v3088, %v3088
      %v3121 = vpack.c.b16 %v3089, %v3089
      %v3122 = vpack.c.b16 %v3090, %v3090
      %v3123 = vpack.c.b16 %v3091, %v3091
      %v3124 = vpack.c.b16 %v3092, %v3092
      %v3125 = vpack.c.b16 %v3093, %v3093
      %v3126 = vpack.c.b16 %v3094, %v3094
      %v3127 = vpack.c.b16 %v3095, %v3095
      %v3128 = vpack.c.b16 %v3096, %v3096
      %v3129 = vpack.c.b16 %v3097, %v3097
      %v3130 = vpack.c.b16 %v3098, %v3098
      %3163 = vst [vmem:[%s302] sm:$0xf] %v3099
      %3164 = vst [vmem:[%s302 + $0x4] sm:$0xf] %v3100
      %3165 = vst [vmem:[%s302 + $0x8] sm:$0xf] %v3101
      %3166 = vst [vmem:[%s302 + $0xc] sm:$0xf] %v3102
      %3167 = vst [vmem:[%s302 + $0x10] sm:$0xf] %v3103
      %3168 = vst [vmem:[%s302 + $0x14] sm:$0xf] %v3104
      %3169 = vst [vmem:[%s302 + $0x18] sm:$0xf] %v3105
      %3170 = vst [vmem:[%s302 + $0x1c] sm:$0xf] %v3106
      %3171 = vst [vmem:[%s302 + $0x20] sm:$0xf] %v3107
      %3172 = vst [vmem:[%s302 + $0x24] sm:$0xf] %v3108
      %3173 = vst [vmem:[%s302 + $0x28] sm:$0xf] %v3109
      %3174 = vst [vmem:[%s302 + $0x2c] sm:$0xf] %v3110
      %3175 = vst [vmem:[%s302 + $0x30] sm:$0xf] %v3111
      %3176 = vst [vmem:[%s302 + $0x34] sm:$0xf] %v3112
      %3177 = vst [vmem:[%s302 + $0x38] sm:$0xf] %v3113
      %3178 = vst [vmem:[%s302 + $0x3c] sm:$0xf] %v3114
      %3179 = vst [vmem:[%s302 + $0x40] sm:$0xf] %v3115
      %3180 = vst [vmem:[%s302 + $0x44] sm:$0xf] %v3116
      %3181 = vst [vmem:[%s302 + $0x48] sm:$0xf] %v3117
      %3182 = vst [vmem:[%s302 + $0x4c] sm:$0xf] %v3118
      %3183 = vst [vmem:[%s302 + $0x50] sm:$0xf] %v3119
      %3184 = vst [vmem:[%s302 + $0x54] sm:$0xf] %v3120
      %3185 = vst [vmem:[%s302 + $0x58] sm:$0xf] %v3121
      %3186 = vst [vmem:[%s302 + $0x5c] sm:$0xf] %v3122
      %3187 = vst [vmem:[%s302 + $0x60] sm:$0xf] %v3123
      %3188 = vst [vmem:[%s302 + $0x64] sm:$0xf] %v3124
      %3189 = vst [vmem:[%s302 + $0x68] sm:$0xf] %v3125
      %3190 = vst [vmem:[%s302 + $0x6c] sm:$0xf] %v3126
      %3191 = vst [vmem:[%s302 + $0x70] sm:$0xf] %v3127
      %3192 = vst [vmem:[%s302 + $0x74] sm:$0xf] %v3128
      %3193 = vst [vmem:[%s302 + $0x78] sm:$0xf] %v3129
      %3194 = vst [vmem:[%s302 + $0x7c] sm:$0xf] %v3130
      %s3195 = smul.u32 16, %s23
      %p3196 = scmp.lt.s32.totalorder %s22, 1
      %s3197 = scalar_select %p3196, %s22, 1
      %p3198 = scmp.lt.s32.totalorder %s3195, 15
      %s3199 = scalar_select %p3198, %s3195, 15
      %s3200 = smul.addr %s3199, 2
      %s3201 = smul.addr %s3197, 32
      %s3202 = sadd.s32 %s3200, %s3201
      %s3203 = smul.addr %s3202, 4
      %s3204 = scalar_lea.vmem %s7, %s3203
      // Predicated region
      $region65: #{resnet_tail_forward.3} parent=47 // pred_check
        %p3205 = pneg %p202
      $region66: #{resnet_tail_forward.3} parent=47 // pred_check_branch
        %3207 = sbr.rel (%p3205) target = $region68
      $region67: #{resnet_tail_forward.3} parent=47 // pred_region
        %s3208 = smul.u32 16, %s23
      $region68: #{resnet_tail_forward.3} parent=47 // pred_fallthru
        _
    $region48: #{resnet_tail_forward.3} parent=5 // pred_fallthru
      _
    %p3209 = scmp.le.s32.totalorder 2, %s13
    // Predicated region
    $region69: #{resnet_tail_forward.3} parent=5 // pred_check
      %p3210 = pneg %p3209
    $region70: #{resnet_tail_forward.3} parent=5 // pred_check_branch
      %3212 = sbr.rel (%p3210) target = $region72
    $region71: #{resnet_tail_forward.3} parent=5 // pred_region
      %s3213 = ssub.s32 %s13, 2
      // Predicated region
      $region73: #{resnet_tail_forward.3} parent=71 // pred_check
        %p3214 = pneg %p208
      $region74: #{resnet_tail_forward.3} parent=71 // pred_check_branch
        %3216 = sbr.rel (%p3214) target = $region76
      $region75: #{resnet_tail_forward.3} parent=71 // pred_region
        %s3217 = smul.u32 16, %s25
        %p3218 = scmp.lt.s32.totalorder %s24, 1
        %s3219 = scalar_select %p3218, %s24, 1
        %p3220 = scmp.lt.s32.totalorder %s3217, 15
        %s3221 = scalar_select %p3220, %s3217, 15
        %s3222 = smul.addr %s3221, 2
        %s3223 = smul.addr %s3219, 32
        %s3224 = sadd.s32 %s3222, %s3223
        %s3225 = smul.addr %s3224, 4
        %s3226 = scalar_lea.vmem %s7, %s3225
      $region76: #{resnet_tail_forward.3} parent=71 // pred_fallthru
        _
    $region72: #{resnet_tail_forward.3} parent=5 // pred_fallthru
      _
  $region6: #{resnet_tail_forward.3} parent=0 // loop_footer
    %s17 = sadd.s32 1, %s13
  $region7: #{resnet_tail_forward.3} parent=0 // loop_footer_branch
    %12 = sbr.rel target = $region3
  $region8: #{resnet_tail_forward.3} parent=0 // loop_exit
    _

</llo_original>
